<compile_context>
chip_gen: v5e
topology: v5e:2x2
jax: 0.10.0
libtpu: 0.0.40
codegen_flags: <defaults>
</compile_context>

<pallas_src>
import functools

import jax
import jax.numpy as jnp
from jax import lax
from jax.experimental import pallas as pl
from jax.experimental.pallas import tpu as pltpu


# (name, K, Cin, Cout) of the PyTorch Conv1d layers, in execution order.
_CONV_DEFS = (
    ("c0",  5,   1,  32),
    ("r1a", 3,  32,  32),
    ("r1b", 3,  32,  32),
    ("c1",  5,  32,  64),
    ("r2a", 3,  64,  64),
    ("r2b", 3,  64,  64),
    ("c2",  5,  64, 128),
    ("r3a", 3, 128, 128),
    ("r3b", 3, 128, 128),
    ("c3",  1, 128, 256),
)
_CONV_NAMES = tuple(d[0] for d in _CONV_DEFS)
# In-kernel tap count / input width: c0 is im2col'ed (and lane-padded to 8) in
# the wrapper, so inside the kernel it is a single K=1 matmul with Cin=8.
_KERNEL_K = (1, 3, 3, 5, 3, 3, 5, 3, 3, 1)
_KERNEL_CIN = (8, 32, 32, 32, 64, 64, 64, 128, 128, 128)
_VEC_W = 256   # lane width of the packed per-channel-vector slab
_OFF = 8       # sublane-aligned row offset of the slab inside each scratch


# --------------------------------------------------------------------------
# Fused kernel: whole forward pass, everything VMEM-resident.
# --------------------------------------------------------------------------
def _fused_kernel(x_ref, *refs, B, L0, n_conc, n_cls):
    conv_w = refs[0:10]                       # 10 conv weights (K*Cin, Cout) bf16
    w1_ref, w2_ref, w3_ref, w4_ref = refs[10:14]
    vec_ref = refs[14]                        # (32, 256) f32 packed vectors
    conc_ref = refs[15]
    out_ref = refs[16]
    bufs = refs[17:20]                        # f32 staging scratches

    f32 = jnp.float32

    def vec(row, width):
        # One packed per-channel vector, shape (1, width), f32.
        return vec_ref[row:row + 1, 0:width]

    def stage_masks(BL, L, dmax):
        """Boundary masks for one pooling stage (hoisted out of conv_bn so the
        2-3 conv layers sharing this L reuse the iota/compare work).
        masks[d][r] == tap at position (r % L) + d lies inside its own sample."""
        row = lax.broadcasted_iota(jnp.int32, (BL, 1), 0)
        pos = (row & (L - 1)) if (L & (L - 1)) == 0 else (row % L)
        masks = {}
        for d in range(-dmax, dmax + 1):
            if d == 0:
                continue
            masks[d] = jnp.logical_and(pos + d >= 0, pos + d < L)
        return masks

    def conv_bn(idx, x, buf, masks, relu=True, residual=None):
        """Conv1d('same') + folded eval-mode BatchNorm (+ residual) (+ ReLU).

        x: (B*L, Cin) slab (batch folded into rows).  The conv is K per-tap
        matmuls (BL, Cin) @ (Cin, Cout) against static weight row slices,
        accumulated in f32 (no lane-concat im2col)."""
        K = _KERNEL_K[idx]
        cin = _KERNEL_CIN[idx]
        cout = _CONV_DEFS[idx][3]
        w_ref = conv_w[idx]
        BL = x.shape[0]
        if K == 1:
            y = jnp.dot(x.astype(jnp.bfloat16), w_ref[...],
                        preferred_element_type=f32)
        else:
            pad = (K - 1) // 2
            buf[pl.ds(_OFF, BL), :] = x            # stage once, windowed reads
            y = None
            for k in range(K):
                d = k - pad
                t = buf[pl.ds(_OFF + d, BL), :]
                if d != 0:
                    # Taps outside their own sample see exact zero 'same'
                    # padding (also kills cross-sample leakage in the folded
                    # batch and masks any stale halo rows of the scratch).
                    t = jnp.where(masks[d], t, 0.0)
                p = jnp.dot(t.astype(jnp.bfloat16),
                            w_ref[k * cin:(k + 1) * cin, :],
                            preferred_element_type=f32)
                y = p if y is None else y + p
        y = y * vec(2 * idx, cout) + vec(2 * idx + 1, cout)   # folded BN (eval)
        if residual is not None:
            y = y + residual
        if relu:
            y = jnp.maximum(y, 0.0)
        return y                                   # (BL, Cout) f32

    def maxpool2(x, buf):
        """MaxPool1d(2) on a (B*L, C) slab: stage once, two stride-2 sublane
        reads + max.  Adjacent rows never straddle a sample (L is even)."""
        BL = x.shape[0]
        H = BL // 2
        buf[pl.ds(_OFF, BL), :] = x
        even = buf[pl.ds(_OFF, H, stride=2), :]
        odd = buf[pl.ds(_OFF + 1, H, stride=2), :]
        return jnp.maximum(even, odd)              # (H, C) f32

    # ---- Stage 0: Conv1d(1,32,k5)+BN+ReLU on pre-im2col'ed bf16 columns ----
    x = conv_bn(0, x_ref[...], None, None)         # (B*L0, 32)
    x = maxpool2(x, bufs[0])                       # (B*L0/2, 32)

    # ---- Stage 1: ResidualBlock(32) + Conv1d(32,64,k5)+BN+ReLU ----
    L1 = L0 // 2
    m1 = stage_masks(B * L1, L1, 2)
    h = conv_bn(1, x, bufs[0], m1)
    x = conv_bn(2, h, bufs[0], m1, residual=x)
    x = conv_bn(3, x, bufs[0], m1)
    x = maxpool2(x, bufs[1])                       # (B*L0/4, 64)

    # ---- Stage 2: ResidualBlock(64) + Conv1d(64,128,k5)+BN+ReLU ----
    L2 = L0 // 4
    m2 = stage_masks(B * L2, L2, 2)
    h = conv_bn(4, x, bufs[1], m2)
    x = conv_bn(5, h, bufs[1], m2, residual=x)
    x = conv_bn(6, x, bufs[1], m2)
    x = maxpool2(x, bufs[2])                       # (B*L0/8, 128)

    # ---- Stage 3: ResidualBlock(128) + Conv1d(128,256,k1)+BN+ReLU ----
    L3 = L0 // 8
    m3 = stage_masks(B * L3, L3, 1)
    h = conv_bn(7, x, bufs[2], m3)
    x = conv_bn(8, h, bufs[2], m3, residual=x)
    x = conv_bn(9, x, None, None)                  # (B*L0/8, 256)

    # ---- AdaptiveAvgPool1d(1): exact per-sample averaging matmul ----
    BL3 = B * L3
    b_i = lax.broadcasted_iota(jnp.int32, (B, BL3), 0)
    r_i = lax.broadcasted_iota(jnp.int32, (B, BL3), 1)
    inb = jnp.logical_and(r_i >= b_i * L3, r_i < (b_i + 1) * L3)
    pooled = jnp.dot(inb.astype(f32) * (1.0 / L3), x,
                     preferred_element_type=f32)   # (B, 256)

    # ---- Heads (Dropout = identity in eval mode) ----
    b1, s1, sh1 = vec(20, 128), vec(21, 128), vec(22, 128)
    b2, b3, b4 = vec(23, n_conc), vec(24, 256), vec(25, n_cls)
    h1 = jnp.dot(pooled, w1_ref[...], preferred_element_type=f32) + b1
    h1 = jnp.maximum(h1 * s1 + sh1, 0.0)           # Linear(256,128)+BN+ReLU
    c = jnp.dot(h1, w2_ref[...], preferred_element_type=f32) + b2
    conc_ref[...] = c.astype(conc_ref.dtype)       # pred_concepts
    g = jnp.maximum(jnp.dot(c, w3_ref[...], preferred_element_type=f32) + b3, 0.0)
    y = jnp.dot(g, w4_ref[...], preferred_element_type=f32) + b4
    out_ref[...] = y.astype(out_ref.dtype)         # class logits


# --------------------------------------------------------------------------
# Wrapper: one pallas_call for the whole forward pass.
# --------------------------------------------------------------------------
def ecg_concept_cbm_forward(ecg, params):
    """ecg: (B, 1, L) -> (pred_concepts (B, n_concepts), output (B, n_classes)).

    Matches ECGConceptCBM.forward in eval mode (BN running stats, Dropout=id).
    """
    B, _, L0 = ecg.shape
    assert L0 % 8 == 0, "L must be divisible by 8 (three MaxPool1d(2) stages)"

    # im2col for the first (Cin=1, K=5) conv: one tiny XLA op on the raw
    # signal, shipped bf16 and lane-padded to 8 so the kernel's first layer is
    # a well-shaped bf16 (B*L,8)@(8,32) matmul with no in-kernel casts.
    sig = jnp.pad(ecg.reshape(B, L0).astype(jnp.bfloat16), ((0, 0), (2, 2)))
    cols0 = jnp.stack([sig[:, k:k + L0] for k in range(5)], axis=-1)
    cols0 = jnp.pad(cols0.reshape(B * L0, 5), ((0, 0), (0, 3)))    # (B*L0, 8)

    hp = params["head"]
    n_conc = hp["w2"].shape[1]
    n_cls = hp["w4"].shape[1]

    # Conv weights, pre-flattened (K*Cin, Cout) bf16; c0's weight is row-padded
    # to match the 8-lane padded im2col columns.
    w0 = jnp.pad(params["c0"][0], ((0, 3), (0, 0)))
    conv_ws = [w0] + [params[name][0] for name in _CONV_NAMES[1:]]

    # Pack all per-channel vectors (conv BN scale/shift + head bias/BN vectors)
    # into ONE (32, 256) f32 slab -> a single parameter DMA instead of 26.
    def row(v):
        v = v.reshape(-1).astype(jnp.float32)
        return jnp.pad(v, (0, _VEC_W - v.shape[0]))

    rows = []
    for name in _CONV_NAMES:
        rows += [row(params[name][1]), row(params[name][2])]
    rows += [row(hp["b1"]), row(hp["s1"]), row(hp["sh1"]),
             row(hp["b2"]), row(hp["b3"]), row(hp["b4"])]
    vec_slab = jnp.pad(jnp.stack(rows), ((0, 32 - len(rows)), (0, 0)))

    flat = [cols0] + conv_ws + [hp["w1"], hp["w2"], hp["w3"], hp["w4"], vec_slab]

    return pl.pallas_call(
        functools.partial(_fused_kernel, B=B, L0=L0, n_conc=n_conc, n_cls=n_cls),
        out_shape=(jax.ShapeDtypeStruct((B, n_conc), jnp.float32),
                   jax.ShapeDtypeStruct((B, n_cls), jnp.float32)),
        scratch_shapes=[
            # Each buffer serves two roles per stage: pre-pool slab staging
            # (stride-2 pooled reads) and the next stage's conv tap staging.
            pltpu.VMEM((B * L0 + 2 * _OFF, 32), jnp.float32),
            pltpu.VMEM((B * L0 // 2 + 2 * _OFF, 64), jnp.float32),
            pltpu.VMEM((B * L0 // 4 + 2 * _OFF, 128), jnp.float32),
        ],
    )(*flat)


# --------------------------------------------------------------------------
# Deterministic synthetic parameters (eval-mode BN folded into scale/shift).
# Conv weights are stored pre-flattened for im2col: (K*Cin, Cout), bf16.
# --------------------------------------------------------------------------
def _init_conv_bn(key, k, cin, cout):
    kw, kb, kg, kbt, km, kv = jax.random.split(key, 6)
    w = jax.random.normal(kw, (k, cin, cout), jnp.float32) / jnp.sqrt(k * cin)
    conv_b = 0.05 * jax.random.normal(kb, (cout,), jnp.float32)
    gamma = 1.0 + 0.1 * jax.random.normal(kg, (cout,), jnp.float32)
    beta = 0.1 * jax.random.normal(kbt, (cout,), jnp.float32)
    mean = 0.1 * jax.random.normal(km, (cout,), jnp.float32)
    var = 1.0 + 0.1 * jnp.abs(jax.random.normal(kv, (cout,), jnp.float32))
    scale = gamma / jnp.sqrt(var + 1e-5)
    shift = (conv_b - mean) * scale + beta
    return (w.reshape(k * cin, cout).astype(jnp.bfloat16),
            scale.astype(jnp.float32), shift.astype(jnp.float32))


def _init_linear(key, din, dout):
    kw, kb = jax.random.split(key)
    w = jax.random.normal(kw, (din, dout), jnp.float32) / jnp.sqrt(din)
    b = 0.05 * jax.random.normal(kb, (dout,), jnp.float32)
    return w, b


def init_params(key, num_concepts, num_classes):
    n = len(_CONV_DEFS)
    keys = jax.random.split(key, n + 6)
    p = {}
    for i, (name, k, cin, cout) in enumerate(_CONV_DEFS):
        p[name] = _init_conv_bn(keys[i], k, cin, cout)

    w1, b1 = _init_linear(keys[n], 256, 128)
    kg, kbt, km, kv = jax.random.split(keys[n + 1], 4)
    gamma = 1.0 + 0.1 * jax.random.normal(kg, (128,), jnp.float32)
    beta = 0.1 * jax.random.normal(kbt, (128,), jnp.float32)
    mean = 0.1 * jax.random.normal(km, (128,), jnp.float32)
    var = 1.0 + 0.1 * jnp.abs(jax.random.normal(kv, (128,), jnp.float32))
    s1 = gamma / jnp.sqrt(var + 1e-5)
    sh1 = beta - mean * s1
    w2, b2 = _init_linear(keys[n + 2], 128, num_concepts)
    w3, b3 = _init_linear(keys[n + 3], num_concepts, 256)
    w4, b4 = _init_linear(keys[n + 4], 256, num_classes)
    p["head"] = dict(w1=w1, b1=b1, s1=s1, sh1=sh1,
                     w2=w2, b2=b2, w3=w3, b3=b3, w4=w4, b4=b4)
    return p


if __name__ == "__main__":
    B, L = 2, 64                    # L divisible by 8 (three MaxPool1d(2) stages)
    num_concepts, num_classes = 8, 4

    key = jax.random.PRNGKey(0)
    kparams, kx = jax.random.split(key)
    params = init_params(kparams, num_concepts, num_classes)
    ecg = jax.random.normal(kx, (B, 1, L), jnp.float32)   # PyTorch NCL input

    fwd = jax.jit(ecg_concept_cbm_forward)
    pred_concepts, output = fwd(ecg, params)
    jax.block_until_ready((pred_concepts, output))

    assert pred_concepts.shape == (B, num_concepts), pred_concepts.shape
    assert output.shape == (B, num_classes), output.shape
    assert bool(jnp.all(jnp.isfinite(pred_concepts))) and bool(jnp.all(jnp.isfinite(output)))
    print("KERNEL_OK")
</pallas_src>

<mosaic_0001>
module attributes {stable_mosaic.version = 11 : i64} {
  func.func @_fused_kernel(%arg0: memref<128x8xbf16, #tpu.memory_space<vmem>>, %arg1: memref<8x32xbf16, #tpu.memory_space<vmem>>, %arg2: memref<96x32xbf16, #tpu.memory_space<vmem>>, %arg3: memref<96x32xbf16, #tpu.memory_space<vmem>>, %arg4: memref<160x64xbf16, #tpu.memory_space<vmem>>, %arg5: memref<192x64xbf16, #tpu.memory_space<vmem>>, %arg6: memref<192x64xbf16, #tpu.memory_space<vmem>>, %arg7: memref<320x128xbf16, #tpu.memory_space<vmem>>, %arg8: memref<384x128xbf16, #tpu.memory_space<vmem>>, %arg9: memref<384x128xbf16, #tpu.memory_space<vmem>>, %arg10: memref<128x256xbf16, #tpu.memory_space<vmem>>, %arg11: memref<256x128xf32, #tpu.memory_space<vmem>>, %arg12: memref<128x8xf32, #tpu.memory_space<vmem>>, %arg13: memref<8x256xf32, #tpu.memory_space<vmem>>, %arg14: memref<256x4xf32, #tpu.memory_space<vmem>>, %arg15: memref<32x256xf32, #tpu.memory_space<vmem>>, %arg16: memref<2x8xf32, #tpu.memory_space<vmem>>, %arg17: memref<2x4xf32, #tpu.memory_space<vmem>>, %arg18: memref<144x32xf32, #tpu.memory_space<vmem>>, %arg19: memref<80x64xf32, #tpu.memory_space<vmem>>, %arg20: memref<48x128xf32, #tpu.memory_space<vmem>>) attributes {dimension_semantics = [], scalar_prefetch = 0 : i64, scratch_operands = 3 : i64, tpu.core_type = #tpu.core_type<tc>} {
    %c0 = arith.constant 0 : index
    %c0_0 = arith.constant 0 : index
    %0 = vector.load %arg0[%c0, %c0_0] : memref<128x8xbf16, #tpu.memory_space<vmem>>, vector<128x8xbf16>
    %c0_1 = arith.constant 0 : index
    %c0_2 = arith.constant 0 : index
    %1 = vector.load %arg1[%c0_1, %c0_2] : memref<8x32xbf16, #tpu.memory_space<vmem>>, vector<8x32xbf16>
    %cst = arith.constant dense<0.000000e+00> : vector<128x32xf32>
    %2 = tpu.matmul %0, %1, %cst {dimension_numbers = #tpu.dot_dimension_numbers<[1], [0], [0], [1], [0, 0, 1, 1], [], []>} : vector<128x8xbf16>, vector<8x32xbf16>, vector<128x32xf32> -> vector<128x32xf32>
    %c0_3 = arith.constant 0 : index
    %c0_4 = arith.constant 0 : index
    %3 = vector.load %arg15[%c0_3, %c0_4] : memref<32x256xf32, #tpu.memory_space<vmem>>, vector<1x32xf32>
    %4 = vector.broadcast %3 : vector<1x32xf32> to vector<128x32xf32>
    %5 = arith.mulf %2, %4 : vector<128x32xf32>
    %c1 = arith.constant 1 : index
    %c0_5 = arith.constant 0 : index
    %6 = vector.load %arg15[%c1, %c0_5] : memref<32x256xf32, #tpu.memory_space<vmem>>, vector<1x32xf32>
    %7 = vector.broadcast %6 : vector<1x32xf32> to vector<128x32xf32>
    %8 = arith.addf %5, %7 : vector<128x32xf32>
    %cst_6 = arith.constant 0.000000e+00 : f32
    %9 = vector.broadcast %cst_6 : f32 to vector<128x32xf32>
    %10 = arith.maximumf %8, %9 : vector<128x32xf32>
    %c8 = arith.constant 8 : index
    %c0_7 = arith.constant 0 : index
    %11 = vector.load %arg18[%c8, %c0_7] : memref<144x32xf32, #tpu.memory_space<vmem>>, vector<128x32xf32>
    tpu.vector_store %arg18[%c8, %c0_7], %10 {strides = array<i32>} : memref<144x32xf32, #tpu.memory_space<vmem>>, vector<128x32xf32>,
    %c8_8 = arith.constant 8 : index
    %c0_9 = arith.constant 0 : index
    %12 = tpu.strided_load %arg18[%c8_8, %c0_9] {strides = array<i32: 2, 1>} : memref<144x32xf32, #tpu.memory_space<vmem>>, vector<64x32xf32>
    %c9 = arith.constant 9 : index
    %c0_10 = arith.constant 0 : index
    %13 = tpu.strided_load %arg18[%c9, %c0_10] {strides = array<i32: 2, 1>} : memref<144x32xf32, #tpu.memory_space<vmem>>, vector<64x32xf32>
    %14 = arith.maximumf %12, %13 : vector<64x32xf32>
    %15 = tpu.iota {dimensions = array<i32: 0>} : vector<64x1xi32>
    %c31_i32 = arith.constant 31 : i32
    %16 = vector.broadcast %c31_i32 : i32 to vector<64x1xi32>
    %17 = arith.andi %15, %16 : vector<64x1xi32>
    %c-2_i32 = arith.constant -2 : i32
    %18 = vector.broadcast %c-2_i32 : i32 to vector<64x1xi32>
    %19 = arith.addi %17, %18 : vector<64x1xi32>
    %c0_i32 = arith.constant 0 : i32
    %20 = vector.broadcast %c0_i32 : i32 to vector<64x1xi32>
    %21 = arith.cmpi sge, %19, %20 : vector<64x1xi32>
    %c-2_i32_11 = arith.constant -2 : i32
    %22 = vector.broadcast %c-2_i32_11 : i32 to vector<64x1xi32>
    %23 = arith.addi %17, %22 : vector<64x1xi32>
    %c32_i32 = arith.constant 32 : i32
    %24 = vector.broadcast %c32_i32 : i32 to vector<64x1xi32>
    %25 = arith.cmpi slt, %23, %24 : vector<64x1xi32>
    %26 = arith.andi %21, %25 : vector<64x1xi1>
    %c-1_i32 = arith.constant -1 : i32
    %27 = vector.broadcast %c-1_i32 : i32 to vector<64x1xi32>
    %28 = arith.addi %17, %27 : vector<64x1xi32>
    %c0_i32_12 = arith.constant 0 : i32
    %29 = vector.broadcast %c0_i32_12 : i32 to vector<64x1xi32>
    %30 = arith.cmpi sge, %28, %29 : vector<64x1xi32>
    %c-1_i32_13 = arith.constant -1 : i32
    %31 = vector.broadcast %c-1_i32_13 : i32 to vector<64x1xi32>
    %32 = arith.addi %17, %31 : vector<64x1xi32>
    %c32_i32_14 = arith.constant 32 : i32
    %33 = vector.broadcast %c32_i32_14 : i32 to vector<64x1xi32>
    %34 = arith.cmpi slt, %32, %33 : vector<64x1xi32>
    %35 = arith.andi %30, %34 : vector<64x1xi1>
    %c1_i32 = arith.constant 1 : i32
    %36 = vector.broadcast %c1_i32 : i32 to vector<64x1xi32>
    %37 = arith.addi %17, %36 : vector<64x1xi32>
    %c0_i32_15 = arith.constant 0 : i32
    %38 = vector.broadcast %c0_i32_15 : i32 to vector<64x1xi32>
    %39 = arith.cmpi sge, %37, %38 : vector<64x1xi32>
    %c1_i32_16 = arith.constant 1 : i32
    %40 = vector.broadcast %c1_i32_16 : i32 to vector<64x1xi32>
    %41 = arith.addi %17, %40 : vector<64x1xi32>
    %c32_i32_17 = arith.constant 32 : i32
    %42 = vector.broadcast %c32_i32_17 : i32 to vector<64x1xi32>
    %43 = arith.cmpi slt, %41, %42 : vector<64x1xi32>
    %44 = arith.andi %39, %43 : vector<64x1xi1>
    %c2_i32 = arith.constant 2 : i32
    %45 = vector.broadcast %c2_i32 : i32 to vector<64x1xi32>
    %46 = arith.addi %17, %45 : vector<64x1xi32>
    %c0_i32_18 = arith.constant 0 : i32
    %47 = vector.broadcast %c0_i32_18 : i32 to vector<64x1xi32>
    %48 = arith.cmpi sge, %46, %47 : vector<64x1xi32>
    %c2_i32_19 = arith.constant 2 : i32
    %49 = vector.broadcast %c2_i32_19 : i32 to vector<64x1xi32>
    %50 = arith.addi %17, %49 : vector<64x1xi32>
    %c32_i32_20 = arith.constant 32 : i32
    %51 = vector.broadcast %c32_i32_20 : i32 to vector<64x1xi32>
    %52 = arith.cmpi slt, %50, %51 : vector<64x1xi32>
    %53 = arith.andi %48, %52 : vector<64x1xi1>
    %c8_21 = arith.constant 8 : index
    %c0_22 = arith.constant 0 : index
    %54 = vector.load %arg18[%c8_21, %c0_22] : memref<144x32xf32, #tpu.memory_space<vmem>>, vector<64x32xf32>
    tpu.vector_store %arg18[%c8_21, %c0_22], %14 {strides = array<i32>} : memref<144x32xf32, #tpu.memory_space<vmem>>, vector<64x32xf32>,
    %c7 = arith.constant 7 : index
    %c0_23 = arith.constant 0 : index
    %55 = vector.load %arg18[%c7, %c0_23] : memref<144x32xf32, #tpu.memory_space<vmem>>, vector<64x32xf32>
    %cst_24 = arith.constant 0.000000e+00 : f32
    %56 = vector.shape_cast %35 : vector<64x1xi1> to vector<64x1xi1>
    %57 = vector.broadcast %56 : vector<64x1xi1> to vector<64x32xi1>
    %58 = vector.broadcast %cst_24 : f32 to vector<64x32xf32>
    %59 = arith.select %57, %55, %58 : vector<64x32xi1>, vector<64x32xf32>
    %60 = arith.truncf %59 : vector<64x32xf32> to vector<64x32xbf16>
    %c0_25 = arith.constant 0 : index
    %c0_26 = arith.constant 0 : index
    %61 = vector.load %arg2[%c0_25, %c0_26] : memref<96x32xbf16, #tpu.memory_space<vmem>>, vector<32x32xbf16>
    %cst_27 = arith.constant dense<0.000000e+00> : vector<64x32xf32>
    %62 = tpu.matmul %60, %61, %cst_27 {dimension_numbers = #tpu.dot_dimension_numbers<[1], [0], [0], [1], [0, 0, 1, 1], [], []>} : vector<64x32xbf16>, vector<32x32xbf16>, vector<64x32xf32> -> vector<64x32xf32>
    %c8_28 = arith.constant 8 : index
    %c0_29 = arith.constant 0 : index
    %63 = vector.load %arg18[%c8_28, %c0_29] : memref<144x32xf32, #tpu.memory_space<vmem>>, vector<64x32xf32>
    %64 = arith.truncf %63 : vector<64x32xf32> to vector<64x32xbf16>
    %c32 = arith.constant 32 : index
    %c0_30 = arith.constant 0 : index
    %65 = vector.load %arg2[%c32, %c0_30] : memref<96x32xbf16, #tpu.memory_space<vmem>>, vector<32x32xbf16>
    %cst_31 = arith.constant dense<0.000000e+00> : vector<64x32xf32>
    %66 = tpu.matmul %64, %65, %cst_31 {dimension_numbers = #tpu.dot_dimension_numbers<[1], [0], [0], [1], [0, 0, 1, 1], [], []>} : vector<64x32xbf16>, vector<32x32xbf16>, vector<64x32xf32> -> vector<64x32xf32>
    %67 = arith.addf %62, %66 : vector<64x32xf32>
    %c9_32 = arith.constant 9 : index
    %c0_33 = arith.constant 0 : index
    %68 = vector.load %arg18[%c9_32, %c0_33] : memref<144x32xf32, #tpu.memory_space<vmem>>, vector<64x32xf32>
    %cst_34 = arith.constant 0.000000e+00 : f32
    %69 = vector.shape_cast %44 : vector<64x1xi1> to vector<64x1xi1>
    %70 = vector.broadcast %69 : vector<64x1xi1> to vector<64x32xi1>
    %71 = vector.broadcast %cst_34 : f32 to vector<64x32xf32>
    %72 = arith.select %70, %68, %71 : vector<64x32xi1>, vector<64x32xf32>
    %73 = arith.truncf %72 : vector<64x32xf32> to vector<64x32xbf16>
    %c64 = arith.constant 64 : index
    %c0_35 = arith.constant 0 : index
    %74 = vector.load %arg2[%c64, %c0_35] : memref<96x32xbf16, #tpu.memory_space<vmem>>, vector<32x32xbf16>
    %cst_36 = arith.constant dense<0.000000e+00> : vector<64x32xf32>
    %75 = tpu.matmul %73, %74, %cst_36 {dimension_numbers = #tpu.dot_dimension_numbers<[1], [0], [0], [1], [0, 0, 1, 1], [], []>} : vector<64x32xbf16>, vector<32x32xbf16>, vector<64x32xf32> -> vector<64x32xf32>
    %76 = arith.addf %67, %75 : vector<64x32xf32>
    %c2 = arith.constant 2 : index
    %c0_37 = arith.constant 0 : index
    %77 = vector.load %arg15[%c2, %c0_37] : memref<32x256xf32, #tpu.memory_space<vmem>>, vector<1x32xf32>
    %78 = vector.broadcast %77 : vector<1x32xf32> to vector<64x32xf32>
    %79 = arith.mulf %76, %78 : vector<64x32xf32>
    %c3 = arith.constant 3 : index
    %c0_38 = arith.constant 0 : index
    %80 = vector.load %arg15[%c3, %c0_38] : memref<32x256xf32, #tpu.memory_space<vmem>>, vector<1x32xf32>
    %81 = vector.broadcast %80 : vector<1x32xf32> to vector<64x32xf32>
    %82 = arith.addf %79, %81 : vector<64x32xf32>
    %cst_39 = arith.constant 0.000000e+00 : f32
    %83 = vector.broadcast %cst_39 : f32 to vector<64x32xf32>
    %84 = arith.maximumf %82, %83 : vector<64x32xf32>
    %c8_40 = arith.constant 8 : index
    %c0_41 = arith.constant 0 : index
    %85 = vector.load %arg18[%c8_40, %c0_41] : memref<144x32xf32, #tpu.memory_space<vmem>>, vector<64x32xf32>
    tpu.vector_store %arg18[%c8_40, %c0_41], %84 {strides = array<i32>} : memref<144x32xf32, #tpu.memory_space<vmem>>, vector<64x32xf32>,
    %c7_42 = arith.constant 7 : index
    %c0_43 = arith.constant 0 : index
    %86 = vector.load %arg18[%c7_42, %c0_43] : memref<144x32xf32, #tpu.memory_space<vmem>>, vector<64x32xf32>
    %cst_44 = arith.constant 0.000000e+00 : f32
    %87 = vector.shape_cast %35 : vector<64x1xi1> to vector<64x1xi1>
    %88 = vector.broadcast %87 : vector<64x1xi1> to vector<64x32xi1>
    %89 = vector.broadcast %cst_44 : f32 to vector<64x32xf32>
    %90 = arith.select %88, %86, %89 : vector<64x32xi1>, vector<64x32xf32>
    %91 = arith.truncf %90 : vector<64x32xf32> to vector<64x32xbf16>
    %c0_45 = arith.constant 0 : index
    %c0_46 = arith.constant 0 : index
    %92 = vector.load %arg3[%c0_45, %c0_46] : memref<96x32xbf16, #tpu.memory_space<vmem>>, vector<32x32xbf16>
    %cst_47 = arith.constant dense<0.000000e+00> : vector<64x32xf32>
    %93 = tpu.matmul %91, %92, %cst_47 {dimension_numbers = #tpu.dot_dimension_numbers<[1], [0], [0], [1], [0, 0, 1, 1], [], []>} : vector<64x32xbf16>, vector<32x32xbf16>, vector<64x32xf32> -> vector<64x32xf32>
    %c8_48 = arith.constant 8 : index
    %c0_49 = arith.constant 0 : index
    %94 = vector.load %arg18[%c8_48, %c0_49] : memref<144x32xf32, #tpu.memory_space<vmem>>, vector<64x32xf32>
    %95 = arith.truncf %94 : vector<64x32xf32> to vector<64x32xbf16>
    %c32_50 = arith.constant 32 : index
    %c0_51 = arith.constant 0 : index
    %96 = vector.load %arg3[%c32_50, %c0_51] : memref<96x32xbf16, #tpu.memory_space<vmem>>, vector<32x32xbf16>
    %cst_52 = arith.constant dense<0.000000e+00> : vector<64x32xf32>
    %97 = tpu.matmul %95, %96, %cst_52 {dimension_numbers = #tpu.dot_dimension_numbers<[1], [0], [0], [1], [0, 0, 1, 1], [], []>} : vector<64x32xbf16>, vector<32x32xbf16>, vector<64x32xf32> -> vector<64x32xf32>
    %98 = arith.addf %93, %97 : vector<64x32xf32>
    %c9_53 = arith.constant 9 : index
    %c0_54 = arith.constant 0 : index
    %99 = vector.load %arg18[%c9_53, %c0_54] : memref<144x32xf32, #tpu.memory_space<vmem>>, vector<64x32xf32>
    %cst_55 = arith.constant 0.000000e+00 : f32
    %100 = vector.shape_cast %44 : vector<64x1xi1> to vector<64x1xi1>
    %101 = vector.broadcast %100 : vector<64x1xi1> to vector<64x32xi1>
    %102 = vector.broadcast %cst_55 : f32 to vector<64x32xf32>
    %103 = arith.select %101, %99, %102 : vector<64x32xi1>, vector<64x32xf32>
    %104 = arith.truncf %103 : vector<64x32xf32> to vector<64x32xbf16>
    %c64_56 = arith.constant 64 : index
    %c0_57 = arith.constant 0 : index
    %105 = vector.load %arg3[%c64_56, %c0_57] : memref<96x32xbf16, #tpu.memory_space<vmem>>, vector<32x32xbf16>
    %cst_58 = arith.constant dense<0.000000e+00> : vector<64x32xf32>
    %106 = tpu.matmul %104, %105, %cst_58 {dimension_numbers = #tpu.dot_dimension_numbers<[1], [0], [0], [1], [0, 0, 1, 1], [], []>} : vector<64x32xbf16>, vector<32x32xbf16>, vector<64x32xf32> -> vector<64x32xf32>
    %107 = arith.addf %98, %106 : vector<64x32xf32>
    %c4 = arith.constant 4 : index
    %c0_59 = arith.constant 0 : index
    %108 = vector.load %arg15[%c4, %c0_59] : memref<32x256xf32, #tpu.memory_space<vmem>>, vector<1x32xf32>
    %109 = vector.broadcast %108 : vector<1x32xf32> to vector<64x32xf32>
    %110 = arith.mulf %107, %109 : vector<64x32xf32>
    %c5 = arith.constant 5 : index
    %c0_60 = arith.constant 0 : index
    %111 = vector.load %arg15[%c5, %c0_60] : memref<32x256xf32, #tpu.memory_space<vmem>>, vector<1x32xf32>
    %112 = vector.broadcast %111 : vector<1x32xf32> to vector<64x32xf32>
    %113 = arith.addf %110, %112 : vector<64x32xf32>
    %114 = arith.addf %113, %14 : vector<64x32xf32>
    %cst_61 = arith.constant 0.000000e+00 : f32
    %115 = vector.broadcast %cst_61 : f32 to vector<64x32xf32>
    %116 = arith.maximumf %114, %115 : vector<64x32xf32>
    %c8_62 = arith.constant 8 : index
    %c0_63 = arith.constant 0 : index
    %117 = vector.load %arg18[%c8_62, %c0_63] : memref<144x32xf32, #tpu.memory_space<vmem>>, vector<64x32xf32>
    tpu.vector_store %arg18[%c8_62, %c0_63], %116 {strides = array<i32>} : memref<144x32xf32, #tpu.memory_space<vmem>>, vector<64x32xf32>,
    %c6 = arith.constant 6 : index
    %c0_64 = arith.constant 0 : index
    %118 = vector.load %arg18[%c6, %c0_64] : memref<144x32xf32, #tpu.memory_space<vmem>>, vector<64x32xf32>
    %cst_65 = arith.constant 0.000000e+00 : f32
    %119 = vector.shape_cast %26 : vector<64x1xi1> to vector<64x1xi1>
    %120 = vector.broadcast %119 : vector<64x1xi1> to vector<64x32xi1>
    %121 = vector.broadcast %cst_65 : f32 to vector<64x32xf32>
    %122 = arith.select %120, %118, %121 : vector<64x32xi1>, vector<64x32xf32>
    %123 = arith.truncf %122 : vector<64x32xf32> to vector<64x32xbf16>
    %c0_66 = arith.constant 0 : index
    %c0_67 = arith.constant 0 : index
    %124 = vector.load %arg4[%c0_66, %c0_67] : memref<160x64xbf16, #tpu.memory_space<vmem>>, vector<32x64xbf16>
    %cst_68 = arith.constant dense<0.000000e+00> : vector<64x64xf32>
    %125 = tpu.matmul %123, %124, %cst_68 {dimension_numbers = #tpu.dot_dimension_numbers<[1], [0], [0], [1], [0, 0, 1, 1], [], []>} : vector<64x32xbf16>, vector<32x64xbf16>, vector<64x64xf32> -> vector<64x64xf32>
    %c7_69 = arith.constant 7 : index
    %c0_70 = arith.constant 0 : index
    %126 = vector.load %arg18[%c7_69, %c0_70] : memref<144x32xf32, #tpu.memory_space<vmem>>, vector<64x32xf32>
    %cst_71 = arith.constant 0.000000e+00 : f32
    %127 = vector.shape_cast %35 : vector<64x1xi1> to vector<64x1xi1>
    %128 = vector.broadcast %127 : vector<64x1xi1> to vector<64x32xi1>
    %129 = vector.broadcast %cst_71 : f32 to vector<64x32xf32>
    %130 = arith.select %128, %126, %129 : vector<64x32xi1>, vector<64x32xf32>
    %131 = arith.truncf %130 : vector<64x32xf32> to vector<64x32xbf16>
    %c32_72 = arith.constant 32 : index
    %c0_73 = arith.constant 0 : index
    %132 = vector.load %arg4[%c32_72, %c0_73] : memref<160x64xbf16, #tpu.memory_space<vmem>>, vector<32x64xbf16>
    %cst_74 = arith.constant dense<0.000000e+00> : vector<64x64xf32>
    %133 = tpu.matmul %131, %132, %cst_74 {dimension_numbers = #tpu.dot_dimension_numbers<[1], [0], [0], [1], [0, 0, 1, 1], [], []>} : vector<64x32xbf16>, vector<32x64xbf16>, vector<64x64xf32> -> vector<64x64xf32>
    %134 = arith.addf %125, %133 : vector<64x64xf32>
    %c8_75 = arith.constant 8 : index
    %c0_76 = arith.constant 0 : index
    %135 = vector.load %arg18[%c8_75, %c0_76] : memref<144x32xf32, #tpu.memory_space<vmem>>, vector<64x32xf32>
    %136 = arith.truncf %135 : vector<64x32xf32> to vector<64x32xbf16>
    %c64_77 = arith.constant 64 : index
    %c0_78 = arith.constant 0 : index
    %137 = vector.load %arg4[%c64_77, %c0_78] : memref<160x64xbf16, #tpu.memory_space<vmem>>, vector<32x64xbf16>
    %cst_79 = arith.constant dense<0.000000e+00> : vector<64x64xf32>
    %138 = tpu.matmul %136, %137, %cst_79 {dimension_numbers = #tpu.dot_dimension_numbers<[1], [0], [0], [1], [0, 0, 1, 1], [], []>} : vector<64x32xbf16>, vector<32x64xbf16>, vector<64x64xf32> -> vector<64x64xf32>
    %139 = arith.addf %134, %138 : vector<64x64xf32>
    %c9_80 = arith.constant 9 : index
    %c0_81 = arith.constant 0 : index
    %140 = vector.load %arg18[%c9_80, %c0_81] : memref<144x32xf32, #tpu.memory_space<vmem>>, vector<64x32xf32>
    %cst_82 = arith.constant 0.000000e+00 : f32
    %141 = vector.shape_cast %44 : vector<64x1xi1> to vector<64x1xi1>
    %142 = vector.broadcast %141 : vector<64x1xi1> to vector<64x32xi1>
    %143 = vector.broadcast %cst_82 : f32 to vector<64x32xf32>
    %144 = arith.select %142, %140, %143 : vector<64x32xi1>, vector<64x32xf32>
    %145 = arith.truncf %144 : vector<64x32xf32> to vector<64x32xbf16>
    %c96 = arith.constant 96 : index
    %c0_83 = arith.constant 0 : index
    %146 = vector.load %arg4[%c96, %c0_83] : memref<160x64xbf16, #tpu.memory_space<vmem>>, vector<32x64xbf16>
    %cst_84 = arith.constant dense<0.000000e+00> : vector<64x64xf32>
    %147 = tpu.matmul %145, %146, %cst_84 {dimension_numbers = #tpu.dot_dimension_numbers<[1], [0], [0], [1], [0, 0, 1, 1], [], []>} : vector<64x32xbf16>, vector<32x64xbf16>, vector<64x64xf32> -> vector<64x64xf32>
    %148 = arith.addf %139, %147 : vector<64x64xf32>
    %c10 = arith.constant 10 : index
    %c0_85 = arith.constant 0 : index
    %149 = vector.load %arg18[%c10, %c0_85] : memref<144x32xf32, #tpu.memory_space<vmem>>, vector<64x32xf32>
    %cst_86 = arith.constant 0.000000e+00 : f32
    %150 = vector.shape_cast %53 : vector<64x1xi1> to vector<64x1xi1>
    %151 = vector.broadcast %150 : vector<64x1xi1> to vector<64x32xi1>
    %152 = vector.broadcast %cst_86 : f32 to vector<64x32xf32>
    %153 = arith.select %151, %149, %152 : vector<64x32xi1>, vector<64x32xf32>
    %154 = arith.truncf %153 : vector<64x32xf32> to vector<64x32xbf16>
    %c128 = arith.constant 128 : index
    %c0_87 = arith.constant 0 : index
    %155 = vector.load %arg4[%c128, %c0_87] : memref<160x64xbf16, #tpu.memory_space<vmem>>, vector<32x64xbf16>
    %cst_88 = arith.constant dense<0.000000e+00> : vector<64x64xf32>
    %156 = tpu.matmul %154, %155, %cst_88 {dimension_numbers = #tpu.dot_dimension_numbers<[1], [0], [0], [1], [0, 0, 1, 1], [], []>} : vector<64x32xbf16>, vector<32x64xbf16>, vector<64x64xf32> -> vector<64x64xf32>
    %157 = arith.addf %148, %156 : vector<64x64xf32>
    %c6_89 = arith.constant 6 : index
    %c0_90 = arith.constant 0 : index
    %158 = vector.load %arg15[%c6_89, %c0_90] : memref<32x256xf32, #tpu.memory_space<vmem>>, vector<1x64xf32>
    %159 = vector.broadcast %158 : vector<1x64xf32> to vector<64x64xf32>
    %160 = arith.mulf %157, %159 : vector<64x64xf32>
    %c7_91 = arith.constant 7 : index
    %c0_92 = arith.constant 0 : index
    %161 = vector.load %arg15[%c7_91, %c0_92] : memref<32x256xf32, #tpu.memory_space<vmem>>, vector<1x64xf32>
    %162 = vector.broadcast %161 : vector<1x64xf32> to vector<64x64xf32>
    %163 = arith.addf %160, %162 : vector<64x64xf32>
    %cst_93 = arith.constant 0.000000e+00 : f32
    %164 = vector.broadcast %cst_93 : f32 to vector<64x64xf32>
    %165 = arith.maximumf %163, %164 : vector<64x64xf32>
    %c8_94 = arith.constant 8 : index
    %c0_95 = arith.constant 0 : index
    %166 = vector.load %arg19[%c8_94, %c0_95] : memref<80x64xf32, #tpu.memory_space<vmem>>, vector<64x64xf32>
    tpu.vector_store %arg19[%c8_94, %c0_95], %165 {strides = array<i32>} : memref<80x64xf32, #tpu.memory_space<vmem>>, vector<64x64xf32>,
    %c8_96 = arith.constant 8 : index
    %c0_97 = arith.constant 0 : index
    %167 = tpu.strided_load %arg19[%c8_96, %c0_97] {strides = array<i32: 2, 1>} : memref<80x64xf32, #tpu.memory_space<vmem>>, vector<32x64xf32>
    %c9_98 = arith.constant 9 : index
    %c0_99 = arith.constant 0 : index
    %168 = tpu.strided_load %arg19[%c9_98, %c0_99] {strides = array<i32: 2, 1>} : memref<80x64xf32, #tpu.memory_space<vmem>>, vector<32x64xf32>
    %169 = arith.maximumf %167, %168 : vector<32x64xf32>
    %170 = tpu.iota {dimensions = array<i32: 0>} : vector<32x1xi32>
    %c15_i32 = arith.constant 15 : i32
    %171 = vector.broadcast %c15_i32 : i32 to vector<32x1xi32>
    %172 = arith.andi %170, %171 : vector<32x1xi32>
    %c-2_i32_100 = arith.constant -2 : i32
    %173 = vector.broadcast %c-2_i32_100 : i32 to vector<32x1xi32>
    %174 = arith.addi %172, %173 : vector<32x1xi32>
    %c0_i32_101 = arith.constant 0 : i32
    %175 = vector.broadcast %c0_i32_101 : i32 to vector<32x1xi32>
    %176 = arith.cmpi sge, %174, %175 : vector<32x1xi32>
    %c-2_i32_102 = arith.constant -2 : i32
    %177 = vector.broadcast %c-2_i32_102 : i32 to vector<32x1xi32>
    %178 = arith.addi %172, %177 : vector<32x1xi32>
    %c16_i32 = arith.constant 16 : i32
    %179 = vector.broadcast %c16_i32 : i32 to vector<32x1xi32>
    %180 = arith.cmpi slt, %178, %179 : vector<32x1xi32>
    %181 = arith.andi %176, %180 : vector<32x1xi1>
    %c-1_i32_103 = arith.constant -1 : i32
    %182 = vector.broadcast %c-1_i32_103 : i32 to vector<32x1xi32>
    %183 = arith.addi %172, %182 : vector<32x1xi32>
    %c0_i32_104 = arith.constant 0 : i32
    %184 = vector.broadcast %c0_i32_104 : i32 to vector<32x1xi32>
    %185 = arith.cmpi sge, %183, %184 : vector<32x1xi32>
    %c-1_i32_105 = arith.constant -1 : i32
    %186 = vector.broadcast %c-1_i32_105 : i32 to vector<32x1xi32>
    %187 = arith.addi %172, %186 : vector<32x1xi32>
    %c16_i32_106 = arith.constant 16 : i32
    %188 = vector.broadcast %c16_i32_106 : i32 to vector<32x1xi32>
    %189 = arith.cmpi slt, %187, %188 : vector<32x1xi32>
    %190 = arith.andi %185, %189 : vector<32x1xi1>
    %c1_i32_107 = arith.constant 1 : i32
    %191 = vector.broadcast %c1_i32_107 : i32 to vector<32x1xi32>
    %192 = arith.addi %172, %191 : vector<32x1xi32>
    %c0_i32_108 = arith.constant 0 : i32
    %193 = vector.broadcast %c0_i32_108 : i32 to vector<32x1xi32>
    %194 = arith.cmpi sge, %192, %193 : vector<32x1xi32>
    %c1_i32_109 = arith.constant 1 : i32
    %195 = vector.broadcast %c1_i32_109 : i32 to vector<32x1xi32>
    %196 = arith.addi %172, %195 : vector<32x1xi32>
    %c16_i32_110 = arith.constant 16 : i32
    %197 = vector.broadcast %c16_i32_110 : i32 to vector<32x1xi32>
    %198 = arith.cmpi slt, %196, %197 : vector<32x1xi32>
    %199 = arith.andi %194, %198 : vector<32x1xi1>
    %c2_i32_111 = arith.constant 2 : i32
    %200 = vector.broadcast %c2_i32_111 : i32 to vector<32x1xi32>
    %201 = arith.addi %172, %200 : vector<32x1xi32>
    %c0_i32_112 = arith.constant 0 : i32
    %202 = vector.broadcast %c0_i32_112 : i32 to vector<32x1xi32>
    %203 = arith.cmpi sge, %201, %202 : vector<32x1xi32>
    %c2_i32_113 = arith.constant 2 : i32
    %204 = vector.broadcast %c2_i32_113 : i32 to vector<32x1xi32>
    %205 = arith.addi %172, %204 : vector<32x1xi32>
    %c16_i32_114 = arith.constant 16 : i32
    %206 = vector.broadcast %c16_i32_114 : i32 to vector<32x1xi32>
    %207 = arith.cmpi slt, %205, %206 : vector<32x1xi32>
    %208 = arith.andi %203, %207 : vector<32x1xi1>
    %c8_115 = arith.constant 8 : index
    %c0_116 = arith.constant 0 : index
    %209 = vector.load %arg19[%c8_115, %c0_116] : memref<80x64xf32, #tpu.memory_space<vmem>>, vector<32x64xf32>
    tpu.vector_store %arg19[%c8_115, %c0_116], %169 {strides = array<i32>} : memref<80x64xf32, #tpu.memory_space<vmem>>, vector<32x64xf32>,
    %c7_117 = arith.constant 7 : index
    %c0_118 = arith.constant 0 : index
    %210 = vector.load %arg19[%c7_117, %c0_118] : memref<80x64xf32, #tpu.memory_space<vmem>>, vector<32x64xf32>
    %cst_119 = arith.constant 0.000000e+00 : f32
    %211 = vector.shape_cast %190 : vector<32x1xi1> to vector<32x1xi1>
    %212 = vector.broadcast %211 : vector<32x1xi1> to vector<32x64xi1>
    %213 = vector.broadcast %cst_119 : f32 to vector<32x64xf32>
    %214 = arith.select %212, %210, %213 : vector<32x64xi1>, vector<32x64xf32>
    %215 = arith.truncf %214 : vector<32x64xf32> to vector<32x64xbf16>
    %c0_120 = arith.constant 0 : index
    %c0_121 = arith.constant 0 : index
    %216 = vector.load %arg5[%c0_120, %c0_121] : memref<192x64xbf16, #tpu.memory_space<vmem>>, vector<64x64xbf16>
    %cst_122 = arith.constant dense<0.000000e+00> : vector<32x64xf32>
    %217 = tpu.matmul %215, %216, %cst_122 {dimension_numbers = #tpu.dot_dimension_numbers<[1], [0], [0], [1], [0, 0, 1, 1], [], []>} : vector<32x64xbf16>, vector<64x64xbf16>, vector<32x64xf32> -> vector<32x64xf32>
    %c8_123 = arith.constant 8 : index
    %c0_124 = arith.constant 0 : index
    %218 = vector.load %arg19[%c8_123, %c0_124] : memref<80x64xf32, #tpu.memory_space<vmem>>, vector<32x64xf32>
    %219 = arith.truncf %218 : vector<32x64xf32> to vector<32x64xbf16>
    %c64_125 = arith.constant 64 : index
    %c0_126 = arith.constant 0 : index
    %220 = vector.load %arg5[%c64_125, %c0_126] : memref<192x64xbf16, #tpu.memory_space<vmem>>, vector<64x64xbf16>
    %cst_127 = arith.constant dense<0.000000e+00> : vector<32x64xf32>
    %221 = tpu.matmul %219, %220, %cst_127 {dimension_numbers = #tpu.dot_dimension_numbers<[1], [0], [0], [1], [0, 0, 1, 1], [], []>} : vector<32x64xbf16>, vector<64x64xbf16>, vector<32x64xf32> -> vector<32x64xf32>
    %222 = arith.addf %217, %221 : vector<32x64xf32>
    %c9_128 = arith.constant 9 : index
    %c0_129 = arith.constant 0 : index
    %223 = vector.load %arg19[%c9_128, %c0_129] : memref<80x64xf32, #tpu.memory_space<vmem>>, vector<32x64xf32>
    %cst_130 = arith.constant 0.000000e+00 : f32
    %224 = vector.shape_cast %199 : vector<32x1xi1> to vector<32x1xi1>
    %225 = vector.broadcast %224 : vector<32x1xi1> to vector<32x64xi1>
    %226 = vector.broadcast %cst_130 : f32 to vector<32x64xf32>
    %227 = arith.select %225, %223, %226 : vector<32x64xi1>, vector<32x64xf32>
    %228 = arith.truncf %227 : vector<32x64xf32> to vector<32x64xbf16>
    %c128_131 = arith.constant 128 : index
    %c0_132 = arith.constant 0 : index
    %229 = vector.load %arg5[%c128_131, %c0_132] : memref<192x64xbf16, #tpu.memory_space<vmem>>, vector<64x64xbf16>
    %cst_133 = arith.constant dense<0.000000e+00> : vector<32x64xf32>
    %230 = tpu.matmul %228, %229, %cst_133 {dimension_numbers = #tpu.dot_dimension_numbers<[1], [0], [0], [1], [0, 0, 1, 1], [], []>} : vector<32x64xbf16>, vector<64x64xbf16>, vector<32x64xf32> -> vector<32x64xf32>
    %231 = arith.addf %222, %230 : vector<32x64xf32>
    %c8_134 = arith.constant 8 : index
    %c0_135 = arith.constant 0 : index
    %232 = vector.load %arg15[%c8_134, %c0_135] : memref<32x256xf32, #tpu.memory_space<vmem>>, vector<1x64xf32>
    %233 = vector.broadcast %232 : vector<1x64xf32> to vector<32x64xf32>
    %234 = arith.mulf %231, %233 : vector<32x64xf32>
    %c9_136 = arith.constant 9 : index
    %c0_137 = arith.constant 0 : index
    %235 = vector.load %arg15[%c9_136, %c0_137] : memref<32x256xf32, #tpu.memory_space<vmem>>, vector<1x64xf32>
    %236 = vector.broadcast %235 : vector<1x64xf32> to vector<32x64xf32>
    %237 = arith.addf %234, %236 : vector<32x64xf32>
    %cst_138 = arith.constant 0.000000e+00 : f32
    %238 = vector.broadcast %cst_138 : f32 to vector<32x64xf32>
    %239 = arith.maximumf %237, %238 : vector<32x64xf32>
    %c8_139 = arith.constant 8 : index
    %c0_140 = arith.constant 0 : index
    %240 = vector.load %arg19[%c8_139, %c0_140] : memref<80x64xf32, #tpu.memory_space<vmem>>, vector<32x64xf32>
    tpu.vector_store %arg19[%c8_139, %c0_140], %239 {strides = array<i32>} : memref<80x64xf32, #tpu.memory_space<vmem>>, vector<32x64xf32>,
    %c7_141 = arith.constant 7 : index
    %c0_142 = arith.constant 0 : index
    %241 = vector.load %arg19[%c7_141, %c0_142] : memref<80x64xf32, #tpu.memory_space<vmem>>, vector<32x64xf32>
    %cst_143 = arith.constant 0.000000e+00 : f32
    %242 = vector.shape_cast %190 : vector<32x1xi1> to vector<32x1xi1>
    %243 = vector.broadcast %242 : vector<32x1xi1> to vector<32x64xi1>
    %244 = vector.broadcast %cst_143 : f32 to vector<32x64xf32>
    %245 = arith.select %243, %241, %244 : vector<32x64xi1>, vector<32x64xf32>
    %246 = arith.truncf %245 : vector<32x64xf32> to vector<32x64xbf16>
    %c0_144 = arith.constant 0 : index
    %c0_145 = arith.constant 0 : index
    %247 = vector.load %arg6[%c0_144, %c0_145] : memref<192x64xbf16, #tpu.memory_space<vmem>>, vector<64x64xbf16>
    %cst_146 = arith.constant dense<0.000000e+00> : vector<32x64xf32>
    %248 = tpu.matmul %246, %247, %cst_146 {dimension_numbers = #tpu.dot_dimension_numbers<[1], [0], [0], [1], [0, 0, 1, 1], [], []>} : vector<32x64xbf16>, vector<64x64xbf16>, vector<32x64xf32> -> vector<32x64xf32>
    %c8_147 = arith.constant 8 : index
    %c0_148 = arith.constant 0 : index
    %249 = vector.load %arg19[%c8_147, %c0_148] : memref<80x64xf32, #tpu.memory_space<vmem>>, vector<32x64xf32>
    %250 = arith.truncf %249 : vector<32x64xf32> to vector<32x64xbf16>
    %c64_149 = arith.constant 64 : index
    %c0_150 = arith.constant 0 : index
    %251 = vector.load %arg6[%c64_149, %c0_150] : memref<192x64xbf16, #tpu.memory_space<vmem>>, vector<64x64xbf16>
    %cst_151 = arith.constant dense<0.000000e+00> : vector<32x64xf32>
    %252 = tpu.matmul %250, %251, %cst_151 {dimension_numbers = #tpu.dot_dimension_numbers<[1], [0], [0], [1], [0, 0, 1, 1], [], []>} : vector<32x64xbf16>, vector<64x64xbf16>, vector<32x64xf32> -> vector<32x64xf32>
    %253 = arith.addf %248, %252 : vector<32x64xf32>
    %c9_152 = arith.constant 9 : index
    %c0_153 = arith.constant 0 : index
    %254 = vector.load %arg19[%c9_152, %c0_153] : memref<80x64xf32, #tpu.memory_space<vmem>>, vector<32x64xf32>
    %cst_154 = arith.constant 0.000000e+00 : f32
    %255 = vector.shape_cast %199 : vector<32x1xi1> to vector<32x1xi1>
    %256 = vector.broadcast %255 : vector<32x1xi1> to vector<32x64xi1>
    %257 = vector.broadcast %cst_154 : f32 to vector<32x64xf32>
    %258 = arith.select %256, %254, %257 : vector<32x64xi1>, vector<32x64xf32>
    %259 = arith.truncf %258 : vector<32x64xf32> to vector<32x64xbf16>
    %c128_155 = arith.constant 128 : index
    %c0_156 = arith.constant 0 : index
    %260 = vector.load %arg6[%c128_155, %c0_156] : memref<192x64xbf16, #tpu.memory_space<vmem>>, vector<64x64xbf16>
    %cst_157 = arith.constant dense<0.000000e+00> : vector<32x64xf32>
    %261 = tpu.matmul %259, %260, %cst_157 {dimension_numbers = #tpu.dot_dimension_numbers<[1], [0], [0], [1], [0, 0, 1, 1], [], []>} : vector<32x64xbf16>, vector<64x64xbf16>, vector<32x64xf32> -> vector<32x64xf32>
    %262 = arith.addf %253, %261 : vector<32x64xf32>
    %c10_158 = arith.constant 10 : index
    %c0_159 = arith.constant 0 : index
    %263 = vector.load %arg15[%c10_158, %c0_159] : memref<32x256xf32, #tpu.memory_space<vmem>>, vector<1x64xf32>
    %264 = vector.broadcast %263 : vector<1x64xf32> to vector<32x64xf32>
    %265 = arith.mulf %262, %264 : vector<32x64xf32>
    %c11 = arith.constant 11 : index
    %c0_160 = arith.constant 0 : index
    %266 = vector.load %arg15[%c11, %c0_160] : memref<32x256xf32, #tpu.memory_space<vmem>>, vector<1x64xf32>
    %267 = vector.broadcast %266 : vector<1x64xf32> to vector<32x64xf32>
    %268 = arith.addf %265, %267 : vector<32x64xf32>
    %269 = arith.addf %268, %169 : vector<32x64xf32>
    %cst_161 = arith.constant 0.000000e+00 : f32
    %270 = vector.broadcast %cst_161 : f32 to vector<32x64xf32>
    %271 = arith.maximumf %269, %270 : vector<32x64xf32>
    %c8_162 = arith.constant 8 : index
    %c0_163 = arith.constant 0 : index
    %272 = vector.load %arg19[%c8_162, %c0_163] : memref<80x64xf32, #tpu.memory_space<vmem>>, vector<32x64xf32>
    tpu.vector_store %arg19[%c8_162, %c0_163], %271 {strides = array<i32>} : memref<80x64xf32, #tpu.memory_space<vmem>>, vector<32x64xf32>,
    %c6_164 = arith.constant 6 : index
    %c0_165 = arith.constant 0 : index
    %273 = vector.load %arg19[%c6_164, %c0_165] : memref<80x64xf32, #tpu.memory_space<vmem>>, vector<32x64xf32>
    %cst_166 = arith.constant 0.000000e+00 : f32
    %274 = vector.shape_cast %181 : vector<32x1xi1> to vector<32x1xi1>
    %275 = vector.broadcast %274 : vector<32x1xi1> to vector<32x64xi1>
    %276 = vector.broadcast %cst_166 : f32 to vector<32x64xf32>
    %277 = arith.select %275, %273, %276 : vector<32x64xi1>, vector<32x64xf32>
    %278 = arith.truncf %277 : vector<32x64xf32> to vector<32x64xbf16>
    %c0_167 = arith.constant 0 : index
    %c0_168 = arith.constant 0 : index
    %279 = vector.load %arg7[%c0_167, %c0_168] : memref<320x128xbf16, #tpu.memory_space<vmem>>, vector<64x128xbf16>
    %cst_169 = arith.constant dense<0.000000e+00> : vector<32x128xf32>
    %280 = tpu.matmul %278, %279, %cst_169 {dimension_numbers = #tpu.dot_dimension_numbers<[1], [0], [0], [1], [0, 0, 1, 1], [], []>} : vector<32x64xbf16>, vector<64x128xbf16>, vector<32x128xf32> -> vector<32x128xf32>
    %c7_170 = arith.constant 7 : index
    %c0_171 = arith.constant 0 : index
    %281 = vector.load %arg19[%c7_170, %c0_171] : memref<80x64xf32, #tpu.memory_space<vmem>>, vector<32x64xf32>
    %cst_172 = arith.constant 0.000000e+00 : f32
    %282 = vector.shape_cast %190 : vector<32x1xi1> to vector<32x1xi1>
    %283 = vector.broadcast %282 : vector<32x1xi1> to vector<32x64xi1>
    %284 = vector.broadcast %cst_172 : f32 to vector<32x64xf32>
    %285 = arith.select %283, %281, %284 : vector<32x64xi1>, vector<32x64xf32>
    %286 = arith.truncf %285 : vector<32x64xf32> to vector<32x64xbf16>
    %c64_173 = arith.constant 64 : index
    %c0_174 = arith.constant 0 : index
    %287 = vector.load %arg7[%c64_173, %c0_174] : memref<320x128xbf16, #tpu.memory_space<vmem>>, vector<64x128xbf16>
    %cst_175 = arith.constant dense<0.000000e+00> : vector<32x128xf32>
    %288 = tpu.matmul %286, %287, %cst_175 {dimension_numbers = #tpu.dot_dimension_numbers<[1], [0], [0], [1], [0, 0, 1, 1], [], []>} : vector<32x64xbf16>, vector<64x128xbf16>, vector<32x128xf32> -> vector<32x128xf32>
    %289 = arith.addf %280, %288 : vector<32x128xf32>
    %c8_176 = arith.constant 8 : index
    %c0_177 = arith.constant 0 : index
    %290 = vector.load %arg19[%c8_176, %c0_177] : memref<80x64xf32, #tpu.memory_space<vmem>>, vector<32x64xf32>
    %291 = arith.truncf %290 : vector<32x64xf32> to vector<32x64xbf16>
    %c128_178 = arith.constant 128 : index
    %c0_179 = arith.constant 0 : index
    %292 = vector.load %arg7[%c128_178, %c0_179] : memref<320x128xbf16, #tpu.memory_space<vmem>>, vector<64x128xbf16>
    %cst_180 = arith.constant dense<0.000000e+00> : vector<32x128xf32>
    %293 = tpu.matmul %291, %292, %cst_180 {dimension_numbers = #tpu.dot_dimension_numbers<[1], [0], [0], [1], [0, 0, 1, 1], [], []>} : vector<32x64xbf16>, vector<64x128xbf16>, vector<32x128xf32> -> vector<32x128xf32>
    %294 = arith.addf %289, %293 : vector<32x128xf32>
    %c9_181 = arith.constant 9 : index
    %c0_182 = arith.constant 0 : index
    %295 = vector.load %arg19[%c9_181, %c0_182] : memref<80x64xf32, #tpu.memory_space<vmem>>, vector<32x64xf32>
    %cst_183 = arith.constant 0.000000e+00 : f32
    %296 = vector.shape_cast %199 : vector<32x1xi1> to vector<32x1xi1>
    %297 = vector.broadcast %296 : vector<32x1xi1> to vector<32x64xi1>
    %298 = vector.broadcast %cst_183 : f32 to vector<32x64xf32>
    %299 = arith.select %297, %295, %298 : vector<32x64xi1>, vector<32x64xf32>
    %300 = arith.truncf %299 : vector<32x64xf32> to vector<32x64xbf16>
    %c192 = arith.constant 192 : index
    %c0_184 = arith.constant 0 : index
    %301 = vector.load %arg7[%c192, %c0_184] : memref<320x128xbf16, #tpu.memory_space<vmem>>, vector<64x128xbf16>
    %cst_185 = arith.constant dense<0.000000e+00> : vector<32x128xf32>
    %302 = tpu.matmul %300, %301, %cst_185 {dimension_numbers = #tpu.dot_dimension_numbers<[1], [0], [0], [1], [0, 0, 1, 1], [], []>} : vector<32x64xbf16>, vector<64x128xbf16>, vector<32x128xf32> -> vector<32x128xf32>
    %303 = arith.addf %294, %302 : vector<32x128xf32>
    %c10_186 = arith.constant 10 : index
    %c0_187 = arith.constant 0 : index
    %304 = vector.load %arg19[%c10_186, %c0_187] : memref<80x64xf32, #tpu.memory_space<vmem>>, vector<32x64xf32>
    %cst_188 = arith.constant 0.000000e+00 : f32
    %305 = vector.shape_cast %208 : vector<32x1xi1> to vector<32x1xi1>
    %306 = vector.broadcast %305 : vector<32x1xi1> to vector<32x64xi1>
    %307 = vector.broadcast %cst_188 : f32 to vector<32x64xf32>
    %308 = arith.select %306, %304, %307 : vector<32x64xi1>, vector<32x64xf32>
    %309 = arith.truncf %308 : vector<32x64xf32> to vector<32x64xbf16>
    %c256 = arith.constant 256 : index
    %c0_189 = arith.constant 0 : index
    %310 = vector.load %arg7[%c256, %c0_189] : memref<320x128xbf16, #tpu.memory_space<vmem>>, vector<64x128xbf16>
    %cst_190 = arith.constant dense<0.000000e+00> : vector<32x128xf32>
    %311 = tpu.matmul %309, %310, %cst_190 {dimension_numbers = #tpu.dot_dimension_numbers<[1], [0], [0], [1], [0, 0, 1, 1], [], []>} : vector<32x64xbf16>, vector<64x128xbf16>, vector<32x128xf32> -> vector<32x128xf32>
    %312 = arith.addf %303, %311 : vector<32x128xf32>
    %c12 = arith.constant 12 : index
    %c0_191 = arith.constant 0 : index
    %313 = vector.load %arg15[%c12, %c0_191] : memref<32x256xf32, #tpu.memory_space<vmem>>, vector<1x128xf32>
    %314 = vector.broadcast %313 : vector<1x128xf32> to vector<32x128xf32>
    %315 = arith.mulf %312, %314 : vector<32x128xf32>
    %c13 = arith.constant 13 : index
    %c0_192 = arith.constant 0 : index
    %316 = vector.load %arg15[%c13, %c0_192] : memref<32x256xf32, #tpu.memory_space<vmem>>, vector<1x128xf32>
    %317 = vector.broadcast %316 : vector<1x128xf32> to vector<32x128xf32>
    %318 = arith.addf %315, %317 : vector<32x128xf32>
    %cst_193 = arith.constant 0.000000e+00 : f32
    %319 = vector.broadcast %cst_193 : f32 to vector<32x128xf32>
    %320 = arith.maximumf %318, %319 : vector<32x128xf32>
    %c8_194 = arith.constant 8 : index
    %c0_195 = arith.constant 0 : index
    %321 = vector.load %arg20[%c8_194, %c0_195] : memref<48x128xf32, #tpu.memory_space<vmem>>, vector<32x128xf32>
    tpu.vector_store %arg20[%c8_194, %c0_195], %320 {strides = array<i32>} : memref<48x128xf32, #tpu.memory_space<vmem>>, vector<32x128xf32>,
    %c8_196 = arith.constant 8 : index
    %c0_197 = arith.constant 0 : index
    %322 = tpu.strided_load %arg20[%c8_196, %c0_197] {strides = array<i32: 2, 1>} : memref<48x128xf32, #tpu.memory_space<vmem>>, vector<16x128xf32>
    %c9_198 = arith.constant 9 : index
    %c0_199 = arith.constant 0 : index
    %323 = tpu.strided_load %arg20[%c9_198, %c0_199] {strides = array<i32: 2, 1>} : memref<48x128xf32, #tpu.memory_space<vmem>>, vector<16x128xf32>
    %324 = arith.maximumf %322, %323 : vector<16x128xf32>
    %325 = tpu.iota {dimensions = array<i32: 0>} : vector<16x1xi32>
    %c7_i32 = arith.constant 7 : i32
    %326 = vector.broadcast %c7_i32 : i32 to vector<16x1xi32>
    %327 = arith.andi %325, %326 : vector<16x1xi32>
    %c-1_i32_200 = arith.constant -1 : i32
    %328 = vector.broadcast %c-1_i32_200 : i32 to vector<16x1xi32>
    %329 = arith.addi %327, %328 : vector<16x1xi32>
    %c0_i32_201 = arith.constant 0 : i32
    %330 = vector.broadcast %c0_i32_201 : i32 to vector<16x1xi32>
    %331 = arith.cmpi sge, %329, %330 : vector<16x1xi32>
    %c-1_i32_202 = arith.constant -1 : i32
    %332 = vector.broadcast %c-1_i32_202 : i32 to vector<16x1xi32>
    %333 = arith.addi %327, %332 : vector<16x1xi32>
    %c8_i32 = arith.constant 8 : i32
    %334 = vector.broadcast %c8_i32 : i32 to vector<16x1xi32>
    %335 = arith.cmpi slt, %333, %334 : vector<16x1xi32>
    %336 = arith.andi %331, %335 : vector<16x1xi1>
    %c1_i32_203 = arith.constant 1 : i32
    %337 = vector.broadcast %c1_i32_203 : i32 to vector<16x1xi32>
    %338 = arith.addi %327, %337 : vector<16x1xi32>
    %c0_i32_204 = arith.constant 0 : i32
    %339 = vector.broadcast %c0_i32_204 : i32 to vector<16x1xi32>
    %340 = arith.cmpi sge, %338, %339 : vector<16x1xi32>
    %c1_i32_205 = arith.constant 1 : i32
    %341 = vector.broadcast %c1_i32_205 : i32 to vector<16x1xi32>
    %342 = arith.addi %327, %341 : vector<16x1xi32>
    %c8_i32_206 = arith.constant 8 : i32
    %343 = vector.broadcast %c8_i32_206 : i32 to vector<16x1xi32>
    %344 = arith.cmpi slt, %342, %343 : vector<16x1xi32>
    %345 = arith.andi %340, %344 : vector<16x1xi1>
    %c8_207 = arith.constant 8 : index
    %c0_208 = arith.constant 0 : index
    %346 = vector.load %arg20[%c8_207, %c0_208] : memref<48x128xf32, #tpu.memory_space<vmem>>, vector<16x128xf32>
    tpu.vector_store %arg20[%c8_207, %c0_208], %324 {strides = array<i32>} : memref<48x128xf32, #tpu.memory_space<vmem>>, vector<16x128xf32>,
    %c7_209 = arith.constant 7 : index
    %c0_210 = arith.constant 0 : index
    %347 = vector.load %arg20[%c7_209, %c0_210] : memref<48x128xf32, #tpu.memory_space<vmem>>, vector<16x128xf32>
    %cst_211 = arith.constant 0.000000e+00 : f32
    %348 = vector.shape_cast %336 : vector<16x1xi1> to vector<16x1xi1>
    %349 = vector.broadcast %348 : vector<16x1xi1> to vector<16x128xi1>
    %350 = vector.broadcast %cst_211 : f32 to vector<16x128xf32>
    %351 = arith.select %349, %347, %350 : vector<16x128xi1>, vector<16x128xf32>
    %352 = arith.truncf %351 : vector<16x128xf32> to vector<16x128xbf16>
    %c0_212 = arith.constant 0 : index
    %c0_213 = arith.constant 0 : index
    %353 = vector.load %arg8[%c0_212, %c0_213] : memref<384x128xbf16, #tpu.memory_space<vmem>>, vector<128x128xbf16>
    %cst_214 = arith.constant dense<0.000000e+00> : vector<16x128xf32>
    %354 = tpu.matmul %352, %353, %cst_214 {dimension_numbers = #tpu.dot_dimension_numbers<[1], [0], [0], [1], [0, 0, 1, 1], [], []>} : vector<16x128xbf16>, vector<128x128xbf16>, vector<16x128xf32> -> vector<16x128xf32>
    %c8_215 = arith.constant 8 : index
    %c0_216 = arith.constant 0 : index
    %355 = vector.load %arg20[%c8_215, %c0_216] : memref<48x128xf32, #tpu.memory_space<vmem>>, vector<16x128xf32>
    %356 = arith.truncf %355 : vector<16x128xf32> to vector<16x128xbf16>
    %c128_217 = arith.constant 128 : index
    %c0_218 = arith.constant 0 : index
    %357 = vector.load %arg8[%c128_217, %c0_218] : memref<384x128xbf16, #tpu.memory_space<vmem>>, vector<128x128xbf16>
    %cst_219 = arith.constant dense<0.000000e+00> : vector<16x128xf32>
    %358 = tpu.matmul %356, %357, %cst_219 {dimension_numbers = #tpu.dot_dimension_numbers<[1], [0], [0], [1], [0, 0, 1, 1], [], []>} : vector<16x128xbf16>, vector<128x128xbf16>, vector<16x128xf32> -> vector<16x128xf32>
    %359 = arith.addf %354, %358 : vector<16x128xf32>
    %c9_220 = arith.constant 9 : index
    %c0_221 = arith.constant 0 : index
    %360 = vector.load %arg20[%c9_220, %c0_221] : memref<48x128xf32, #tpu.memory_space<vmem>>, vector<16x128xf32>
    %cst_222 = arith.constant 0.000000e+00 : f32
    %361 = vector.shape_cast %345 : vector<16x1xi1> to vector<16x1xi1>
    %362 = vector.broadcast %361 : vector<16x1xi1> to vector<16x128xi1>
    %363 = vector.broadcast %cst_222 : f32 to vector<16x128xf32>
    %364 = arith.select %362, %360, %363 : vector<16x128xi1>, vector<16x128xf32>
    %365 = arith.truncf %364 : vector<16x128xf32> to vector<16x128xbf16>
    %c256_223 = arith.constant 256 : index
    %c0_224 = arith.constant 0 : index
    %366 = vector.load %arg8[%c256_223, %c0_224] : memref<384x128xbf16, #tpu.memory_space<vmem>>, vector<128x128xbf16>
    %cst_225 = arith.constant dense<0.000000e+00> : vector<16x128xf32>
    %367 = tpu.matmul %365, %366, %cst_225 {dimension_numbers = #tpu.dot_dimension_numbers<[1], [0], [0], [1], [0, 0, 1, 1], [], []>} : vector<16x128xbf16>, vector<128x128xbf16>, vector<16x128xf32> -> vector<16x128xf32>
    %368 = arith.addf %359, %367 : vector<16x128xf32>
    %c14 = arith.constant 14 : index
    %c0_226 = arith.constant 0 : index
    %369 = vector.load %arg15[%c14, %c0_226] : memref<32x256xf32, #tpu.memory_space<vmem>>, vector<1x128xf32>
    %370 = vector.broadcast %369 : vector<1x128xf32> to vector<16x128xf32>
    %371 = arith.mulf %368, %370 : vector<16x128xf32>
    %c15 = arith.constant 15 : index
    %c0_227 = arith.constant 0 : index
    %372 = vector.load %arg15[%c15, %c0_227] : memref<32x256xf32, #tpu.memory_space<vmem>>, vector<1x128xf32>
    %373 = vector.broadcast %372 : vector<1x128xf32> to vector<16x128xf32>
    %374 = arith.addf %371, %373 : vector<16x128xf32>
    %cst_228 = arith.constant 0.000000e+00 : f32
    %375 = vector.broadcast %cst_228 : f32 to vector<16x128xf32>
    %376 = arith.maximumf %374, %375 : vector<16x128xf32>
    %c8_229 = arith.constant 8 : index
    %c0_230 = arith.constant 0 : index
    %377 = vector.load %arg20[%c8_229, %c0_230] : memref<48x128xf32, #tpu.memory_space<vmem>>, vector<16x128xf32>
    tpu.vector_store %arg20[%c8_229, %c0_230], %376 {strides = array<i32>} : memref<48x128xf32, #tpu.memory_space<vmem>>, vector<16x128xf32>,
    %c7_231 = arith.constant 7 : index
    %c0_232 = arith.constant 0 : index
    %378 = vector.load %arg20[%c7_231, %c0_232] : memref<48x128xf32, #tpu.memory_space<vmem>>, vector<16x128xf32>
    %cst_233 = arith.constant 0.000000e+00 : f32
    %379 = vector.shape_cast %336 : vector<16x1xi1> to vector<16x1xi1>
    %380 = vector.broadcast %379 : vector<16x1xi1> to vector<16x128xi1>
    %381 = vector.broadcast %cst_233 : f32 to vector<16x128xf32>
    %382 = arith.select %380, %378, %381 : vector<16x128xi1>, vector<16x128xf32>
    %383 = arith.truncf %382 : vector<16x128xf32> to vector<16x128xbf16>
    %c0_234 = arith.constant 0 : index
    %c0_235 = arith.constant 0 : index
    %384 = vector.load %arg9[%c0_234, %c0_235] : memref<384x128xbf16, #tpu.memory_space<vmem>>, vector<128x128xbf16>
    %cst_236 = arith.constant dense<0.000000e+00> : vector<16x128xf32>
    %385 = tpu.matmul %383, %384, %cst_236 {dimension_numbers = #tpu.dot_dimension_numbers<[1], [0], [0], [1], [0, 0, 1, 1], [], []>} : vector<16x128xbf16>, vector<128x128xbf16>, vector<16x128xf32> -> vector<16x128xf32>
    %c8_237 = arith.constant 8 : index
    %c0_238 = arith.constant 0 : index
    %386 = vector.load %arg20[%c8_237, %c0_238] : memref<48x128xf32, #tpu.memory_space<vmem>>, vector<16x128xf32>
    %387 = arith.truncf %386 : vector<16x128xf32> to vector<16x128xbf16>
    %c128_239 = arith.constant 128 : index
    %c0_240 = arith.constant 0 : index
    %388 = vector.load %arg9[%c128_239, %c0_240] : memref<384x128xbf16, #tpu.memory_space<vmem>>, vector<128x128xbf16>
    %cst_241 = arith.constant dense<0.000000e+00> : vector<16x128xf32>
    %389 = tpu.matmul %387, %388, %cst_241 {dimension_numbers = #tpu.dot_dimension_numbers<[1], [0], [0], [1], [0, 0, 1, 1], [], []>} : vector<16x128xbf16>, vector<128x128xbf16>, vector<16x128xf32> -> vector<16x128xf32>
    %390 = arith.addf %385, %389 : vector<16x128xf32>
    %c9_242 = arith.constant 9 : index
    %c0_243 = arith.constant 0 : index
    %391 = vector.load %arg20[%c9_242, %c0_243] : memref<48x128xf32, #tpu.memory_space<vmem>>, vector<16x128xf32>
    %cst_244 = arith.constant 0.000000e+00 : f32
    %392 = vector.shape_cast %345 : vector<16x1xi1> to vector<16x1xi1>
    %393 = vector.broadcast %392 : vector<16x1xi1> to vector<16x128xi1>
    %394 = vector.broadcast %cst_244 : f32 to vector<16x128xf32>
    %395 = arith.select %393, %391, %394 : vector<16x128xi1>, vector<16x128xf32>
    %396 = arith.truncf %395 : vector<16x128xf32> to vector<16x128xbf16>
    %c256_245 = arith.constant 256 : index
    %c0_246 = arith.constant 0 : index
    %397 = vector.load %arg9[%c256_245, %c0_246] : memref<384x128xbf16, #tpu.memory_space<vmem>>, vector<128x128xbf16>
    %cst_247 = arith.constant dense<0.000000e+00> : vector<16x128xf32>
    %398 = tpu.matmul %396, %397, %cst_247 {dimension_numbers = #tpu.dot_dimension_numbers<[1], [0], [0], [1], [0, 0, 1, 1], [], []>} : vector<16x128xbf16>, vector<128x128xbf16>, vector<16x128xf32> -> vector<16x128xf32>
    %399 = arith.addf %390, %398 : vector<16x128xf32>
    %c16 = arith.constant 16 : index
    %c0_248 = arith.constant 0 : index
    %400 = vector.load %arg15[%c16, %c0_248] : memref<32x256xf32, #tpu.memory_space<vmem>>, vector<1x128xf32>
    %401 = vector.broadcast %400 : vector<1x128xf32> to vector<16x128xf32>
    %402 = arith.mulf %399, %401 : vector<16x128xf32>
    %c17 = arith.constant 17 : index
    %c0_249 = arith.constant 0 : index
    %403 = vector.load %arg15[%c17, %c0_249] : memref<32x256xf32, #tpu.memory_space<vmem>>, vector<1x128xf32>
    %404 = vector.broadcast %403 : vector<1x128xf32> to vector<16x128xf32>
    %405 = arith.addf %402, %404 : vector<16x128xf32>
    %406 = arith.addf %405, %324 : vector<16x128xf32>
    %cst_250 = arith.constant 0.000000e+00 : f32
    %407 = vector.broadcast %cst_250 : f32 to vector<16x128xf32>
    %408 = arith.maximumf %406, %407 : vector<16x128xf32>
    %409 = arith.truncf %408 : vector<16x128xf32> to vector<16x128xbf16>
    %c0_251 = arith.constant 0 : index
    %c0_252 = arith.constant 0 : index
    %410 = vector.load %arg10[%c0_251, %c0_252] : memref<128x256xbf16, #tpu.memory_space<vmem>>, vector<128x256xbf16>
    %cst_253 = arith.constant dense<0.000000e+00> : vector<16x256xf32>
    %411 = tpu.matmul %409, %410, %cst_253 {dimension_numbers = #tpu.dot_dimension_numbers<[1], [0], [0], [1], [0, 0, 1, 1], [], []>} : vector<16x128xbf16>, vector<128x256xbf16>, vector<16x256xf32> -> vector<16x256xf32>
    %c18 = arith.constant 18 : index
    %c0_254 = arith.constant 0 : index
    %412 = vector.load %arg15[%c18, %c0_254] : memref<32x256xf32, #tpu.memory_space<vmem>>, vector<1x256xf32>
    %413 = vector.broadcast %412 : vector<1x256xf32> to vector<16x256xf32>
    %414 = arith.mulf %411, %413 : vector<16x256xf32>
    %c19 = arith.constant 19 : index
    %c0_255 = arith.constant 0 : index
    %415 = vector.load %arg15[%c19, %c0_255] : memref<32x256xf32, #tpu.memory_space<vmem>>, vector<1x256xf32>
    %416 = vector.broadcast %415 : vector<1x256xf32> to vector<16x256xf32>
    %417 = arith.addf %414, %416 : vector<16x256xf32>
    %cst_256 = arith.constant 0.000000e+00 : f32
    %418 = vector.broadcast %cst_256 : f32 to vector<16x256xf32>
    %419 = arith.maximumf %417, %418 : vector<16x256xf32>
    %420 = tpu.iota {dimensions = array<i32: 0>} : vector<2x16xi32>
    %421 = tpu.iota {dimensions = array<i32: 1>} : vector<2x16xi32>
    %c8_i32_257 = arith.constant 8 : i32
    %422 = vector.broadcast %c8_i32_257 : i32 to vector<2x16xi32>
    %423 = arith.muli %420, %422 : vector<2x16xi32>
    %424 = arith.cmpi sge, %421, %423 : vector<2x16xi32>
    %c1_i32_258 = arith.constant 1 : i32
    %425 = vector.broadcast %c1_i32_258 : i32 to vector<2x16xi32>
    %426 = arith.addi %420, %425 : vector<2x16xi32>
    %c8_i32_259 = arith.constant 8 : i32
    %427 = vector.broadcast %c8_i32_259 : i32 to vector<2x16xi32>
    %428 = arith.muli %426, %427 : vector<2x16xi32>
    %429 = arith.cmpi slt, %421, %428 : vector<2x16xi32>
    %430 = arith.andi %424, %429 : vector<2x16xi1>
    %431 = arith.extui %430 : vector<2x16xi1> to vector<2x16xi32>
    %432 = arith.sitofp %431 : vector<2x16xi32> to vector<2x16xf32>
    %cst_260 = arith.constant 1.250000e-01 : f32
    %433 = vector.broadcast %cst_260 : f32 to vector<2x16xf32>
    %434 = arith.mulf %432, %433 : vector<2x16xf32>
    %cst_261 = arith.constant dense<0.000000e+00> : vector<2x256xf32>
    %435 = tpu.matmul %434, %419, %cst_261 {dimension_numbers = #tpu.dot_dimension_numbers<[1], [0], [0], [1], [0, 0, 1, 1], [], []>} : vector<2x16xf32>, vector<16x256xf32>, vector<2x256xf32> -> vector<2x256xf32>
    %c20 = arith.constant 20 : index
    %c0_262 = arith.constant 0 : index
    %436 = vector.load %arg15[%c20, %c0_262] : memref<32x256xf32, #tpu.memory_space<vmem>>, vector<1x128xf32>
    %c21 = arith.constant 21 : index
    %c0_263 = arith.constant 0 : index
    %437 = vector.load %arg15[%c21, %c0_263] : memref<32x256xf32, #tpu.memory_space<vmem>>, vector<1x128xf32>
    %c22 = arith.constant 22 : index
    %c0_264 = arith.constant 0 : index
    %438 = vector.load %arg15[%c22, %c0_264] : memref<32x256xf32, #tpu.memory_space<vmem>>, vector<1x128xf32>
    %c23 = arith.constant 23 : index
    %c0_265 = arith.constant 0 : index
    %439 = vector.load %arg15[%c23, %c0_265] : memref<32x256xf32, #tpu.memory_space<vmem>>, vector<1x8xf32>
    %c24 = arith.constant 24 : index
    %c0_266 = arith.constant 0 : index
    %440 = vector.load %arg15[%c24, %c0_266] : memref<32x256xf32, #tpu.memory_space<vmem>>, vector<1x256xf32>
    %c25 = arith.constant 25 : index
    %c0_267 = arith.constant 0 : index
    %441 = vector.load %arg15[%c25, %c0_267] : memref<32x256xf32, #tpu.memory_space<vmem>>, vector<1x4xf32>
    %c0_268 = arith.constant 0 : index
    %c0_269 = arith.constant 0 : index
    %442 = vector.load %arg11[%c0_268, %c0_269] : memref<256x128xf32, #tpu.memory_space<vmem>>, vector<256x128xf32>
    %cst_270 = arith.constant dense<0.000000e+00> : vector<2x128xf32>
    %443 = tpu.matmul %435, %442, %cst_270 {dimension_numbers = #tpu.dot_dimension_numbers<[1], [0], [0], [1], [0, 0, 1, 1], [], []>} : vector<2x256xf32>, vector<256x128xf32>, vector<2x128xf32> -> vector<2x128xf32>
    %444 = vector.broadcast %436 : vector<1x128xf32> to vector<2x128xf32>
    %445 = arith.addf %443, %444 : vector<2x128xf32>
    %446 = vector.broadcast %437 : vector<1x128xf32> to vector<2x128xf32>
    %447 = arith.mulf %445, %446 : vector<2x128xf32>
    %448 = vector.broadcast %438 : vector<1x128xf32> to vector<2x128xf32>
    %449 = arith.addf %447, %448 : vector<2x128xf32>
    %cst_271 = arith.constant 0.000000e+00 : f32
    %450 = vector.broadcast %cst_271 : f32 to vector<2x128xf32>
    %451 = arith.maximumf %449, %450 : vector<2x128xf32>
    %c0_272 = arith.constant 0 : index
    %c0_273 = arith.constant 0 : index
    %452 = vector.load %arg12[%c0_272, %c0_273] : memref<128x8xf32, #tpu.memory_space<vmem>>, vector<128x8xf32>
    %cst_274 = arith.constant dense<0.000000e+00> : vector<2x8xf32>
    %453 = tpu.matmul %451, %452, %cst_274 {dimension_numbers = #tpu.dot_dimension_numbers<[1], [0], [0], [1], [0, 0, 1, 1], [], []>} : vector<2x128xf32>, vector<128x8xf32>, vector<2x8xf32> -> vector<2x8xf32>
    %454 = vector.broadcast %439 : vector<1x8xf32> to vector<2x8xf32>
    %455 = arith.addf %453, %454 : vector<2x8xf32>
    %c0_275 = arith.constant 0 : index
    %c0_276 = arith.constant 0 : index
    %456 = vector.load %arg16[%c0_275, %c0_276] : memref<2x8xf32, #tpu.memory_space<vmem>>, vector<2x8xf32>
    tpu.vector_store %arg16[%c0_275, %c0_276], %455 {strides = array<i32>} : memref<2x8xf32, #tpu.memory_space<vmem>>, vector<2x8xf32>,
    %c0_277 = arith.constant 0 : index
    %c0_278 = arith.constant 0 : index
    %457 = vector.load %arg13[%c0_277, %c0_278] : memref<8x256xf32, #tpu.memory_space<vmem>>, vector<8x256xf32>
    %cst_279 = arith.constant dense<0.000000e+00> : vector<2x256xf32>
    %458 = tpu.matmul %455, %457, %cst_279 {dimension_numbers = #tpu.dot_dimension_numbers<[1], [0], [0], [1], [0, 0, 1, 1], [], []>} : vector<2x8xf32>, vector<8x256xf32>, vector<2x256xf32> -> vector<2x256xf32>
    %459 = vector.broadcast %440 : vector<1x256xf32> to vector<2x256xf32>
    %460 = arith.addf %458, %459 : vector<2x256xf32>
    %cst_280 = arith.constant 0.000000e+00 : f32
    %461 = vector.broadcast %cst_280 : f32 to vector<2x256xf32>
    %462 = arith.maximumf %460, %461 : vector<2x256xf32>
    %c0_281 = arith.constant 0 : index
    %c0_282 = arith.constant 0 : index
    %463 = vector.load %arg14[%c0_281, %c0_282] : memref<256x4xf32, #tpu.memory_space<vmem>>, vector<256x4xf32>
    %cst_283 = arith.constant dense<0.000000e+00> : vector<2x4xf32>
    %464 = tpu.matmul %462, %463, %cst_283 {dimension_numbers = #tpu.dot_dimension_numbers<[1], [0], [0], [1], [0, 0, 1, 1], [], []>} : vector<2x256xf32>, vector<256x4xf32>, vector<2x4xf32> -> vector<2x4xf32>
    %465 = vector.broadcast %441 : vector<1x4xf32> to vector<2x4xf32>
    %466 = arith.addf %464, %465 : vector<2x4xf32>
    %c0_284 = arith.constant 0 : index
    %c0_285 = arith.constant 0 : index
    %467 = vector.load %arg17[%c0_284, %c0_285] : memref<2x4xf32, #tpu.memory_space<vmem>>, vector<2x4xf32>
    tpu.vector_store %arg17[%c0_284, %c0_285], %466 {strides = array<i32>} : memref<2x4xf32, #tpu.memory_space<vmem>>, vector<2x4xf32>,
    return
  }
}

</mosaic_0001>

<llo_original>
// kernel: ecg_concept_cbm_forward.1
$region0: #{ecg_concept_cbm_forward.1}
  #allocation0 [shape = 'u32[]', space=smem, size = 0x4, offset = 0x4, fixed_abs, tag = 'smem constant byte address 0x4 - core index']
  #allocation1 [shape = 'u32[72,128]{1,0:T(1,128)}', space=vmem, size = 0x9000, scoped, tag = 'internal scratch']
  #allocation2 [shape = 'f32[144,32]{1,0:T(8,128)}', space=vmem, size = 0x12000, scoped, tag = 'scratch operand']
  #allocation3 [shape = 'f32[80,64]{1,0:T(8,128)}', space=vmem, size = 0xa000, scoped, tag = 'scratch operand']
  #allocation4 [shape = 'f32[48,128]{1,0:T(8,128)}', space=vmem, size = 0x6000, scoped, tag = 'scratch operand']
  %s0 = inlined_call_operand.vmem [shape: bf16[128,8], index: 0, kind: input, shape index: {}]
  %s1 = inlined_call_operand.vmem [shape: bf16[8,32], index: 1, kind: input, shape index: {}]
  %s2 = inlined_call_operand.vmem [shape: bf16[96,32], index: 2, kind: input, shape index: {}]
  %s3 = inlined_call_operand.vmem [shape: bf16[96,32], index: 3, kind: input, shape index: {}]
  %s4 = inlined_call_operand.vmem [shape: bf16[160,64], index: 4, kind: input, shape index: {}]
  %s5 = inlined_call_operand.vmem [shape: bf16[192,64], index: 5, kind: input, shape index: {}]
  %s6 = inlined_call_operand.vmem [shape: bf16[192,64], index: 6, kind: input, shape index: {}]
  %s7 = inlined_call_operand.vmem [shape: bf16[320,128], index: 7, kind: input, shape index: {}]
  %s8 = inlined_call_operand.vmem [shape: bf16[384,128], index: 8, kind: input, shape index: {}]
  %s9 = inlined_call_operand.vmem [shape: bf16[384,128], index: 9, kind: input, shape index: {}]
  %s10 = inlined_call_operand.vmem [shape: bf16[128,256], index: 10, kind: input, shape index: {}]
  %s11 = inlined_call_operand.vmem [shape: f32[256,128], index: 11, kind: input, shape index: {}]
  %s12 = inlined_call_operand.vmem [shape: f32[128,8], index: 12, kind: input, shape index: {}]
  %s13 = inlined_call_operand.vmem [shape: f32[8,256], index: 13, kind: input, shape index: {}]
  %s14 = inlined_call_operand.vmem [shape: f32[256,4], index: 14, kind: input, shape index: {}]
  %s15 = inlined_call_operand.vmem [shape: f32[32,256], index: 15, kind: input, shape index: {}]
  %s16 = inlined_call_operand.hbm [shape: f32[2,8], index: 16, kind: output, shape index: {0}]
  %s17 = inlined_call_operand.hbm [shape: f32[2,4], index: 17, kind: output, shape index: {1}]
  %18 = xla_tuple %s16, %s17
  %s19 = sld [smem:[#allocation0]]
  $region82: #{ecg_concept_cbm_forward.1} parent=0
    _
  %s21 = ssub.s32 1, %s19
  %s22 = scalar_select 0, %s21, %s19
  $region1: #{ecg_concept_cbm_forward.1} parent=0
    #allocation5 [shape = 'u8[1024]{0}', space=vmem, size = 0x400, scoped, tag = 'output window, operand 0, single buffered']
    #allocation6 [shape = 's32[1]{0}', space=sflag, size = 0x4, scoped, tag = 'scoped memory for ecg_concept_cbm_forward.1']
    #allocation7 [shape = 'u8[1024]{0}', space=vmem, size = 0x400, scoped, tag = 'output window, operand 1, single buffered']
    #allocation8 [shape = 's32[1]{0}', space=sflag, size = 0x4, scoped, tag = 'scoped memory for ecg_concept_cbm_forward.1']
    %23 = vsyncpa [#allocation6], 0
    %24 = vsyncpa [#allocation8], 0
    // Predicated region
    $region2: #{ecg_concept_cbm_forward.1} parent=1 // pred_check
      _
    $region3: #{ecg_concept_cbm_forward.1} parent=1 // pred_check_branch
      %26 = sbr.rel (0) target = $region5
    $region4: #{ecg_concept_cbm_forward.1} parent=1 // pred_region
      _
    $region5: #{ecg_concept_cbm_forward.1} parent=1 // pred_fallthru
      _
    // Predicated region
    $region6: #{ecg_concept_cbm_forward.1} parent=1 // pred_check
      _
    $region7: #{ecg_concept_cbm_forward.1} parent=1 // pred_check_branch
      %28 = sbr.rel (0) target = $region9
    $region8: #{ecg_concept_cbm_forward.1} parent=1 // pred_region
      _
    $region9: #{ecg_concept_cbm_forward.1} parent=1 // pred_fallthru
      _
    // Predicated region
    $region10: #{ecg_concept_cbm_forward.1} parent=1 // pred_check
      _
    $region11: #{ecg_concept_cbm_forward.1} parent=1 // pred_check_branch
      %30 = sbr.rel (0) target = $region13
    $region12: #{ecg_concept_cbm_forward.1} parent=1 // pred_region
      _
    $region13: #{ecg_concept_cbm_forward.1} parent=1 // pred_fallthru
      _
    // Predicated region
    $region14: #{ecg_concept_cbm_forward.1} parent=1 // pred_check
      _
    $region15: #{ecg_concept_cbm_forward.1} parent=1 // pred_check_branch
      %32 = sbr.rel (0) target = $region17
    $region16: #{ecg_concept_cbm_forward.1} parent=1 // pred_region
      _
    $region17: #{ecg_concept_cbm_forward.1} parent=1 // pred_fallthru
      _
    // Predicated region
    $region18: #{ecg_concept_cbm_forward.1} parent=1 // pred_check
      _
    $region19: #{ecg_concept_cbm_forward.1} parent=1 // pred_check_branch
      %34 = sbr.rel (0) target = $region21
    $region20: #{ecg_concept_cbm_forward.1} parent=1 // pred_region
      _
    $region21: #{ecg_concept_cbm_forward.1} parent=1 // pred_fallthru
      _
    // Predicated region
    $region22: #{ecg_concept_cbm_forward.1} parent=1 // pred_check
      _
    $region23: #{ecg_concept_cbm_forward.1} parent=1 // pred_check_branch
      %36 = sbr.rel (0) target = $region25
    $region24: #{ecg_concept_cbm_forward.1} parent=1 // pred_region
      _
    $region25: #{ecg_concept_cbm_forward.1} parent=1 // pred_fallthru
      _
    // Predicated region
    $region26: #{ecg_concept_cbm_forward.1} parent=1 // pred_check
      _
    $region27: #{ecg_concept_cbm_forward.1} parent=1 // pred_check_branch
      %38 = sbr.rel (0) target = $region29
    $region28: #{ecg_concept_cbm_forward.1} parent=1 // pred_region
      _
    $region29: #{ecg_concept_cbm_forward.1} parent=1 // pred_fallthru
      _
    // Predicated region
    $region30: #{ecg_concept_cbm_forward.1} parent=1 // pred_check
      _
    $region31: #{ecg_concept_cbm_forward.1} parent=1 // pred_check_branch
      %40 = sbr.rel (0) target = $region33
    $region32: #{ecg_concept_cbm_forward.1} parent=1 // pred_region
      _
    $region33: #{ecg_concept_cbm_forward.1} parent=1 // pred_fallthru
      _
    // Predicated region
    $region34: #{ecg_concept_cbm_forward.1} parent=1 // pred_check
      _
    $region35: #{ecg_concept_cbm_forward.1} parent=1 // pred_check_branch
      %42 = sbr.rel (0) target = $region37
    $region36: #{ecg_concept_cbm_forward.1} parent=1 // pred_region
      _
    $region37: #{ecg_concept_cbm_forward.1} parent=1 // pred_fallthru
      _
    // Predicated region
    $region38: #{ecg_concept_cbm_forward.1} parent=1 // pred_check
      _
    $region39: #{ecg_concept_cbm_forward.1} parent=1 // pred_check_branch
      %44 = sbr.rel (0) target = $region41
    $region40: #{ecg_concept_cbm_forward.1} parent=1 // pred_region
      _
    $region41: #{ecg_concept_cbm_forward.1} parent=1 // pred_fallthru
      _
    // Predicated region
    $region42: #{ecg_concept_cbm_forward.1} parent=1 // pred_check
      _
    $region43: #{ecg_concept_cbm_forward.1} parent=1 // pred_check_branch
      %46 = sbr.rel (0) target = $region45
    $region44: #{ecg_concept_cbm_forward.1} parent=1 // pred_region
      _
    $region45: #{ecg_concept_cbm_forward.1} parent=1 // pred_fallthru
      _
    // Predicated region
    $region46: #{ecg_concept_cbm_forward.1} parent=1 // pred_check
      _
    $region47: #{ecg_concept_cbm_forward.1} parent=1 // pred_check_branch
      %48 = sbr.rel (0) target = $region49
    $region48: #{ecg_concept_cbm_forward.1} parent=1 // pred_region
      _
    $region49: #{ecg_concept_cbm_forward.1} parent=1 // pred_fallthru
      _
    // Predicated region
    $region50: #{ecg_concept_cbm_forward.1} parent=1 // pred_check
      _
    $region51: #{ecg_concept_cbm_forward.1} parent=1 // pred_check_branch
      %50 = sbr.rel (0) target = $region53
    $region52: #{ecg_concept_cbm_forward.1} parent=1 // pred_region
      _
    $region53: #{ecg_concept_cbm_forward.1} parent=1 // pred_fallthru
      _
    // Predicated region
    $region54: #{ecg_concept_cbm_forward.1} parent=1 // pred_check
      _
    $region55: #{ecg_concept_cbm_forward.1} parent=1 // pred_check_branch
      %52 = sbr.rel (0) target = $region57
    $region56: #{ecg_concept_cbm_forward.1} parent=1 // pred_region
      _
    $region57: #{ecg_concept_cbm_forward.1} parent=1 // pred_fallthru
      _
    // Predicated region
    $region58: #{ecg_concept_cbm_forward.1} parent=1 // pred_check
      _
    $region59: #{ecg_concept_cbm_forward.1} parent=1 // pred_check_branch
      %54 = sbr.rel (0) target = $region61
    $region60: #{ecg_concept_cbm_forward.1} parent=1 // pred_region
      _
    $region61: #{ecg_concept_cbm_forward.1} parent=1 // pred_fallthru
      _
    // Predicated region
    $region62: #{ecg_concept_cbm_forward.1} parent=1 // pred_check
      _
    $region63: #{ecg_concept_cbm_forward.1} parent=1 // pred_check_branch
      %56 = sbr.rel (0) target = $region65
    $region64: #{ecg_concept_cbm_forward.1} parent=1 // pred_region
      _
    $region65: #{ecg_concept_cbm_forward.1} parent=1 // pred_fallthru
      _
    %v58 = vld [vmem:[%s0] sm:$0xf]
    %v59 = vld [vmem:[%s0 + $0x4] sm:$0xf]
    %v60 = vld [vmem:[%s0 + $0x8] sm:$0xf]
    %v61 = vld [vmem:[%s0 + $0xc] sm:$0xf]
    %v62 = vld [vmem:[%s0 + $0x10] sm:$0xf]
    %v63 = vld [vmem:[%s0 + $0x14] sm:$0xf]
    %v64 = vld [vmem:[%s0 + $0x18] sm:$0xf]
    %v65 = vld [vmem:[%s0 + $0x1c] sm:$0xf]
    %v66 = vld [vmem:[%s0 + $0x20] sm:$0xf]
    %v67 = vld [vmem:[%s0 + $0x24] sm:$0xf]
    %v68 = vld [vmem:[%s0 + $0x28] sm:$0xf]
    %v69 = vld [vmem:[%s0 + $0x2c] sm:$0xf]
    %v70 = vld [vmem:[%s0 + $0x30] sm:$0xf]
    %v71 = vld [vmem:[%s0 + $0x34] sm:$0xf]
    %v72 = vld [vmem:[%s0 + $0x38] sm:$0xf]
    %v73 = vld [vmem:[%s0 + $0x3c] sm:$0xf]
    %v74 = vld [vmem:[%s1] sm:$0xf]
    %v91 = vunpack.c.l.b16 %v58
    %v92 = vunpack.c.l.b16 %v59
    %v93 = vunpack.c.l.b16 %v60
    %v94 = vunpack.c.l.b16 %v61
    %v95 = vunpack.c.l.b16 %v62
    %v96 = vunpack.c.l.b16 %v63
    %v97 = vunpack.c.l.b16 %v64
    %v98 = vunpack.c.l.b16 %v65
    %v99 = vunpack.c.l.b16 %v66
    %v100 = vunpack.c.l.b16 %v67
    %v101 = vunpack.c.l.b16 %v68
    %v102 = vunpack.c.l.b16 %v69
    %v103 = vunpack.c.l.b16 %v70
    %v104 = vunpack.c.l.b16 %v71
    %v105 = vunpack.c.l.b16 %v72
    %v106 = vunpack.c.l.b16 %v73
    %v107 = vpack.c.b16 %v92, %v91
    %v108 = vpack.c.b16 %v94, %v93
    %v109 = vpack.c.b16 %v96, %v95
    %v110 = vpack.c.b16 %v98, %v97
    %v111 = vpack.c.b16 %v100, %v99
    %v112 = vpack.c.b16 %v102, %v101
    %v113 = vpack.c.b16 %v104, %v103
    %v114 = vpack.c.b16 %v106, %v105
    %vm115 = vcmask 64512
    %v117 = vsel %vm115, %v107, 0
    %v120 = vsel %vm115, %v108, 0
    %v123 = vsel %vm115, %v109, 0
    %v126 = vsel %vm115, %v110, 0
    %v129 = vsel %vm115, %v111, 0
    %v132 = vsel %vm115, %v112, 0
    %v135 = vsel %vm115, %v113, 0
    %v138 = vsel %vm115, %v114, 0
    %vm140 = vcmask 1043456
    %v142 = vsel %vm140, %v74, 0
    %144 = vmatpush.bf16.msra.mxu0 0
    %145 = vmatpush.bf16.msra.mxu0 0
    %146 = vmatpush.bf16.msra.mxu0 0
    %147 = vmatpush.bf16.msra.mxu0 0
    %148 = vmatpush.bf16.msra.mxu0 0
    %149 = vmatpush.bf16.msra.mxu0 0
    %150 = vmatpush.bf16.msra.mxu0 0
    %151 = vmatpush.bf16.msra.mxu0 %v142
    %152 = vmatmul.bf16.gmra.mxu0 %v117
    %v153 = vpop.f32.mrf.mxu0
    %v154 = vadd.f32 0.0, %v153
    %v155 = vpop.f32.mrf.mxu0
    %v156 = vadd.f32 0.0, %v155
    %157 = vmatmul.bf16.gmra.mxu0 %v120
    %v158 = vpop.f32.mrf.mxu0
    %v159 = vadd.f32 0.0, %v158
    %v160 = vpop.f32.mrf.mxu0
    %v161 = vadd.f32 0.0, %v160
    %162 = vmatmul.bf16.gmra.mxu0 %v123
    %v163 = vpop.f32.mrf.mxu0
    %v164 = vadd.f32 0.0, %v163
    %v165 = vpop.f32.mrf.mxu0
    %v166 = vadd.f32 0.0, %v165
    %167 = vmatmul.bf16.gmra.mxu0 %v126
    %v168 = vpop.f32.mrf.mxu0
    %v169 = vadd.f32 0.0, %v168
    %v170 = vpop.f32.mrf.mxu0
    %v171 = vadd.f32 0.0, %v170
    %172 = vmatmul.bf16.gmra.mxu0 %v129
    %v173 = vpop.f32.mrf.mxu0
    %v174 = vadd.f32 0.0, %v173
    %v175 = vpop.f32.mrf.mxu0
    %v176 = vadd.f32 0.0, %v175
    %177 = vmatmul.bf16.gmra.mxu0 %v132
    %v178 = vpop.f32.mrf.mxu0
    %v179 = vadd.f32 0.0, %v178
    %v180 = vpop.f32.mrf.mxu0
    %v181 = vadd.f32 0.0, %v180
    %182 = vmatmul.bf16.gmra.mxu0 %v135
    %v183 = vpop.f32.mrf.mxu0
    %v184 = vadd.f32 0.0, %v183
    %v185 = vpop.f32.mrf.mxu0
    %v186 = vadd.f32 0.0, %v185
    %187 = vmatmul.bf16.gmra.mxu0 %v138
    %v188 = vpop.f32.mrf.mxu0
    %v189 = vadd.f32 0.0, %v188
    %v190 = vpop.f32.mrf.mxu0
    %v191 = vadd.f32 0.0, %v190
    %192 = vdwg.mxu0
    %v193 = vld [vmem:[%s15] ss:$0 sm:$0xff]
    %v194 = vmul.f32 %v154, %v193
    %v195 = vmul.f32 %v156, %v193
    %v196 = vmul.f32 %v159, %v193
    %v197 = vmul.f32 %v161, %v193
    %v198 = vmul.f32 %v164, %v193
    %v199 = vmul.f32 %v166, %v193
    %v200 = vmul.f32 %v169, %v193
    %v201 = vmul.f32 %v171, %v193
    %v202 = vmul.f32 %v174, %v193
    %v203 = vmul.f32 %v176, %v193
    %v204 = vmul.f32 %v179, %v193
    %v205 = vmul.f32 %v181, %v193
    %v206 = vmul.f32 %v184, %v193
    %v207 = vmul.f32 %v186, %v193
    %v208 = vmul.f32 %v189, %v193
    %v209 = vmul.f32 %v191, %v193
    %v210 = vld [vmem:[%s15 + $0x1] ss:$0 sm:$0xff]
    %v211 = vadd.f32 %v194, %v210
    %v212 = vadd.f32 %v195, %v210
    %v213 = vadd.f32 %v196, %v210
    %v214 = vadd.f32 %v197, %v210
    %v215 = vadd.f32 %v198, %v210
    %v216 = vadd.f32 %v199, %v210
    %v217 = vadd.f32 %v200, %v210
    %v218 = vadd.f32 %v201, %v210
    %v219 = vadd.f32 %v202, %v210
    %v220 = vadd.f32 %v203, %v210
    %v221 = vadd.f32 %v204, %v210
    %v222 = vadd.f32 %v205, %v210
    %v223 = vadd.f32 %v206, %v210
    %v224 = vadd.f32 %v207, %v210
    %v225 = vadd.f32 %v208, %v210
    %v226 = vadd.f32 %v209, %v210
    %v227 = vmax.f32 %v211, 0.0
    %v228 = vmax.f32 %v212, 0.0
    %v229 = vmax.f32 %v213, 0.0
    %v230 = vmax.f32 %v214, 0.0
    %v231 = vmax.f32 %v215, 0.0
    %v232 = vmax.f32 %v216, 0.0
    %v233 = vmax.f32 %v217, 0.0
    %v234 = vmax.f32 %v218, 0.0
    %v235 = vmax.f32 %v219, 0.0
    %v236 = vmax.f32 %v220, 0.0
    %v237 = vmax.f32 %v221, 0.0
    %v238 = vmax.f32 %v222, 0.0
    %v239 = vmax.f32 %v223, 0.0
    %v240 = vmax.f32 %v224, 0.0
    %v241 = vmax.f32 %v225, 0.0
    %v242 = vmax.f32 %v226, 0.0
    %vm243 = vcmask 261120
    %244 = vst.msk [vmem:[#allocation2 + $0x8] sm:$0xff] %vm243, %v227
    %245 = vst.msk [vmem:[#allocation2 + $0x10] sm:$0xff] %vm243, %v228
    %246 = vst.msk [vmem:[#allocation2 + $0x18] sm:$0xff] %vm243, %v229
    %247 = vst.msk [vmem:[#allocation2 + $0x20] sm:$0xff] %vm243, %v230
    %248 = vst.msk [vmem:[#allocation2 + $0x28] sm:$0xff] %vm243, %v231
    %249 = vst.msk [vmem:[#allocation2 + $0x30] sm:$0xff] %vm243, %v232
    %250 = vst.msk [vmem:[#allocation2 + $0x38] sm:$0xff] %vm243, %v233
    %251 = vst.msk [vmem:[#allocation2 + $0x40] sm:$0xff] %vm243, %v234
    %252 = vst.msk [vmem:[#allocation2 + $0x48] sm:$0xff] %vm243, %v235
    %253 = vst.msk [vmem:[#allocation2 + $0x50] sm:$0xff] %vm243, %v236
    %254 = vst.msk [vmem:[#allocation2 + $0x58] sm:$0xff] %vm243, %v237
    %255 = vst.msk [vmem:[#allocation2 + $0x60] sm:$0xff] %vm243, %v238
    %256 = vst.msk [vmem:[#allocation2 + $0x68] sm:$0xff] %vm243, %v239
    %257 = vst.msk [vmem:[#allocation2 + $0x70] sm:$0xff] %vm243, %v240
    %258 = vst.msk [vmem:[#allocation2 + $0x78] sm:$0xff] %vm243, %v241
    %259 = vst.msk [vmem:[#allocation2 + $0x80] sm:$0xff] %vm243, %v242
    %s260 = scalar_lea.vmem [#allocation2], 8
    %v261 = vld [vmem:[%s260] ss:$2 sm:$0xff]
    %s262 = scalar_lea.vmem [#allocation2], 24
    %v263 = vld [vmem:[%s262] ss:$2 sm:$0xff]
    %s264 = scalar_lea.vmem [#allocation2], 40
    %v265 = vld [vmem:[%s264] ss:$2 sm:$0xff]
    %s266 = scalar_lea.vmem [#allocation2], 56
    %v267 = vld [vmem:[%s266] ss:$2 sm:$0xff]
    %s268 = scalar_lea.vmem [#allocation2], 72
    %v269 = vld [vmem:[%s268] ss:$2 sm:$0xff]
    %s270 = scalar_lea.vmem [#allocation2], 88
    %v271 = vld [vmem:[%s270] ss:$2 sm:$0xff]
    %s272 = scalar_lea.vmem [#allocation2], 104
    %v273 = vld [vmem:[%s272] ss:$2 sm:$0xff]
    %s274 = scalar_lea.vmem [#allocation2], 120
    %v275 = vld [vmem:[%s274] ss:$2 sm:$0xff]
    %s276 = scalar_lea.vmem [#allocation2], 9
    %v277 = vld [vmem:[%s276] ss:$2 sm:$0xff]
    %s278 = scalar_lea.vmem [#allocation2], 25
    %v279 = vld [vmem:[%s278] ss:$2 sm:$0xff]
    %s280 = scalar_lea.vmem [#allocation2], 41
    %v281 = vld [vmem:[%s280] ss:$2 sm:$0xff]
    %s282 = scalar_lea.vmem [#allocation2], 57
    %v283 = vld [vmem:[%s282] ss:$2 sm:$0xff]
    %s284 = scalar_lea.vmem [#allocation2], 73
    %v285 = vld [vmem:[%s284] ss:$2 sm:$0xff]
    %s286 = scalar_lea.vmem [#allocation2], 89
    %v287 = vld [vmem:[%s286] ss:$2 sm:$0xff]
    %s288 = scalar_lea.vmem [#allocation2], 105
    %v289 = vld [vmem:[%s288] ss:$2 sm:$0xff]
    %s290 = scalar_lea.vmem [#allocation2], 121
    %v291 = vld [vmem:[%s290] ss:$2 sm:$0xff]
    %v292 = vmax.f32 %v261, %v277
    %v293 = vmax.f32 %v263, %v279
    %v294 = vmax.f32 %v265, %v281
    %v295 = vmax.f32 %v267, %v283
    %v296 = vmax.f32 %v269, %v285
    %v297 = vmax.f32 %v271, %v287
    %v298 = vmax.f32 %v273, %v289
    %v299 = vmax.f32 %v275, %v291
    %v300 = vlaneseq
    %v301 = vshrl.u32 %v300, 7
    %v302 = vadd.s32 %v301, 8
    %v303 = vadd.s32 %v301, 16
    %v304 = vadd.s32 %v301, 24
    %v305 = vadd.s32 %v301, 32
    %v306 = vadd.s32 %v301, 40
    %v307 = vadd.s32 %v301, 48
    %v308 = vadd.s32 %v301, 56
    %v309 = vand.u32 %v301, 31
    %v310 = vand.u32 %v302, 31
    %v311 = vand.u32 %v303, 31
    %v312 = vand.u32 %v304, 31
    %v313 = vand.u32 %v305, 31
    %v314 = vand.u32 %v306, 31
    %v315 = vand.u32 %v307, 31
    %v316 = vand.u32 %v308, 31
    %v317 = vadd.s32 %v309, 4294967294
    %v318 = vadd.s32 %v310, 4294967294
    %v319 = vadd.s32 %v311, 4294967294
    %v320 = vadd.s32 %v312, 4294967294
    %v321 = vadd.s32 %v313, 4294967294
    %v322 = vadd.s32 %v314, 4294967294
    %v323 = vadd.s32 %v315, 4294967294
    %v324 = vadd.s32 %v316, 4294967294
    %vm325 = vcmp.ge.s32.totalorder %v317, 0
    %vm326 = vcmp.ge.s32.totalorder %v318, 0
    %vm327 = vcmp.ge.s32.totalorder %v319, 0
    %vm328 = vcmp.ge.s32.totalorder %v320, 0
    %vm329 = vcmp.ge.s32.totalorder %v321, 0
    %vm330 = vcmp.ge.s32.totalorder %v322, 0
    %vm331 = vcmp.ge.s32.totalorder %v323, 0
    %vm332 = vcmp.ge.s32.totalorder %v324, 0
    %vm333 = vcmp.lt.s32.totalorder %v317, 32
    %vm334 = vcmp.lt.s32.totalorder %v318, 32
    %vm335 = vcmp.lt.s32.totalorder %v319, 32
    %vm336 = vcmp.lt.s32.totalorder %v320, 32
    %vm337 = vcmp.lt.s32.totalorder %v321, 32
    %vm338 = vcmp.lt.s32.totalorder %v322, 32
    %vm339 = vcmp.lt.s32.totalorder %v323, 32
    %vm340 = vcmp.lt.s32.totalorder %v324, 32
    %vm341 = vmand %vm325, %vm333
    %vm342 = vmand %vm326, %vm334
    %vm343 = vmand %vm327, %vm335
    %vm344 = vmand %vm328, %vm336
    %vm345 = vmand %vm329, %vm337
    %vm346 = vmand %vm330, %vm338
    %vm347 = vmand %vm331, %vm339
    %vm348 = vmand %vm332, %vm340
    %v349 = vadd.s32 %v309, 4294967295
    %v350 = vadd.s32 %v310, 4294967295
    %v351 = vadd.s32 %v311, 4294967295
    %v352 = vadd.s32 %v312, 4294967295
    %v353 = vadd.s32 %v313, 4294967295
    %v354 = vadd.s32 %v314, 4294967295
    %v355 = vadd.s32 %v315, 4294967295
    %v356 = vadd.s32 %v316, 4294967295
    %vm357 = vcmp.ge.s32.totalorder %v349, 0
    %vm358 = vcmp.ge.s32.totalorder %v350, 0
    %vm359 = vcmp.ge.s32.totalorder %v351, 0
    %vm360 = vcmp.ge.s32.totalorder %v352, 0
    %vm361 = vcmp.ge.s32.totalorder %v353, 0
    %vm362 = vcmp.ge.s32.totalorder %v354, 0
    %vm363 = vcmp.ge.s32.totalorder %v355, 0
    %vm364 = vcmp.ge.s32.totalorder %v356, 0
    %vm365 = vcmp.lt.s32.totalorder %v349, 32
    %vm366 = vcmp.lt.s32.totalorder %v350, 32
    %vm367 = vcmp.lt.s32.totalorder %v351, 32
    %vm368 = vcmp.lt.s32.totalorder %v352, 32
    %vm369 = vcmp.lt.s32.totalorder %v353, 32
    %vm370 = vcmp.lt.s32.totalorder %v354, 32
    %vm371 = vcmp.lt.s32.totalorder %v355, 32
    %vm372 = vcmp.lt.s32.totalorder %v356, 32
    %vm373 = vmand %vm357, %vm365
    %vm374 = vmand %vm358, %vm366
    %vm375 = vmand %vm359, %vm367
    %vm376 = vmand %vm360, %vm368
    %vm377 = vmand %vm361, %vm369
    %vm378 = vmand %vm362, %vm370
    %vm379 = vmand %vm363, %vm371
    %vm380 = vmand %vm364, %vm372
    %v381 = vadd.s32 %v309, 1
    %v382 = vadd.s32 %v310, 1
    %v383 = vadd.s32 %v311, 1
    %v384 = vadd.s32 %v312, 1
    %v385 = vadd.s32 %v313, 1
    %v386 = vadd.s32 %v314, 1
    %v387 = vadd.s32 %v315, 1
    %v388 = vadd.s32 %v316, 1
    %vm389 = vcmp.ge.s32.totalorder %v381, 0
    %vm390 = vcmp.ge.s32.totalorder %v382, 0
    %vm391 = vcmp.ge.s32.totalorder %v383, 0
    %vm392 = vcmp.ge.s32.totalorder %v384, 0
    %vm393 = vcmp.ge.s32.totalorder %v385, 0
    %vm394 = vcmp.ge.s32.totalorder %v386, 0
    %vm395 = vcmp.ge.s32.totalorder %v387, 0
    %vm396 = vcmp.ge.s32.totalorder %v388, 0
    %vm397 = vcmp.lt.s32.totalorder %v381, 32
    %vm398 = vcmp.lt.s32.totalorder %v382, 32
    %vm399 = vcmp.lt.s32.totalorder %v383, 32
    %vm400 = vcmp.lt.s32.totalorder %v384, 32
    %vm401 = vcmp.lt.s32.totalorder %v385, 32
    %vm402 = vcmp.lt.s32.totalorder %v386, 32
    %vm403 = vcmp.lt.s32.totalorder %v387, 32
    %vm404 = vcmp.lt.s32.totalorder %v388, 32
    %vm405 = vmand %vm389, %vm397
    %vm406 = vmand %vm390, %vm398
    %vm407 = vmand %vm391, %vm399
    %vm408 = vmand %vm392, %vm400
    %vm409 = vmand %vm393, %vm401
    %vm410 = vmand %vm394, %vm402
    %vm411 = vmand %vm395, %vm403
    %vm412 = vmand %vm396, %vm404
    %v413 = vadd.s32 %v309, 2
    %v414 = vadd.s32 %v310, 2
    %v415 = vadd.s32 %v311, 2
    %v416 = vadd.s32 %v312, 2
    %v417 = vadd.s32 %v313, 2
    %v418 = vadd.s32 %v314, 2
    %v419 = vadd.s32 %v315, 2
    %v420 = vadd.s32 %v316, 2
    %vm421 = vcmp.ge.s32.totalorder %v413, 0
    %vm422 = vcmp.ge.s32.totalorder %v414, 0
    %vm423 = vcmp.ge.s32.totalorder %v415, 0
    %vm424 = vcmp.ge.s32.totalorder %v416, 0
    %vm425 = vcmp.ge.s32.totalorder %v417, 0
    %vm426 = vcmp.ge.s32.totalorder %v418, 0
    %vm427 = vcmp.ge.s32.totalorder %v419, 0
    %vm428 = vcmp.ge.s32.totalorder %v420, 0
    %vm429 = vcmp.lt.s32.totalorder %v413, 32
    %vm430 = vcmp.lt.s32.totalorder %v414, 32
    %vm431 = vcmp.lt.s32.totalorder %v415, 32
    %vm432 = vcmp.lt.s32.totalorder %v416, 32
    %vm433 = vcmp.lt.s32.totalorder %v417, 32
    %vm434 = vcmp.lt.s32.totalorder %v418, 32
    %vm435 = vcmp.lt.s32.totalorder %v419, 32
    %vm436 = vcmp.lt.s32.totalorder %v420, 32
    %vm437 = vmand %vm421, %vm429
    %vm438 = vmand %vm422, %vm430
    %vm439 = vmand %vm423, %vm431
    %vm440 = vmand %vm424, %vm432
    %vm441 = vmand %vm425, %vm433
    %vm442 = vmand %vm426, %vm434
    %vm443 = vmand %vm427, %vm435
    %vm444 = vmand %vm428, %vm436
    %445 = vst.msk [vmem:[#allocation2 + $0x8] sm:$0xff] %vm243, %v292
    %446 = vst.msk [vmem:[#allocation2 + $0x10] sm:$0xff] %vm243, %v293
    %447 = vst.msk [vmem:[#allocation2 + $0x18] sm:$0xff] %vm243, %v294
    %448 = vst.msk [vmem:[#allocation2 + $0x20] sm:$0xff] %vm243, %v295
    %449 = vst.msk [vmem:[#allocation2 + $0x28] sm:$0xff] %vm243, %v296
    %450 = vst.msk [vmem:[#allocation2 + $0x30] sm:$0xff] %vm243, %v297
    %451 = vst.msk [vmem:[#allocation2 + $0x38] sm:$0xff] %vm243, %v298
    %452 = vst.msk [vmem:[#allocation2 + $0x40] sm:$0xff] %vm243, %v299
    %v453 = vld [vmem:[#allocation2 + $0x7] sm:$0xff]
    %v454 = vld [vmem:[#allocation2 + $0xf] sm:$0xff]
    %v455 = vld [vmem:[#allocation2 + $0x17] sm:$0xff]
    %v456 = vld [vmem:[#allocation2 + $0x1f] sm:$0xff]
    %v457 = vld [vmem:[#allocation2 + $0x27] sm:$0xff]
    %v458 = vld [vmem:[#allocation2 + $0x2f] sm:$0xff]
    %v459 = vld [vmem:[#allocation2 + $0x37] sm:$0xff]
    %v460 = vld [vmem:[#allocation2 + $0x3f] sm:$0xff]
    %v461 = vsel %vm373, 1, 0
    %v462 = vsel %vm374, 1, 0
    %v463 = vsel %vm375, 1, 0
    %v464 = vsel %vm376, 1, 0
    %v465 = vsel %vm377, 1, 0
    %v466 = vsel %vm378, 1, 0
    %v467 = vsel %vm379, 1, 0
    %v468 = vsel %vm380, 1, 0
    %vm469 = vcmp.eq.s32.totalorder %v461, 1
    %vm470 = vcmp.eq.s32.totalorder %v462, 1
    %vm471 = vcmp.eq.s32.totalorder %v463, 1
    %vm472 = vcmp.eq.s32.totalorder %v464, 1
    %vm473 = vcmp.eq.s32.totalorder %v465, 1
    %vm474 = vcmp.eq.s32.totalorder %v466, 1
    %vm475 = vcmp.eq.s32.totalorder %v467, 1
    %vm476 = vcmp.eq.s32.totalorder %v468, 1
    %v477 = vsel %vm469, %v453, 0.0
    %v478 = vsel %vm470, %v454, 0.0
    %v479 = vsel %vm471, %v455, 0.0
    %v480 = vsel %vm472, %v456, 0.0
    %v481 = vsel %vm473, %v457, 0.0
    %v482 = vsel %vm474, %v458, 0.0
    %v483 = vsel %vm475, %v459, 0.0
    %v484 = vsel %vm476, %v460, 0.0
    %v485 = vpack.c.bf16 %v478, %v477
    %v486 = vpack.c.bf16 %v480, %v479
    %v487 = vpack.c.bf16 %v482, %v481
    %v488 = vpack.c.bf16 %v484, %v483
    %v489 = vld [vmem:[%s2] sm:$0xf]
    %v490 = vld [vmem:[%s2 + $0x4] sm:$0xf]
    %v491 = vld [vmem:[%s2 + $0x8] sm:$0xf]
    %v492 = vld [vmem:[%s2 + $0xc] sm:$0xf]
    %v493 = vld [vmem:[#allocation2 + $0x8] sm:$0xff]
    %v494 = vld [vmem:[#allocation2 + $0x10] sm:$0xff]
    %v495 = vld [vmem:[#allocation2 + $0x18] sm:$0xff]
    %v496 = vld [vmem:[#allocation2 + $0x20] sm:$0xff]
    %v497 = vld [vmem:[#allocation2 + $0x28] sm:$0xff]
    %v498 = vld [vmem:[#allocation2 + $0x30] sm:$0xff]
    %v499 = vld [vmem:[#allocation2 + $0x38] sm:$0xff]
    %v500 = vld [vmem:[#allocation2 + $0x40] sm:$0xff]
    %v501 = vpack.c.bf16 %v494, %v493
    %v502 = vpack.c.bf16 %v496, %v495
    %v503 = vpack.c.bf16 %v498, %v497
    %v504 = vpack.c.bf16 %v500, %v499
    %v505 = vld [vmem:[%s2 + $0x10] sm:$0xf]
    %v506 = vld [vmem:[%s2 + $0x14] sm:$0xf]
    %v507 = vld [vmem:[%s2 + $0x18] sm:$0xf]
    %v508 = vld [vmem:[%s2 + $0x1c] sm:$0xf]
    %v513 = vunpack.c.l.b16 %v505
    %v514 = vunpack.c.l.b16 %v506
    %v515 = vunpack.c.l.b16 %v507
    %v516 = vunpack.c.l.b16 %v508
    %v517 = vpack.c.b16 %v514, %v513
    %v518 = vpack.c.b16 %v516, %v515
    %v522 = vsel %vm243, %v501, 0
    %v525 = vsel %vm243, %v502, 0
    %v528 = vsel %vm243, %v503, 0
    %v531 = vsel %vm243, %v504, 0
    %533 = vmatpush.bf16.msra.mxu0 0
    %534 = vmatpush.bf16.msra.mxu0 0
    %535 = vmatpush.bf16.msra.mxu0 0
    %536 = vmatpush.bf16.msra.mxu0 0
    %537 = vmatpush.bf16.msra.mxu0 0
    %538 = vmatpush.bf16.msra.mxu0 0
    %539 = vmatpush.bf16.msra.mxu0 %v518
    %540 = vmatpush.bf16.msra.mxu0 %v517
    %541 = vmatmul.bf16.gmra.mxu0 %v522
    %v542 = vpop.f32.mrf.mxu0
    %v543 = vadd.f32 0.0, %v542
    %v544 = vpop.f32.mrf.mxu0
    %v545 = vadd.f32 0.0, %v544
    %546 = vmatmul.bf16.gmra.mxu0 %v525
    %v547 = vpop.f32.mrf.mxu0
    %v548 = vadd.f32 0.0, %v547
    %v549 = vpop.f32.mrf.mxu0
    %v550 = vadd.f32 0.0, %v549
    %551 = vmatmul.bf16.gmra.mxu0 %v528
    %v552 = vpop.f32.mrf.mxu0
    %v553 = vadd.f32 0.0, %v552
    %v554 = vpop.f32.mrf.mxu0
    %v555 = vadd.f32 0.0, %v554
    %556 = vmatmul.bf16.gmra.mxu0 %v531
    %v557 = vpop.f32.mrf.mxu0
    %v558 = vadd.f32 0.0, %v557
    %v559 = vpop.f32.mrf.mxu0
    %v560 = vadd.f32 0.0, %v559
    %561 = vdwg.mxu0
    %v566 = vunpack.c.l.b16 %v489
    %v567 = vunpack.c.l.b16 %v490
    %v568 = vunpack.c.l.b16 %v491
    %v569 = vunpack.c.l.b16 %v492
    %v570 = vpack.c.b16 %v567, %v566
    %v571 = vpack.c.b16 %v569, %v568
    %v575 = vsel %vm243, %v485, 0
    %v578 = vsel %vm243, %v486, 0
    %v581 = vsel %vm243, %v487, 0
    %v584 = vsel %vm243, %v488, 0
    %586 = vmatpush.bf16.msra.mxu0 0
    %587 = vmatpush.bf16.msra.mxu0 0
    %588 = vmatpush.bf16.msra.mxu0 0
    %589 = vmatpush.bf16.msra.mxu0 0
    %590 = vmatpush.bf16.msra.mxu0 0
    %591 = vmatpush.bf16.msra.mxu0 0
    %592 = vmatpush.bf16.msra.mxu0 %v571
    %593 = vmatpush.bf16.msra.mxu0 %v570
    %594 = vmatmul.bf16.gmra.mxu0 %v575
    %v595 = vpop.f32.mrf.mxu0
    %v596 = vadd.f32 %v543, %v595
    %v597 = vpop.f32.mrf.mxu0
    %v598 = vadd.f32 %v545, %v597
    %599 = vmatmul.bf16.gmra.mxu0 %v578
    %v600 = vpop.f32.mrf.mxu0
    %v601 = vadd.f32 %v548, %v600
    %v602 = vpop.f32.mrf.mxu0
    %v603 = vadd.f32 %v550, %v602
    %604 = vmatmul.bf16.gmra.mxu0 %v581
    %v605 = vpop.f32.mrf.mxu0
    %v606 = vadd.f32 %v553, %v605
    %v607 = vpop.f32.mrf.mxu0
    %v608 = vadd.f32 %v555, %v607
    %609 = vmatmul.bf16.gmra.mxu0 %v584
    %v610 = vpop.f32.mrf.mxu0
    %v611 = vadd.f32 %v558, %v610
    %v612 = vpop.f32.mrf.mxu0
    %v613 = vadd.f32 %v560, %v612
    %614 = vdwg.mxu0
    %v615 = vld [vmem:[#allocation2 + $0x9] sm:$0xff]
    %v616 = vld [vmem:[#allocation2 + $0x11] sm:$0xff]
    %v617 = vld [vmem:[#allocation2 + $0x19] sm:$0xff]
    %v618 = vld [vmem:[#allocation2 + $0x21] sm:$0xff]
    %v619 = vld [vmem:[#allocation2 + $0x29] sm:$0xff]
    %v620 = vld [vmem:[#allocation2 + $0x31] sm:$0xff]
    %v621 = vld [vmem:[#allocation2 + $0x39] sm:$0xff]
    %v622 = vld [vmem:[#allocation2 + $0x41] sm:$0xff]
    %v623 = vsel %vm405, 1, 0
    %v624 = vsel %vm406, 1, 0
    %v625 = vsel %vm407, 1, 0
    %v626 = vsel %vm408, 1, 0
    %v627 = vsel %vm409, 1, 0
    %v628 = vsel %vm410, 1, 0
    %v629 = vsel %vm411, 1, 0
    %v630 = vsel %vm412, 1, 0
    %vm631 = vcmp.eq.s32.totalorder %v623, 1
    %vm632 = vcmp.eq.s32.totalorder %v624, 1
    %vm633 = vcmp.eq.s32.totalorder %v625, 1
    %vm634 = vcmp.eq.s32.totalorder %v626, 1
    %vm635 = vcmp.eq.s32.totalorder %v627, 1
    %vm636 = vcmp.eq.s32.totalorder %v628, 1
    %vm637 = vcmp.eq.s32.totalorder %v629, 1
    %vm638 = vcmp.eq.s32.totalorder %v630, 1
    %v639 = vsel %vm631, %v615, 0.0
    %v640 = vsel %vm632, %v616, 0.0
    %v641 = vsel %vm633, %v617, 0.0
    %v642 = vsel %vm634, %v618, 0.0
    %v643 = vsel %vm635, %v619, 0.0
    %v644 = vsel %vm636, %v620, 0.0
    %v645 = vsel %vm637, %v621, 0.0
    %v646 = vsel %vm638, %v622, 0.0
    %v647 = vpack.c.bf16 %v640, %v639
    %v648 = vpack.c.bf16 %v642, %v641
    %v649 = vpack.c.bf16 %v644, %v643
    %v650 = vpack.c.bf16 %v646, %v645
    %v651 = vld [vmem:[%s2 + $0x20] sm:$0xf]
    %v652 = vld [vmem:[%s2 + $0x24] sm:$0xf]
    %v653 = vld [vmem:[%s2 + $0x28] sm:$0xf]
    %v654 = vld [vmem:[%s2 + $0x2c] sm:$0xf]
    %v659 = vunpack.c.l.b16 %v651
    %v660 = vunpack.c.l.b16 %v652
    %v661 = vunpack.c.l.b16 %v653
    %v662 = vunpack.c.l.b16 %v654
    %v663 = vpack.c.b16 %v660, %v659
    %v664 = vpack.c.b16 %v662, %v661
    %v668 = vsel %vm243, %v647, 0
    %v671 = vsel %vm243, %v648, 0
    %v674 = vsel %vm243, %v649, 0
    %v677 = vsel %vm243, %v650, 0
    %679 = vmatpush.bf16.msra.mxu0 0
    %680 = vmatpush.bf16.msra.mxu0 0
    %681 = vmatpush.bf16.msra.mxu0 0
    %682 = vmatpush.bf16.msra.mxu0 0
    %683 = vmatpush.bf16.msra.mxu0 0
    %684 = vmatpush.bf16.msra.mxu0 0
    %685 = vmatpush.bf16.msra.mxu0 %v664
    %686 = vmatpush.bf16.msra.mxu0 %v663
    %687 = vmatmul.bf16.gmra.mxu0 %v668
    %v688 = vpop.f32.mrf.mxu0
    %v689 = vadd.f32 0.0, %v688
    %v690 = vpop.f32.mrf.mxu0
    %v691 = vadd.f32 0.0, %v690
    %692 = vmatmul.bf16.gmra.mxu0 %v671
    %v693 = vpop.f32.mrf.mxu0
    %v694 = vadd.f32 0.0, %v693
    %v695 = vpop.f32.mrf.mxu0
    %v696 = vadd.f32 0.0, %v695
    %697 = vmatmul.bf16.gmra.mxu0 %v674
    %v698 = vpop.f32.mrf.mxu0
    %v699 = vadd.f32 0.0, %v698
    %v700 = vpop.f32.mrf.mxu0
    %v701 = vadd.f32 0.0, %v700
    %702 = vmatmul.bf16.gmra.mxu0 %v677
    %v703 = vpop.f32.mrf.mxu0
    %v704 = vadd.f32 0.0, %v703
    %v705 = vpop.f32.mrf.mxu0
    %v706 = vadd.f32 0.0, %v705
    %707 = vdwg.mxu0
    %v708 = vadd.f32 %v596, %v689
    %v709 = vadd.f32 %v598, %v691
    %v710 = vadd.f32 %v601, %v694
    %v711 = vadd.f32 %v603, %v696
    %v712 = vadd.f32 %v606, %v699
    %v713 = vadd.f32 %v608, %v701
    %v714 = vadd.f32 %v611, %v704
    %v715 = vadd.f32 %v613, %v706
    %v716 = vld [vmem:[%s15 + $0x2] ss:$0 sm:$0xff]
    %v717 = vmul.f32 %v708, %v716
    %v718 = vmul.f32 %v709, %v716
    %v719 = vmul.f32 %v710, %v716
    %v720 = vmul.f32 %v711, %v716
    %v721 = vmul.f32 %v712, %v716
    %v722 = vmul.f32 %v713, %v716
    %v723 = vmul.f32 %v714, %v716
    %v724 = vmul.f32 %v715, %v716
    %v725 = vld [vmem:[%s15 + $0x3] ss:$0 sm:$0xff]
    %v726 = vadd.f32 %v717, %v725
    %v727 = vadd.f32 %v718, %v725
    %v728 = vadd.f32 %v719, %v725
    %v729 = vadd.f32 %v720, %v725
    %v730 = vadd.f32 %v721, %v725
    %v731 = vadd.f32 %v722, %v725
    %v732 = vadd.f32 %v723, %v725
    %v733 = vadd.f32 %v724, %v725
    %v734 = vmax.f32 %v726, 0.0
    %v735 = vmax.f32 %v727, 0.0
    %v736 = vmax.f32 %v728, 0.0
    %v737 = vmax.f32 %v729, 0.0
    %v738 = vmax.f32 %v730, 0.0
    %v739 = vmax.f32 %v731, 0.0
    %v740 = vmax.f32 %v732, 0.0
    %v741 = vmax.f32 %v733, 0.0
    %742 = vst.msk [vmem:[#allocation2 + $0x8] sm:$0xff] %vm243, %v734
    %743 = vst.msk [vmem:[#allocation2 + $0x10] sm:$0xff] %vm243, %v735
    %744 = vst.msk [vmem:[#allocation2 + $0x18] sm:$0xff] %vm243, %v736
    %745 = vst.msk [vmem:[#allocation2 + $0x20] sm:$0xff] %vm243, %v737
    %746 = vst.msk [vmem:[#allocation2 + $0x28] sm:$0xff] %vm243, %v738
    %747 = vst.msk [vmem:[#allocation2 + $0x30] sm:$0xff] %vm243, %v739
    %748 = vst.msk [vmem:[#allocation2 + $0x38] sm:$0xff] %vm243, %v740
    %749 = vst.msk [vmem:[#allocation2 + $0x40] sm:$0xff] %vm243, %v741
    %v750 = vld [vmem:[#allocation2 + $0x7] sm:$0xff]
    %v751 = vld [vmem:[#allocation2 + $0xf] sm:$0xff]
    %v752 = vld [vmem:[#allocation2 + $0x17] sm:$0xff]
    %v753 = vld [vmem:[#allocation2 + $0x1f] sm:$0xff]
    %v754 = vld [vmem:[#allocation2 + $0x27] sm:$0xff]
    %v755 = vld [vmem:[#allocation2 + $0x2f] sm:$0xff]
    %v756 = vld [vmem:[#allocation2 + $0x37] sm:$0xff]
    %v757 = vld [vmem:[#allocation2 + $0x3f] sm:$0xff]
    %v758 = vsel %vm469, %v750, 0.0
    %v759 = vsel %vm470, %v751, 0.0
    %v760 = vsel %vm471, %v752, 0.0
    %v761 = vsel %vm472, %v753, 0.0
    %v762 = vsel %vm473, %v754, 0.0
    %v763 = vsel %vm474, %v755, 0.0
    %v764 = vsel %vm475, %v756, 0.0
    %v765 = vsel %vm476, %v757, 0.0
    %v766 = vpack.c.bf16 %v759, %v758
    %v767 = vpack.c.bf16 %v761, %v760
    %v768 = vpack.c.bf16 %v763, %v762
    %v769 = vpack.c.bf16 %v765, %v764
    %v770 = vld [vmem:[%s3] sm:$0xf]
    %v771 = vld [vmem:[%s3 + $0x4] sm:$0xf]
    %v772 = vld [vmem:[%s3 + $0x8] sm:$0xf]
    %v773 = vld [vmem:[%s3 + $0xc] sm:$0xf]
    %v774 = vld [vmem:[#allocation2 + $0x8] sm:$0xff]
    %v775 = vld [vmem:[#allocation2 + $0x10] sm:$0xff]
    %v776 = vld [vmem:[#allocation2 + $0x18] sm:$0xff]
    %v777 = vld [vmem:[#allocation2 + $0x20] sm:$0xff]
    %v778 = vld [vmem:[#allocation2 + $0x28] sm:$0xff]
    %v779 = vld [vmem:[#allocation2 + $0x30] sm:$0xff]
    %v780 = vld [vmem:[#allocation2 + $0x38] sm:$0xff]
    %v781 = vld [vmem:[#allocation2 + $0x40] sm:$0xff]
    %v782 = vpack.c.bf16 %v775, %v774
    %v783 = vpack.c.bf16 %v777, %v776
    %v784 = vpack.c.bf16 %v779, %v778
    %v785 = vpack.c.bf16 %v781, %v780
    %v786 = vld [vmem:[%s3 + $0x10] sm:$0xf]
    %v787 = vld [vmem:[%s3 + $0x14] sm:$0xf]
    %v788 = vld [vmem:[%s3 + $0x18] sm:$0xf]
    %v789 = vld [vmem:[%s3 + $0x1c] sm:$0xf]
    %v794 = vunpack.c.l.b16 %v786
    %v795 = vunpack.c.l.b16 %v787
    %v796 = vunpack.c.l.b16 %v788
    %v797 = vunpack.c.l.b16 %v789
    %v798 = vpack.c.b16 %v795, %v794
    %v799 = vpack.c.b16 %v797, %v796
    %v803 = vsel %vm243, %v782, 0
    %v806 = vsel %vm243, %v783, 0
    %v809 = vsel %vm243, %v784, 0
    %v812 = vsel %vm243, %v785, 0
    %814 = vmatpush.bf16.msra.mxu0 0
    %815 = vmatpush.bf16.msra.mxu0 0
    %816 = vmatpush.bf16.msra.mxu0 0
    %817 = vmatpush.bf16.msra.mxu0 0
    %818 = vmatpush.bf16.msra.mxu0 0
    %819 = vmatpush.bf16.msra.mxu0 0
    %820 = vmatpush.bf16.msra.mxu0 %v799
    %821 = vmatpush.bf16.msra.mxu0 %v798
    %822 = vmatmul.bf16.gmra.mxu0 %v803
    %v823 = vpop.f32.mrf.mxu0
    %v824 = vadd.f32 0.0, %v823
    %v825 = vpop.f32.mrf.mxu0
    %v826 = vadd.f32 0.0, %v825
    %827 = vmatmul.bf16.gmra.mxu0 %v806
    %v828 = vpop.f32.mrf.mxu0
    %v829 = vadd.f32 0.0, %v828
    %v830 = vpop.f32.mrf.mxu0
    %v831 = vadd.f32 0.0, %v830
    %832 = vmatmul.bf16.gmra.mxu0 %v809
    %v833 = vpop.f32.mrf.mxu0
    %v834 = vadd.f32 0.0, %v833
    %v835 = vpop.f32.mrf.mxu0
    %v836 = vadd.f32 0.0, %v835
    %837 = vmatmul.bf16.gmra.mxu0 %v812
    %v838 = vpop.f32.mrf.mxu0
    %v839 = vadd.f32 0.0, %v838
    %v840 = vpop.f32.mrf.mxu0
    %v841 = vadd.f32 0.0, %v840
    %842 = vdwg.mxu0
    %v847 = vunpack.c.l.b16 %v770
    %v848 = vunpack.c.l.b16 %v771
    %v849 = vunpack.c.l.b16 %v772
    %v850 = vunpack.c.l.b16 %v773
    %v851 = vpack.c.b16 %v848, %v847
    %v852 = vpack.c.b16 %v850, %v849
    %v856 = vsel %vm243, %v766, 0
    %v859 = vsel %vm243, %v767, 0
    %v862 = vsel %vm243, %v768, 0
    %v865 = vsel %vm243, %v769, 0
    %867 = vmatpush.bf16.msra.mxu0 0
    %868 = vmatpush.bf16.msra.mxu0 0
    %869 = vmatpush.bf16.msra.mxu0 0
    %870 = vmatpush.bf16.msra.mxu0 0
    %871 = vmatpush.bf16.msra.mxu0 0
    %872 = vmatpush.bf16.msra.mxu0 0
    %873 = vmatpush.bf16.msra.mxu0 %v852
    %874 = vmatpush.bf16.msra.mxu0 %v851
    %875 = vmatmul.bf16.gmra.mxu0 %v856
    %v876 = vpop.f32.mrf.mxu0
    %v877 = vadd.f32 %v824, %v876
    %v878 = vpop.f32.mrf.mxu0
    %v879 = vadd.f32 %v826, %v878
    %880 = vmatmul.bf16.gmra.mxu0 %v859
    %v881 = vpop.f32.mrf.mxu0
    %v882 = vadd.f32 %v829, %v881
    %v883 = vpop.f32.mrf.mxu0
    %v884 = vadd.f32 %v831, %v883
    %885 = vmatmul.bf16.gmra.mxu0 %v862
    %v886 = vpop.f32.mrf.mxu0
    %v887 = vadd.f32 %v834, %v886
    %v888 = vpop.f32.mrf.mxu0
    %v889 = vadd.f32 %v836, %v888
    %890 = vmatmul.bf16.gmra.mxu0 %v865
    %v891 = vpop.f32.mrf.mxu0
    %v892 = vadd.f32 %v839, %v891
    %v893 = vpop.f32.mrf.mxu0
    %v894 = vadd.f32 %v841, %v893
    %895 = vdwg.mxu0
    %v896 = vld [vmem:[#allocation2 + $0x9] sm:$0xff]
    %v897 = vld [vmem:[#allocation2 + $0x11] sm:$0xff]
    %v898 = vld [vmem:[#allocation2 + $0x19] sm:$0xff]
    %v899 = vld [vmem:[#allocation2 + $0x21] sm:$0xff]
    %v900 = vld [vmem:[#allocation2 + $0x29] sm:$0xff]
    %v901 = vld [vmem:[#allocation2 + $0x31] sm:$0xff]
    %v902 = vld [vmem:[#allocation2 + $0x39] sm:$0xff]
    %v903 = vld [vmem:[#allocation2 + $0x41] sm:$0xff]
    %v904 = vsel %vm631, %v896, 0.0
    %v905 = vsel %vm632, %v897, 0.0
    %v906 = vsel %vm633, %v898, 0.0
    %v907 = vsel %vm634, %v899, 0.0
    %v908 = vsel %vm635, %v900, 0.0
    %v909 = vsel %vm636, %v901, 0.0
    %v910 = vsel %vm637, %v902, 0.0
    %v911 = vsel %vm638, %v903, 0.0
    %v912 = vpack.c.bf16 %v905, %v904
    %v913 = vpack.c.bf16 %v907, %v906
    %v914 = vpack.c.bf16 %v909, %v908
    %v915 = vpack.c.bf16 %v911, %v910
    %v916 = vld [vmem:[%s3 + $0x20] sm:$0xf]
    %v917 = vld [vmem:[%s3 + $0x24] sm:$0xf]
    %v918 = vld [vmem:[%s3 + $0x28] sm:$0xf]
    %v919 = vld [vmem:[%s3 + $0x2c] sm:$0xf]
    %v924 = vunpack.c.l.b16 %v916
    %v925 = vunpack.c.l.b16 %v917
    %v926 = vunpack.c.l.b16 %v918
    %v927 = vunpack.c.l.b16 %v919
    %v928 = vpack.c.b16 %v925, %v924
    %v929 = vpack.c.b16 %v927, %v926
    %v933 = vsel %vm243, %v912, 0
    %v936 = vsel %vm243, %v913, 0
    %v939 = vsel %vm243, %v914, 0
    %v942 = vsel %vm243, %v915, 0
    %944 = vmatpush.bf16.msra.mxu0 0
    %945 = vmatpush.bf16.msra.mxu0 0
    %946 = vmatpush.bf16.msra.mxu0 0
    %947 = vmatpush.bf16.msra.mxu0 0
    %948 = vmatpush.bf16.msra.mxu0 0
    %949 = vmatpush.bf16.msra.mxu0 0
    %950 = vmatpush.bf16.msra.mxu0 %v929
    %951 = vmatpush.bf16.msra.mxu0 %v928
    %952 = vmatmul.bf16.gmra.mxu0 %v933
    %v953 = vpop.f32.mrf.mxu0
    %v954 = vadd.f32 0.0, %v953
    %v955 = vpop.f32.mrf.mxu0
    %v956 = vadd.f32 0.0, %v955
    %957 = vmatmul.bf16.gmra.mxu0 %v936
    %v958 = vpop.f32.mrf.mxu0
    %v959 = vadd.f32 0.0, %v958
    %v960 = vpop.f32.mrf.mxu0
    %v961 = vadd.f32 0.0, %v960
    %962 = vmatmul.bf16.gmra.mxu0 %v939
    %v963 = vpop.f32.mrf.mxu0
    %v964 = vadd.f32 0.0, %v963
    %v965 = vpop.f32.mrf.mxu0
    %v966 = vadd.f32 0.0, %v965
    %967 = vmatmul.bf16.gmra.mxu0 %v942
    %v968 = vpop.f32.mrf.mxu0
    %v969 = vadd.f32 0.0, %v968
    %v970 = vpop.f32.mrf.mxu0
    %v971 = vadd.f32 0.0, %v970
    %972 = vdwg.mxu0
    %v973 = vadd.f32 %v877, %v954
    %v974 = vadd.f32 %v879, %v956
    %v975 = vadd.f32 %v882, %v959
    %v976 = vadd.f32 %v884, %v961
    %v977 = vadd.f32 %v887, %v964
    %v978 = vadd.f32 %v889, %v966
    %v979 = vadd.f32 %v892, %v969
    %v980 = vadd.f32 %v894, %v971
    %v981 = vld [vmem:[%s15 + $0x4] ss:$0 sm:$0xff]
    %v982 = vmul.f32 %v973, %v981
    %v983 = vmul.f32 %v974, %v981
    %v984 = vmul.f32 %v975, %v981
    %v985 = vmul.f32 %v976, %v981
    %v986 = vmul.f32 %v977, %v981
    %v987 = vmul.f32 %v978, %v981
    %v988 = vmul.f32 %v979, %v981
    %v989 = vmul.f32 %v980, %v981
    %v990 = vld [vmem:[%s15 + $0x5] ss:$0 sm:$0xff]
    %v991 = vadd.f32 %v982, %v990
    %v992 = vadd.f32 %v983, %v990
    %v993 = vadd.f32 %v984, %v990
    %v994 = vadd.f32 %v985, %v990
    %v995 = vadd.f32 %v986, %v990
    %v996 = vadd.f32 %v987, %v990
    %v997 = vadd.f32 %v988, %v990
    %v998 = vadd.f32 %v989, %v990
    %v999 = vadd.f32 %v991, %v292
    %v1000 = vadd.f32 %v992, %v293
    %v1001 = vadd.f32 %v993, %v294
    %v1002 = vadd.f32 %v994, %v295
    %v1003 = vadd.f32 %v995, %v296
    %v1004 = vadd.f32 %v996, %v297
    %v1005 = vadd.f32 %v997, %v298
    %v1006 = vadd.f32 %v998, %v299
    %v1007 = vmax.f32 %v999, 0.0
    %v1008 = vmax.f32 %v1000, 0.0
    %v1009 = vmax.f32 %v1001, 0.0
    %v1010 = vmax.f32 %v1002, 0.0
    %v1011 = vmax.f32 %v1003, 0.0
    %v1012 = vmax.f32 %v1004, 0.0
    %v1013 = vmax.f32 %v1005, 0.0
    %v1014 = vmax.f32 %v1006, 0.0
    %1015 = vst.msk [vmem:[#allocation2 + $0x8] sm:$0xff] %vm243, %v1007
    %1016 = vst.msk [vmem:[#allocation2 + $0x10] sm:$0xff] %vm243, %v1008
    %1017 = vst.msk [vmem:[#allocation2 + $0x18] sm:$0xff] %vm243, %v1009
    %1018 = vst.msk [vmem:[#allocation2 + $0x20] sm:$0xff] %vm243, %v1010
    %1019 = vst.msk [vmem:[#allocation2 + $0x28] sm:$0xff] %vm243, %v1011
    %1020 = vst.msk [vmem:[#allocation2 + $0x30] sm:$0xff] %vm243, %v1012
    %1021 = vst.msk [vmem:[#allocation2 + $0x38] sm:$0xff] %vm243, %v1013
    %1022 = vst.msk [vmem:[#allocation2 + $0x40] sm:$0xff] %vm243, %v1014
    %v1023 = vld [vmem:[#allocation2 + $0x6] sm:$0xff]
    %v1024 = vld [vmem:[#allocation2 + $0xe] sm:$0xff]
    %v1025 = vld [vmem:[#allocation2 + $0x16] sm:$0xff]
    %v1026 = vld [vmem:[#allocation2 + $0x1e] sm:$0xff]
    %v1027 = vld [vmem:[#allocation2 + $0x26] sm:$0xff]
    %v1028 = vld [vmem:[#allocation2 + $0x2e] sm:$0xff]
    %v1029 = vld [vmem:[#allocation2 + $0x36] sm:$0xff]
    %v1030 = vld [vmem:[#allocation2 + $0x3e] sm:$0xff]
    %v1031 = vsel %vm341, 1, 0
    %v1032 = vsel %vm342, 1, 0
    %v1033 = vsel %vm343, 1, 0
    %v1034 = vsel %vm344, 1, 0
    %v1035 = vsel %vm345, 1, 0
    %v1036 = vsel %vm346, 1, 0
    %v1037 = vsel %vm347, 1, 0
    %v1038 = vsel %vm348, 1, 0
    %vm1039 = vcmp.eq.s32.totalorder %v1031, 1
    %vm1040 = vcmp.eq.s32.totalorder %v1032, 1
    %vm1041 = vcmp.eq.s32.totalorder %v1033, 1
    %vm1042 = vcmp.eq.s32.totalorder %v1034, 1
    %vm1043 = vcmp.eq.s32.totalorder %v1035, 1
    %vm1044 = vcmp.eq.s32.totalorder %v1036, 1
    %vm1045 = vcmp.eq.s32.totalorder %v1037, 1
    %vm1046 = vcmp.eq.s32.totalorder %v1038, 1
    %v1047 = vsel %vm1039, %v1023, 0.0
    %v1048 = vsel %vm1040, %v1024, 0.0
    %v1049 = vsel %vm1041, %v1025, 0.0
    %v1050 = vsel %vm1042, %v1026, 0.0
    %v1051 = vsel %vm1043, %v1027, 0.0
    %v1052 = vsel %vm1044, %v1028, 0.0
    %v1053 = vsel %vm1045, %v1029, 0.0
    %v1054 = vsel %vm1046, %v1030, 0.0
    %v1055 = vpack.c.bf16 %v1048, %v1047
    %v1056 = vpack.c.bf16 %v1050, %v1049
    %v1057 = vpack.c.bf16 %v1052, %v1051
    %v1058 = vpack.c.bf16 %v1054, %v1053
    %v1059 = vld [vmem:[%s4] sm:$0xf]
    %v1060 = vld [vmem:[%s4 + $0x4] sm:$0xf]
    %v1061 = vld [vmem:[%s4 + $0x8] sm:$0xf]
    %v1062 = vld [vmem:[%s4 + $0xc] sm:$0xf]
    %v1063 = vld [vmem:[#allocation2 + $0x7] sm:$0xff]
    %v1064 = vld [vmem:[#allocation2 + $0xf] sm:$0xff]
    %v1065 = vld [vmem:[#allocation2 + $0x17] sm:$0xff]
    %v1066 = vld [vmem:[#allocation2 + $0x1f] sm:$0xff]
    %v1067 = vld [vmem:[#allocation2 + $0x27] sm:$0xff]
    %v1068 = vld [vmem:[#allocation2 + $0x2f] sm:$0xff]
    %v1069 = vld [vmem:[#allocation2 + $0x37] sm:$0xff]
    %v1070 = vld [vmem:[#allocation2 + $0x3f] sm:$0xff]
    %v1071 = vsel %vm469, %v1063, 0.0
    %v1072 = vsel %vm470, %v1064, 0.0
    %v1073 = vsel %vm471, %v1065, 0.0
    %v1074 = vsel %vm472, %v1066, 0.0
    %v1075 = vsel %vm473, %v1067, 0.0
    %v1076 = vsel %vm474, %v1068, 0.0
    %v1077 = vsel %vm475, %v1069, 0.0
    %v1078 = vsel %vm476, %v1070, 0.0
    %v1079 = vpack.c.bf16 %v1072, %v1071
    %v1080 = vpack.c.bf16 %v1074, %v1073
    %v1081 = vpack.c.bf16 %v1076, %v1075
    %v1082 = vpack.c.bf16 %v1078, %v1077
    %v1083 = vld [vmem:[%s4 + $0x10] sm:$0xf]
    %v1084 = vld [vmem:[%s4 + $0x14] sm:$0xf]
    %v1085 = vld [vmem:[%s4 + $0x18] sm:$0xf]
    %v1086 = vld [vmem:[%s4 + $0x1c] sm:$0xf]
    %v1091 = vunpack.c.l.b16 %v1083
    %v1092 = vunpack.c.l.b16 %v1084
    %v1093 = vunpack.c.l.b16 %v1085
    %v1094 = vunpack.c.l.b16 %v1086
    %v1095 = vpack.c.b16 %v1092, %v1091
    %v1096 = vpack.c.b16 %v1094, %v1093
    %v1100 = vsel %vm243, %v1079, 0
    %v1103 = vsel %vm243, %v1080, 0
    %v1106 = vsel %vm243, %v1081, 0
    %v1109 = vsel %vm243, %v1082, 0
    %1111 = vmatpush.bf16.msra.mxu0 0
    %1112 = vmatpush.bf16.msra.mxu0 0
    %1113 = vmatpush.bf16.msra.mxu0 0
    %1114 = vmatpush.bf16.msra.mxu0 0
    %1115 = vmatpush.bf16.msra.mxu0 0
    %1116 = vmatpush.bf16.msra.mxu0 0
    %1117 = vmatpush.bf16.msra.mxu0 %v1096
    %1118 = vmatpush.bf16.msra.mxu0 %v1095
    %1119 = vmatmul.bf16.gmra.mxu0 %v1100
    %v1120 = vpop.f32.mrf.mxu0
    %v1121 = vadd.f32 0.0, %v1120
    %v1122 = vpop.f32.mrf.mxu0
    %v1123 = vadd.f32 0.0, %v1122
    %1124 = vmatmul.bf16.gmra.mxu0 %v1103
    %v1125 = vpop.f32.mrf.mxu0
    %v1126 = vadd.f32 0.0, %v1125
    %v1127 = vpop.f32.mrf.mxu0
    %v1128 = vadd.f32 0.0, %v1127
    %1129 = vmatmul.bf16.gmra.mxu0 %v1106
    %v1130 = vpop.f32.mrf.mxu0
    %v1131 = vadd.f32 0.0, %v1130
    %v1132 = vpop.f32.mrf.mxu0
    %v1133 = vadd.f32 0.0, %v1132
    %1134 = vmatmul.bf16.gmra.mxu0 %v1109
    %v1135 = vpop.f32.mrf.mxu0
    %v1136 = vadd.f32 0.0, %v1135
    %v1137 = vpop.f32.mrf.mxu0
    %v1138 = vadd.f32 0.0, %v1137
    %1139 = vdwg.mxu0
    %v1144 = vunpack.c.l.b16 %v1059
    %v1145 = vunpack.c.l.b16 %v1060
    %v1146 = vunpack.c.l.b16 %v1061
    %v1147 = vunpack.c.l.b16 %v1062
    %v1148 = vpack.c.b16 %v1145, %v1144
    %v1149 = vpack.c.b16 %v1147, %v1146
    %v1153 = vsel %vm243, %v1055, 0
    %v1156 = vsel %vm243, %v1056, 0
    %v1159 = vsel %vm243, %v1057, 0
    %v1162 = vsel %vm243, %v1058, 0
    %1164 = vmatpush.bf16.msra.mxu0 0
    %1165 = vmatpush.bf16.msra.mxu0 0
    %1166 = vmatpush.bf16.msra.mxu0 0
    %1167 = vmatpush.bf16.msra.mxu0 0
    %1168 = vmatpush.bf16.msra.mxu0 0
    %1169 = vmatpush.bf16.msra.mxu0 0
    %1170 = vmatpush.bf16.msra.mxu0 %v1149
    %1171 = vmatpush.bf16.msra.mxu0 %v1148
    %1172 = vmatmul.bf16.gmra.mxu0 %v1153
    %v1173 = vpop.f32.mrf.mxu0
    %v1174 = vadd.f32 %v1121, %v1173
    %v1175 = vpop.f32.mrf.mxu0
    %v1176 = vadd.f32 %v1123, %v1175
    %1177 = vmatmul.bf16.gmra.mxu0 %v1156
    %v1178 = vpop.f32.mrf.mxu0
    %v1179 = vadd.f32 %v1126, %v1178
    %v1180 = vpop.f32.mrf.mxu0
    %v1181 = vadd.f32 %v1128, %v1180
    %1182 = vmatmul.bf16.gmra.mxu0 %v1159
    %v1183 = vpop.f32.mrf.mxu0
    %v1184 = vadd.f32 %v1131, %v1183
    %v1185 = vpop.f32.mrf.mxu0
    %v1186 = vadd.f32 %v1133, %v1185
    %1187 = vmatmul.bf16.gmra.mxu0 %v1162
    %v1188 = vpop.f32.mrf.mxu0
    %v1189 = vadd.f32 %v1136, %v1188
    %v1190 = vpop.f32.mrf.mxu0
    %v1191 = vadd.f32 %v1138, %v1190
    %1192 = vdwg.mxu0
    %v1193 = vld [vmem:[#allocation2 + $0x8] sm:$0xff]
    %v1194 = vld [vmem:[#allocation2 + $0x10] sm:$0xff]
    %v1195 = vld [vmem:[#allocation2 + $0x18] sm:$0xff]
    %v1196 = vld [vmem:[#allocation2 + $0x20] sm:$0xff]
    %v1197 = vld [vmem:[#allocation2 + $0x28] sm:$0xff]
    %v1198 = vld [vmem:[#allocation2 + $0x30] sm:$0xff]
    %v1199 = vld [vmem:[#allocation2 + $0x38] sm:$0xff]
    %v1200 = vld [vmem:[#allocation2 + $0x40] sm:$0xff]
    %v1201 = vpack.c.bf16 %v1194, %v1193
    %v1202 = vpack.c.bf16 %v1196, %v1195
    %v1203 = vpack.c.bf16 %v1198, %v1197
    %v1204 = vpack.c.bf16 %v1200, %v1199
    %v1205 = vld [vmem:[%s4 + $0x20] sm:$0xf]
    %v1206 = vld [vmem:[%s4 + $0x24] sm:$0xf]
    %v1207 = vld [vmem:[%s4 + $0x28] sm:$0xf]
    %v1208 = vld [vmem:[%s4 + $0x2c] sm:$0xf]
    %v1213 = vunpack.c.l.b16 %v1205
    %v1214 = vunpack.c.l.b16 %v1206
    %v1215 = vunpack.c.l.b16 %v1207
    %v1216 = vunpack.c.l.b16 %v1208
    %v1217 = vpack.c.b16 %v1214, %v1213
    %v1218 = vpack.c.b16 %v1216, %v1215
    %v1222 = vsel %vm243, %v1201, 0
    %v1225 = vsel %vm243, %v1202, 0
    %v1228 = vsel %vm243, %v1203, 0
    %v1231 = vsel %vm243, %v1204, 0
    %1233 = vmatpush.bf16.msra.mxu0 0
    %1234 = vmatpush.bf16.msra.mxu0 0
    %1235 = vmatpush.bf16.msra.mxu0 0
    %1236 = vmatpush.bf16.msra.mxu0 0
    %1237 = vmatpush.bf16.msra.mxu0 0
    %1238 = vmatpush.bf16.msra.mxu0 0
    %1239 = vmatpush.bf16.msra.mxu0 %v1218
    %1240 = vmatpush.bf16.msra.mxu0 %v1217
    %1241 = vmatmul.bf16.gmra.mxu0 %v1222
    %v1242 = vpop.f32.mrf.mxu0
    %v1243 = vadd.f32 0.0, %v1242
    %v1244 = vpop.f32.mrf.mxu0
    %v1245 = vadd.f32 0.0, %v1244
    %1246 = vmatmul.bf16.gmra.mxu0 %v1225
    %v1247 = vpop.f32.mrf.mxu0
    %v1248 = vadd.f32 0.0, %v1247
    %v1249 = vpop.f32.mrf.mxu0
    %v1250 = vadd.f32 0.0, %v1249
    %1251 = vmatmul.bf16.gmra.mxu0 %v1228
    %v1252 = vpop.f32.mrf.mxu0
    %v1253 = vadd.f32 0.0, %v1252
    %v1254 = vpop.f32.mrf.mxu0
    %v1255 = vadd.f32 0.0, %v1254
    %1256 = vmatmul.bf16.gmra.mxu0 %v1231
    %v1257 = vpop.f32.mrf.mxu0
    %v1258 = vadd.f32 0.0, %v1257
    %v1259 = vpop.f32.mrf.mxu0
    %v1260 = vadd.f32 0.0, %v1259
    %1261 = vdwg.mxu0
    %v1262 = vadd.f32 %v1174, %v1243
    %v1263 = vadd.f32 %v1176, %v1245
    %v1264 = vadd.f32 %v1179, %v1248
    %v1265 = vadd.f32 %v1181, %v1250
    %v1266 = vadd.f32 %v1184, %v1253
    %v1267 = vadd.f32 %v1186, %v1255
    %v1268 = vadd.f32 %v1189, %v1258
    %v1269 = vadd.f32 %v1191, %v1260
    %v1270 = vld [vmem:[#allocation2 + $0x9] sm:$0xff]
    %v1271 = vld [vmem:[#allocation2 + $0x11] sm:$0xff]
    %v1272 = vld [vmem:[#allocation2 + $0x19] sm:$0xff]
    %v1273 = vld [vmem:[#allocation2 + $0x21] sm:$0xff]
    %v1274 = vld [vmem:[#allocation2 + $0x29] sm:$0xff]
    %v1275 = vld [vmem:[#allocation2 + $0x31] sm:$0xff]
    %v1276 = vld [vmem:[#allocation2 + $0x39] sm:$0xff]
    %v1277 = vld [vmem:[#allocation2 + $0x41] sm:$0xff]
    %v1278 = vsel %vm631, %v1270, 0.0
    %v1279 = vsel %vm632, %v1271, 0.0
    %v1280 = vsel %vm633, %v1272, 0.0
    %v1281 = vsel %vm634, %v1273, 0.0
    %v1282 = vsel %vm635, %v1274, 0.0
    %v1283 = vsel %vm636, %v1275, 0.0
    %v1284 = vsel %vm637, %v1276, 0.0
    %v1285 = vsel %vm638, %v1277, 0.0
    %v1286 = vpack.c.bf16 %v1279, %v1278
    %v1287 = vpack.c.bf16 %v1281, %v1280
    %v1288 = vpack.c.bf16 %v1283, %v1282
    %v1289 = vpack.c.bf16 %v1285, %v1284
    %v1290 = vld [vmem:[%s4 + $0x30] sm:$0xf]
    %v1291 = vld [vmem:[%s4 + $0x34] sm:$0xf]
    %v1292 = vld [vmem:[%s4 + $0x38] sm:$0xf]
    %v1293 = vld [vmem:[%s4 + $0x3c] sm:$0xf]
    %v1298 = vunpack.c.l.b16 %v1290
    %v1299 = vunpack.c.l.b16 %v1291
    %v1300 = vunpack.c.l.b16 %v1292
    %v1301 = vunpack.c.l.b16 %v1293
    %v1302 = vpack.c.b16 %v1299, %v1298
    %v1303 = vpack.c.b16 %v1301, %v1300
    %v1307 = vsel %vm243, %v1286, 0
    %v1310 = vsel %vm243, %v1287, 0
    %v1313 = vsel %vm243, %v1288, 0
    %v1316 = vsel %vm243, %v1289, 0
    %1318 = vmatpush.bf16.msra.mxu0 0
    %1319 = vmatpush.bf16.msra.mxu0 0
    %1320 = vmatpush.bf16.msra.mxu0 0
    %1321 = vmatpush.bf16.msra.mxu0 0
    %1322 = vmatpush.bf16.msra.mxu0 0
    %1323 = vmatpush.bf16.msra.mxu0 0
    %1324 = vmatpush.bf16.msra.mxu0 %v1303
    %1325 = vmatpush.bf16.msra.mxu0 %v1302
    %1326 = vmatmul.bf16.gmra.mxu0 %v1307
    %v1327 = vpop.f32.mrf.mxu0
    %v1328 = vadd.f32 0.0, %v1327
    %v1329 = vpop.f32.mrf.mxu0
    %v1330 = vadd.f32 0.0, %v1329
    %1331 = vmatmul.bf16.gmra.mxu0 %v1310
    %v1332 = vpop.f32.mrf.mxu0
    %v1333 = vadd.f32 0.0, %v1332
    %v1334 = vpop.f32.mrf.mxu0
    %v1335 = vadd.f32 0.0, %v1334
    %1336 = vmatmul.bf16.gmra.mxu0 %v1313
    %v1337 = vpop.f32.mrf.mxu0
    %v1338 = vadd.f32 0.0, %v1337
    %v1339 = vpop.f32.mrf.mxu0
    %v1340 = vadd.f32 0.0, %v1339
    %1341 = vmatmul.bf16.gmra.mxu0 %v1316
    %v1342 = vpop.f32.mrf.mxu0
    %v1343 = vadd.f32 0.0, %v1342
    %v1344 = vpop.f32.mrf.mxu0
    %v1345 = vadd.f32 0.0, %v1344
    %1346 = vdwg.mxu0
    %v1347 = vadd.f32 %v1262, %v1328
    %v1348 = vadd.f32 %v1263, %v1330
    %v1349 = vadd.f32 %v1264, %v1333
    %v1350 = vadd.f32 %v1265, %v1335
    %v1351 = vadd.f32 %v1266, %v1338
    %v1352 = vadd.f32 %v1267, %v1340
    %v1353 = vadd.f32 %v1268, %v1343
    %v1354 = vadd.f32 %v1269, %v1345
    %v1355 = vld [vmem:[#allocation2 + $0xa] sm:$0xff]
    %v1356 = vld [vmem:[#allocation2 + $0x12] sm:$0xff]
    %v1357 = vld [vmem:[#allocation2 + $0x1a] sm:$0xff]
    %v1358 = vld [vmem:[#allocation2 + $0x22] sm:$0xff]
    %v1359 = vld [vmem:[#allocation2 + $0x2a] sm:$0xff]
    %v1360 = vld [vmem:[#allocation2 + $0x32] sm:$0xff]
    %v1361 = vld [vmem:[#allocation2 + $0x3a] sm:$0xff]
    %v1362 = vld [vmem:[#allocation2 + $0x42] sm:$0xff]
    %v1363 = vsel %vm437, 1, 0
    %v1364 = vsel %vm438, 1, 0
    %v1365 = vsel %vm439, 1, 0
    %v1366 = vsel %vm440, 1, 0
    %v1367 = vsel %vm441, 1, 0
    %v1368 = vsel %vm442, 1, 0
    %v1369 = vsel %vm443, 1, 0
    %v1370 = vsel %vm444, 1, 0
    %vm1371 = vcmp.eq.s32.totalorder %v1363, 1
    %vm1372 = vcmp.eq.s32.totalorder %v1364, 1
    %vm1373 = vcmp.eq.s32.totalorder %v1365, 1
    %vm1374 = vcmp.eq.s32.totalorder %v1366, 1
    %vm1375 = vcmp.eq.s32.totalorder %v1367, 1
    %vm1376 = vcmp.eq.s32.totalorder %v1368, 1
    %vm1377 = vcmp.eq.s32.totalorder %v1369, 1
    %vm1378 = vcmp.eq.s32.totalorder %v1370, 1
    %v1379 = vsel %vm1371, %v1355, 0.0
    %v1380 = vsel %vm1372, %v1356, 0.0
    %v1381 = vsel %vm1373, %v1357, 0.0
    %v1382 = vsel %vm1374, %v1358, 0.0
    %v1383 = vsel %vm1375, %v1359, 0.0
    %v1384 = vsel %vm1376, %v1360, 0.0
    %v1385 = vsel %vm1377, %v1361, 0.0
    %v1386 = vsel %vm1378, %v1362, 0.0
    %v1387 = vpack.c.bf16 %v1380, %v1379
    %v1388 = vpack.c.bf16 %v1382, %v1381
    %v1389 = vpack.c.bf16 %v1384, %v1383
    %v1390 = vpack.c.bf16 %v1386, %v1385
    %v1391 = vld [vmem:[%s4 + $0x40] sm:$0xf]
    %v1392 = vld [vmem:[%s4 + $0x44] sm:$0xf]
    %v1393 = vld [vmem:[%s4 + $0x48] sm:$0xf]
    %v1394 = vld [vmem:[%s4 + $0x4c] sm:$0xf]
    %v1399 = vunpack.c.l.b16 %v1391
    %v1400 = vunpack.c.l.b16 %v1392
    %v1401 = vunpack.c.l.b16 %v1393
    %v1402 = vunpack.c.l.b16 %v1394
    %v1403 = vpack.c.b16 %v1400, %v1399
    %v1404 = vpack.c.b16 %v1402, %v1401
    %v1408 = vsel %vm243, %v1387, 0
    %v1411 = vsel %vm243, %v1388, 0
    %v1414 = vsel %vm243, %v1389, 0
    %v1417 = vsel %vm243, %v1390, 0
    %1419 = vmatpush.bf16.msra.mxu0 0
    %1420 = vmatpush.bf16.msra.mxu0 0
    %1421 = vmatpush.bf16.msra.mxu0 0
    %1422 = vmatpush.bf16.msra.mxu0 0
    %1423 = vmatpush.bf16.msra.mxu0 0
    %1424 = vmatpush.bf16.msra.mxu0 0
    %1425 = vmatpush.bf16.msra.mxu0 %v1404
    %1426 = vmatpush.bf16.msra.mxu0 %v1403
    %1427 = vmatmul.bf16.gmra.mxu0 %v1408
    %v1428 = vpop.f32.mrf.mxu0
    %v1429 = vadd.f32 0.0, %v1428
    %v1430 = vpop.f32.mrf.mxu0
    %v1431 = vadd.f32 0.0, %v1430
    %1432 = vmatmul.bf16.gmra.mxu0 %v1411
    %v1433 = vpop.f32.mrf.mxu0
    %v1434 = vadd.f32 0.0, %v1433
    %v1435 = vpop.f32.mrf.mxu0
    %v1436 = vadd.f32 0.0, %v1435
    %1437 = vmatmul.bf16.gmra.mxu0 %v1414
    %v1438 = vpop.f32.mrf.mxu0
    %v1439 = vadd.f32 0.0, %v1438
    %v1440 = vpop.f32.mrf.mxu0
    %v1441 = vadd.f32 0.0, %v1440
    %1442 = vmatmul.bf16.gmra.mxu0 %v1417
    %v1443 = vpop.f32.mrf.mxu0
    %v1444 = vadd.f32 0.0, %v1443
    %v1445 = vpop.f32.mrf.mxu0
    %v1446 = vadd.f32 0.0, %v1445
    %1447 = vdwg.mxu0
    %v1448 = vadd.f32 %v1347, %v1429
    %v1449 = vadd.f32 %v1348, %v1431
    %v1450 = vadd.f32 %v1349, %v1434
    %v1451 = vadd.f32 %v1350, %v1436
    %v1452 = vadd.f32 %v1351, %v1439
    %v1453 = vadd.f32 %v1352, %v1441
    %v1454 = vadd.f32 %v1353, %v1444
    %v1455 = vadd.f32 %v1354, %v1446
    %v1456 = vld [vmem:[%s15 + $0x6] ss:$0 sm:$0xff]
    %v1457 = vmul.f32 %v1448, %v1456
    %v1458 = vmul.f32 %v1449, %v1456
    %v1459 = vmul.f32 %v1450, %v1456
    %v1460 = vmul.f32 %v1451, %v1456
    %v1461 = vmul.f32 %v1452, %v1456
    %v1462 = vmul.f32 %v1453, %v1456
    %v1463 = vmul.f32 %v1454, %v1456
    %v1464 = vmul.f32 %v1455, %v1456
    %v1465 = vld [vmem:[%s15 + $0x7] ss:$0 sm:$0xff]
    %v1466 = vadd.f32 %v1457, %v1465
    %v1467 = vadd.f32 %v1458, %v1465
    %v1468 = vadd.f32 %v1459, %v1465
    %v1469 = vadd.f32 %v1460, %v1465
    %v1470 = vadd.f32 %v1461, %v1465
    %v1471 = vadd.f32 %v1462, %v1465
    %v1472 = vadd.f32 %v1463, %v1465
    %v1473 = vadd.f32 %v1464, %v1465
    %v1474 = vmax.f32 %v1466, 0.0
    %v1475 = vmax.f32 %v1467, 0.0
    %v1476 = vmax.f32 %v1468, 0.0
    %v1477 = vmax.f32 %v1469, 0.0
    %v1478 = vmax.f32 %v1470, 0.0
    %v1479 = vmax.f32 %v1471, 0.0
    %v1480 = vmax.f32 %v1472, 0.0
    %v1481 = vmax.f32 %v1473, 0.0
    %vm1482 = vcmask 523264
    %1483 = vst.msk [vmem:[#allocation3 + $0x8] sm:$0xff] %vm1482, %v1474
    %1484 = vst.msk [vmem:[#allocation3 + $0x10] sm:$0xff] %vm1482, %v1475
    %1485 = vst.msk [vmem:[#allocation3 + $0x18] sm:$0xff] %vm1482, %v1476
    %1486 = vst.msk [vmem:[#allocation3 + $0x20] sm:$0xff] %vm1482, %v1477
    %1487 = vst.msk [vmem:[#allocation3 + $0x28] sm:$0xff] %vm1482, %v1478
    %1488 = vst.msk [vmem:[#allocation3 + $0x30] sm:$0xff] %vm1482, %v1479
    %1489 = vst.msk [vmem:[#allocation3 + $0x38] sm:$0xff] %vm1482, %v1480
    %1490 = vst.msk [vmem:[#allocation3 + $0x40] sm:$0xff] %vm1482, %v1481
    %s1491 = scalar_lea.vmem [#allocation3], 8
    %v1492 = vld [vmem:[%s1491] ss:$2 sm:$0xff]
    %s1493 = scalar_lea.vmem [#allocation3], 24
    %v1494 = vld [vmem:[%s1493] ss:$2 sm:$0xff]
    %s1495 = scalar_lea.vmem [#allocation3], 40
    %v1496 = vld [vmem:[%s1495] ss:$2 sm:$0xff]
    %s1497 = scalar_lea.vmem [#allocation3], 56
    %v1498 = vld [vmem:[%s1497] ss:$2 sm:$0xff]
    %s1499 = scalar_lea.vmem [#allocation3], 9
    %v1500 = vld [vmem:[%s1499] ss:$2 sm:$0xff]
    %s1501 = scalar_lea.vmem [#allocation3], 25
    %v1502 = vld [vmem:[%s1501] ss:$2 sm:$0xff]
    %s1503 = scalar_lea.vmem [#allocation3], 41
    %v1504 = vld [vmem:[%s1503] ss:$2 sm:$0xff]
    %s1505 = scalar_lea.vmem [#allocation3], 57
    %v1506 = vld [vmem:[%s1505] ss:$2 sm:$0xff]
    %v1507 = vmax.f32 %v1492, %v1500
    %v1508 = vmax.f32 %v1494, %v1502
    %v1509 = vmax.f32 %v1496, %v1504
    %v1510 = vmax.f32 %v1498, %v1506
    %v1511 = vand.u32 %v301, 15
    %v1512 = vand.u32 %v302, 15
    %v1513 = vand.u32 %v303, 15
    %v1514 = vand.u32 %v304, 15
    %v1515 = vadd.s32 %v1511, 4294967294
    %v1516 = vadd.s32 %v1512, 4294967294
    %v1517 = vadd.s32 %v1513, 4294967294
    %v1518 = vadd.s32 %v1514, 4294967294
    %vm1519 = vcmp.ge.s32.totalorder %v1515, 0
    %vm1520 = vcmp.ge.s32.totalorder %v1516, 0
    %vm1521 = vcmp.ge.s32.totalorder %v1517, 0
    %vm1522 = vcmp.ge.s32.totalorder %v1518, 0
    %vm1523 = vcmp.lt.s32.totalorder %v1515, 16
    %vm1524 = vcmp.lt.s32.totalorder %v1516, 16
    %vm1525 = vcmp.lt.s32.totalorder %v1517, 16
    %vm1526 = vcmp.lt.s32.totalorder %v1518, 16
    %vm1527 = vmand %vm1519, %vm1523
    %vm1528 = vmand %vm1520, %vm1524
    %vm1529 = vmand %vm1521, %vm1525
    %vm1530 = vmand %vm1522, %vm1526
    %v1531 = vadd.s32 %v1511, 4294967295
    %v1532 = vadd.s32 %v1512, 4294967295
    %v1533 = vadd.s32 %v1513, 4294967295
    %v1534 = vadd.s32 %v1514, 4294967295
    %vm1535 = vcmp.ge.s32.totalorder %v1531, 0
    %vm1536 = vcmp.ge.s32.totalorder %v1532, 0
    %vm1537 = vcmp.ge.s32.totalorder %v1533, 0
    %vm1538 = vcmp.ge.s32.totalorder %v1534, 0
    %vm1539 = vcmp.lt.s32.totalorder %v1531, 16
    %vm1540 = vcmp.lt.s32.totalorder %v1532, 16
    %vm1541 = vcmp.lt.s32.totalorder %v1533, 16
    %vm1542 = vcmp.lt.s32.totalorder %v1534, 16
    %vm1543 = vmand %vm1535, %vm1539
    %vm1544 = vmand %vm1536, %vm1540
    %vm1545 = vmand %vm1537, %vm1541
    %vm1546 = vmand %vm1538, %vm1542
    %v1547 = vadd.s32 %v1511, 1
    %v1548 = vadd.s32 %v1512, 1
    %v1549 = vadd.s32 %v1513, 1
    %v1550 = vadd.s32 %v1514, 1
    %vm1551 = vcmp.ge.s32.totalorder %v1547, 0
    %vm1552 = vcmp.ge.s32.totalorder %v1548, 0
    %vm1553 = vcmp.ge.s32.totalorder %v1549, 0
    %vm1554 = vcmp.ge.s32.totalorder %v1550, 0
    %vm1555 = vcmp.lt.s32.totalorder %v1547, 16
    %vm1556 = vcmp.lt.s32.totalorder %v1548, 16
    %vm1557 = vcmp.lt.s32.totalorder %v1549, 16
    %vm1558 = vcmp.lt.s32.totalorder %v1550, 16
    %vm1559 = vmand %vm1551, %vm1555
    %vm1560 = vmand %vm1552, %vm1556
    %vm1561 = vmand %vm1553, %vm1557
    %vm1562 = vmand %vm1554, %vm1558
    %v1563 = vadd.s32 %v1511, 2
    %v1564 = vadd.s32 %v1512, 2
    %v1565 = vadd.s32 %v1513, 2
    %v1566 = vadd.s32 %v1514, 2
    %vm1567 = vcmp.ge.s32.totalorder %v1563, 0
    %vm1568 = vcmp.ge.s32.totalorder %v1564, 0
    %vm1569 = vcmp.ge.s32.totalorder %v1565, 0
    %vm1570 = vcmp.ge.s32.totalorder %v1566, 0
    %vm1571 = vcmp.lt.s32.totalorder %v1563, 16
    %vm1572 = vcmp.lt.s32.totalorder %v1564, 16
    %vm1573 = vcmp.lt.s32.totalorder %v1565, 16
    %vm1574 = vcmp.lt.s32.totalorder %v1566, 16
    %vm1575 = vmand %vm1567, %vm1571
    %vm1576 = vmand %vm1568, %vm1572
    %vm1577 = vmand %vm1569, %vm1573
    %vm1578 = vmand %vm1570, %vm1574
    %1579 = vst.msk [vmem:[#allocation3 + $0x8] sm:$0xff] %vm1482, %v1507
    %1580 = vst.msk [vmem:[#allocation3 + $0x10] sm:$0xff] %vm1482, %v1508
    %1581 = vst.msk [vmem:[#allocation3 + $0x18] sm:$0xff] %vm1482, %v1509
    %1582 = vst.msk [vmem:[#allocation3 + $0x20] sm:$0xff] %vm1482, %v1510
    %v1583 = vld [vmem:[#allocation3 + $0x7] sm:$0xff]
    %v1584 = vld [vmem:[#allocation3 + $0xf] sm:$0xff]
    %v1585 = vld [vmem:[#allocation3 + $0x17] sm:$0xff]
    %v1586 = vld [vmem:[#allocation3 + $0x1f] sm:$0xff]
    %v1587 = vsel %vm1543, 1, 0
    %v1588 = vsel %vm1544, 1, 0
    %v1589 = vsel %vm1545, 1, 0
    %v1590 = vsel %vm1546, 1, 0
    %vm1591 = vcmp.eq.s32.totalorder %v1587, 1
    %vm1592 = vcmp.eq.s32.totalorder %v1588, 1
    %vm1593 = vcmp.eq.s32.totalorder %v1589, 1
    %vm1594 = vcmp.eq.s32.totalorder %v1590, 1
    %v1595 = vsel %vm1591, %v1583, 0.0
    %v1596 = vsel %vm1592, %v1584, 0.0
    %v1597 = vsel %vm1593, %v1585, 0.0
    %v1598 = vsel %vm1594, %v1586, 0.0
    %v1599 = vpack.c.bf16 %v1596, %v1595
    %v1600 = vpack.c.bf16 %v1598, %v1597
    %v1601 = vld [vmem:[%s5] sm:$0xf]
    %v1602 = vld [vmem:[%s5 + $0x4] sm:$0xf]
    %v1603 = vld [vmem:[%s5 + $0x8] sm:$0xf]
    %v1604 = vld [vmem:[%s5 + $0xc] sm:$0xf]
    %v1605 = vld [vmem:[%s5 + $0x10] sm:$0xf]
    %v1606 = vld [vmem:[%s5 + $0x14] sm:$0xf]
    %v1607 = vld [vmem:[%s5 + $0x18] sm:$0xf]
    %v1608 = vld [vmem:[%s5 + $0x1c] sm:$0xf]
    %v1609 = vld [vmem:[#allocation3 + $0x8] sm:$0xff]
    %v1610 = vld [vmem:[#allocation3 + $0x10] sm:$0xff]
    %v1611 = vld [vmem:[#allocation3 + $0x18] sm:$0xff]
    %v1612 = vld [vmem:[#allocation3 + $0x20] sm:$0xff]
    %v1613 = vpack.c.bf16 %v1610, %v1609
    %v1614 = vpack.c.bf16 %v1612, %v1611
    %v1615 = vld [vmem:[%s5 + $0x20] sm:$0xf]
    %v1616 = vld [vmem:[%s5 + $0x24] sm:$0xf]
    %v1617 = vld [vmem:[%s5 + $0x28] sm:$0xf]
    %v1618 = vld [vmem:[%s5 + $0x2c] sm:$0xf]
    %v1619 = vld [vmem:[%s5 + $0x30] sm:$0xf]
    %v1620 = vld [vmem:[%s5 + $0x34] sm:$0xf]
    %v1621 = vld [vmem:[%s5 + $0x38] sm:$0xf]
    %v1622 = vld [vmem:[%s5 + $0x3c] sm:$0xf]
    %v1631 = vunpack.c.l.b16 %v1615
    %v1632 = vunpack.c.l.b16 %v1616
    %v1633 = vunpack.c.l.b16 %v1617
    %v1634 = vunpack.c.l.b16 %v1618
    %v1635 = vunpack.c.l.b16 %v1619
    %v1636 = vunpack.c.l.b16 %v1620
    %v1637 = vunpack.c.l.b16 %v1621
    %v1638 = vunpack.c.l.b16 %v1622
    %v1639 = vpack.c.b16 %v1632, %v1631
    %v1640 = vpack.c.b16 %v1634, %v1633
    %v1641 = vpack.c.b16 %v1636, %v1635
    %v1642 = vpack.c.b16 %v1638, %v1637
    %v1648 = vsel %vm1482, %v1613, 0
    %v1651 = vsel %vm1482, %v1614, 0
    %1653 = vmatpush.bf16.msra.mxu0 0
    %1654 = vmatpush.bf16.msra.mxu0 0
    %1655 = vmatpush.bf16.msra.mxu0 0
    %1656 = vmatpush.bf16.msra.mxu0 0
    %1657 = vmatpush.bf16.msra.mxu0 %v1642
    %1658 = vmatpush.bf16.msra.mxu0 %v1641
    %1659 = vmatpush.bf16.msra.mxu0 %v1640
    %1660 = vmatpush.bf16.msra.mxu0 %v1639
    %1661 = vmatmul.bf16.gmra.mxu0 %v1648
    %v1662 = vpop.f32.mrf.mxu0
    %v1663 = vadd.f32 0.0, %v1662
    %v1664 = vpop.f32.mrf.mxu0
    %v1665 = vadd.f32 0.0, %v1664
    %1666 = vmatmul.bf16.gmra.mxu0 %v1651
    %v1667 = vpop.f32.mrf.mxu0
    %v1668 = vadd.f32 0.0, %v1667
    %v1669 = vpop.f32.mrf.mxu0
    %v1670 = vadd.f32 0.0, %v1669
    %1671 = vdwg.mxu0
    %v1680 = vunpack.c.l.b16 %v1601
    %v1681 = vunpack.c.l.b16 %v1602
    %v1682 = vunpack.c.l.b16 %v1603
    %v1683 = vunpack.c.l.b16 %v1604
    %v1684 = vunpack.c.l.b16 %v1605
    %v1685 = vunpack.c.l.b16 %v1606
    %v1686 = vunpack.c.l.b16 %v1607
    %v1687 = vunpack.c.l.b16 %v1608
    %v1688 = vpack.c.b16 %v1681, %v1680
    %v1689 = vpack.c.b16 %v1683, %v1682
    %v1690 = vpack.c.b16 %v1685, %v1684
    %v1691 = vpack.c.b16 %v1687, %v1686
    %v1697 = vsel %vm1482, %v1599, 0
    %v1700 = vsel %vm1482, %v1600, 0
    %1702 = vmatpush.bf16.msra.mxu0 0
    %1703 = vmatpush.bf16.msra.mxu0 0
    %1704 = vmatpush.bf16.msra.mxu0 0
    %1705 = vmatpush.bf16.msra.mxu0 0
    %1706 = vmatpush.bf16.msra.mxu0 %v1691
    %1707 = vmatpush.bf16.msra.mxu0 %v1690
    %1708 = vmatpush.bf16.msra.mxu0 %v1689
    %1709 = vmatpush.bf16.msra.mxu0 %v1688
    %1710 = vmatmul.bf16.gmra.mxu0 %v1697
    %v1711 = vpop.f32.mrf.mxu0
    %v1712 = vadd.f32 %v1663, %v1711
    %v1713 = vpop.f32.mrf.mxu0
    %v1714 = vadd.f32 %v1665, %v1713
    %1715 = vmatmul.bf16.gmra.mxu0 %v1700
    %v1716 = vpop.f32.mrf.mxu0
    %v1717 = vadd.f32 %v1668, %v1716
    %v1718 = vpop.f32.mrf.mxu0
    %v1719 = vadd.f32 %v1670, %v1718
    %1720 = vdwg.mxu0
    %v1721 = vld [vmem:[#allocation3 + $0x9] sm:$0xff]
    %v1722 = vld [vmem:[#allocation3 + $0x11] sm:$0xff]
    %v1723 = vld [vmem:[#allocation3 + $0x19] sm:$0xff]
    %v1724 = vld [vmem:[#allocation3 + $0x21] sm:$0xff]
    %v1725 = vsel %vm1559, 1, 0
    %v1726 = vsel %vm1560, 1, 0
    %v1727 = vsel %vm1561, 1, 0
    %v1728 = vsel %vm1562, 1, 0
    %vm1729 = vcmp.eq.s32.totalorder %v1725, 1
    %vm1730 = vcmp.eq.s32.totalorder %v1726, 1
    %vm1731 = vcmp.eq.s32.totalorder %v1727, 1
    %vm1732 = vcmp.eq.s32.totalorder %v1728, 1
    %v1733 = vsel %vm1729, %v1721, 0.0
    %v1734 = vsel %vm1730, %v1722, 0.0
    %v1735 = vsel %vm1731, %v1723, 0.0
    %v1736 = vsel %vm1732, %v1724, 0.0
    %v1737 = vpack.c.bf16 %v1734, %v1733
    %v1738 = vpack.c.bf16 %v1736, %v1735
    %v1739 = vld [vmem:[%s5 + $0x40] sm:$0xf]
    %v1740 = vld [vmem:[%s5 + $0x44] sm:$0xf]
    %v1741 = vld [vmem:[%s5 + $0x48] sm:$0xf]
    %v1742 = vld [vmem:[%s5 + $0x4c] sm:$0xf]
    %v1743 = vld [vmem:[%s5 + $0x50] sm:$0xf]
    %v1744 = vld [vmem:[%s5 + $0x54] sm:$0xf]
    %v1745 = vld [vmem:[%s5 + $0x58] sm:$0xf]
    %v1746 = vld [vmem:[%s5 + $0x5c] sm:$0xf]
    %v1755 = vunpack.c.l.b16 %v1739
    %v1756 = vunpack.c.l.b16 %v1740
    %v1757 = vunpack.c.l.b16 %v1741
    %v1758 = vunpack.c.l.b16 %v1742
    %v1759 = vunpack.c.l.b16 %v1743
    %v1760 = vunpack.c.l.b16 %v1744
    %v1761 = vunpack.c.l.b16 %v1745
    %v1762 = vunpack.c.l.b16 %v1746
    %v1763 = vpack.c.b16 %v1756, %v1755
    %v1764 = vpack.c.b16 %v1758, %v1757
    %v1765 = vpack.c.b16 %v1760, %v1759
    %v1766 = vpack.c.b16 %v1762, %v1761
    %v1772 = vsel %vm1482, %v1737, 0
    %v1775 = vsel %vm1482, %v1738, 0
    %1777 = vmatpush.bf16.msra.mxu0 0
    %1778 = vmatpush.bf16.msra.mxu0 0
    %1779 = vmatpush.bf16.msra.mxu0 0
    %1780 = vmatpush.bf16.msra.mxu0 0
    %1781 = vmatpush.bf16.msra.mxu0 %v1766
    %1782 = vmatpush.bf16.msra.mxu0 %v1765
    %1783 = vmatpush.bf16.msra.mxu0 %v1764
    %1784 = vmatpush.bf16.msra.mxu0 %v1763
    %1785 = vmatmul.bf16.gmra.mxu0 %v1772
    %v1786 = vpop.f32.mrf.mxu0
    %v1787 = vadd.f32 0.0, %v1786
    %v1788 = vpop.f32.mrf.mxu0
    %v1789 = vadd.f32 0.0, %v1788
    %1790 = vmatmul.bf16.gmra.mxu0 %v1775
    %v1791 = vpop.f32.mrf.mxu0
    %v1792 = vadd.f32 0.0, %v1791
    %v1793 = vpop.f32.mrf.mxu0
    %v1794 = vadd.f32 0.0, %v1793
    %1795 = vdwg.mxu0
    %v1796 = vadd.f32 %v1712, %v1787
    %v1797 = vadd.f32 %v1714, %v1789
    %v1798 = vadd.f32 %v1717, %v1792
    %v1799 = vadd.f32 %v1719, %v1794
    %v1800 = vld [vmem:[%s15 + $0x10] ss:$0 sm:$0xff]
    %v1801 = vmul.f32 %v1796, %v1800
    %v1802 = vmul.f32 %v1797, %v1800
    %v1803 = vmul.f32 %v1798, %v1800
    %v1804 = vmul.f32 %v1799, %v1800
    %v1805 = vld [vmem:[%s15 + $0x11] ss:$0 sm:$0xff]
    %v1806 = vadd.f32 %v1801, %v1805
    %v1807 = vadd.f32 %v1802, %v1805
    %v1808 = vadd.f32 %v1803, %v1805
    %v1809 = vadd.f32 %v1804, %v1805
    %v1810 = vmax.f32 %v1806, 0.0
    %v1811 = vmax.f32 %v1807, 0.0
    %v1812 = vmax.f32 %v1808, 0.0
    %v1813 = vmax.f32 %v1809, 0.0
    %1814 = vst.msk [vmem:[#allocation3 + $0x8] sm:$0xff] %vm1482, %v1810
    %1815 = vst.msk [vmem:[#allocation3 + $0x10] sm:$0xff] %vm1482, %v1811
    %1816 = vst.msk [vmem:[#allocation3 + $0x18] sm:$0xff] %vm1482, %v1812
    %1817 = vst.msk [vmem:[#allocation3 + $0x20] sm:$0xff] %vm1482, %v1813
    %v1818 = vld [vmem:[#allocation3 + $0x7] sm:$0xff]
    %v1819 = vld [vmem:[#allocation3 + $0xf] sm:$0xff]
    %v1820 = vld [vmem:[#allocation3 + $0x17] sm:$0xff]
    %v1821 = vld [vmem:[#allocation3 + $0x1f] sm:$0xff]
    %v1822 = vsel %vm1591, %v1818, 0.0
    %v1823 = vsel %vm1592, %v1819, 0.0
    %v1824 = vsel %vm1593, %v1820, 0.0
    %v1825 = vsel %vm1594, %v1821, 0.0
    %v1826 = vpack.c.bf16 %v1823, %v1822
    %v1827 = vpack.c.bf16 %v1825, %v1824
    %v1828 = vld [vmem:[%s6] sm:$0xf]
    %v1829 = vld [vmem:[%s6 + $0x4] sm:$0xf]
    %v1830 = vld [vmem:[%s6 + $0x8] sm:$0xf]
    %v1831 = vld [vmem:[%s6 + $0xc] sm:$0xf]
    %v1832 = vld [vmem:[%s6 + $0x10] sm:$0xf]
    %v1833 = vld [vmem:[%s6 + $0x14] sm:$0xf]
    %v1834 = vld [vmem:[%s6 + $0x18] sm:$0xf]
    %v1835 = vld [vmem:[%s6 + $0x1c] sm:$0xf]
    %v1836 = vld [vmem:[#allocation3 + $0x8] sm:$0xff]
    %v1837 = vld [vmem:[#allocation3 + $0x10] sm:$0xff]
    %v1838 = vld [vmem:[#allocation3 + $0x18] sm:$0xff]
    %v1839 = vld [vmem:[#allocation3 + $0x20] sm:$0xff]
    %v1840 = vpack.c.bf16 %v1837, %v1836
    %v1841 = vpack.c.bf16 %v1839, %v1838
    %v1842 = vld [vmem:[%s6 + $0x20] sm:$0xf]
    %v1843 = vld [vmem:[%s6 + $0x24] sm:$0xf]
    %v1844 = vld [vmem:[%s6 + $0x28] sm:$0xf]
    %v1845 = vld [vmem:[%s6 + $0x2c] sm:$0xf]
    %v1846 = vld [vmem:[%s6 + $0x30] sm:$0xf]
    %v1847 = vld [vmem:[%s6 + $0x34] sm:$0xf]
    %v1848 = vld [vmem:[%s6 + $0x38] sm:$0xf]
    %v1849 = vld [vmem:[%s6 + $0x3c] sm:$0xf]
    %v1858 = vunpack.c.l.b16 %v1842
    %v1859 = vunpack.c.l.b16 %v1843
    %v1860 = vunpack.c.l.b16 %v1844
    %v1861 = vunpack.c.l.b16 %v1845
    %v1862 = vunpack.c.l.b16 %v1846
    %v1863 = vunpack.c.l.b16 %v1847
    %v1864 = vunpack.c.l.b16 %v1848
    %v1865 = vunpack.c.l.b16 %v1849
    %v1866 = vpack.c.b16 %v1859, %v1858
    %v1867 = vpack.c.b16 %v1861, %v1860
    %v1868 = vpack.c.b16 %v1863, %v1862
    %v1869 = vpack.c.b16 %v1865, %v1864
    %v1875 = vsel %vm1482, %v1840, 0
    %v1878 = vsel %vm1482, %v1841, 0
    %1880 = vmatpush.bf16.msra.mxu0 0
    %1881 = vmatpush.bf16.msra.mxu0 0
    %1882 = vmatpush.bf16.msra.mxu0 0
    %1883 = vmatpush.bf16.msra.mxu0 0
    %1884 = vmatpush.bf16.msra.mxu0 %v1869
    %1885 = vmatpush.bf16.msra.mxu0 %v1868
    %1886 = vmatpush.bf16.msra.mxu0 %v1867
    %1887 = vmatpush.bf16.msra.mxu0 %v1866
    %1888 = vmatmul.bf16.gmra.mxu0 %v1875
    %v1889 = vpop.f32.mrf.mxu0
    %v1890 = vadd.f32 0.0, %v1889
    %v1891 = vpop.f32.mrf.mxu0
    %v1892 = vadd.f32 0.0, %v1891
    %1893 = vmatmul.bf16.gmra.mxu0 %v1878
    %v1894 = vpop.f32.mrf.mxu0
    %v1895 = vadd.f32 0.0, %v1894
    %v1896 = vpop.f32.mrf.mxu0
    %v1897 = vadd.f32 0.0, %v1896
    %1898 = vdwg.mxu0
    %v1907 = vunpack.c.l.b16 %v1828
    %v1908 = vunpack.c.l.b16 %v1829
    %v1909 = vunpack.c.l.b16 %v1830
    %v1910 = vunpack.c.l.b16 %v1831
    %v1911 = vunpack.c.l.b16 %v1832
    %v1912 = vunpack.c.l.b16 %v1833
    %v1913 = vunpack.c.l.b16 %v1834
    %v1914 = vunpack.c.l.b16 %v1835
    %v1915 = vpack.c.b16 %v1908, %v1907
    %v1916 = vpack.c.b16 %v1910, %v1909
    %v1917 = vpack.c.b16 %v1912, %v1911
    %v1918 = vpack.c.b16 %v1914, %v1913
    %v1924 = vsel %vm1482, %v1826, 0
    %v1927 = vsel %vm1482, %v1827, 0
    %1929 = vmatpush.bf16.msra.mxu0 0
    %1930 = vmatpush.bf16.msra.mxu0 0
    %1931 = vmatpush.bf16.msra.mxu0 0
    %1932 = vmatpush.bf16.msra.mxu0 0
    %1933 = vmatpush.bf16.msra.mxu0 %v1918
    %1934 = vmatpush.bf16.msra.mxu0 %v1917
    %1935 = vmatpush.bf16.msra.mxu0 %v1916
    %1936 = vmatpush.bf16.msra.mxu0 %v1915
    %1937 = vmatmul.bf16.gmra.mxu0 %v1924
    %v1938 = vpop.f32.mrf.mxu0
    %v1939 = vadd.f32 %v1890, %v1938
    %v1940 = vpop.f32.mrf.mxu0
    %v1941 = vadd.f32 %v1892, %v1940
    %1942 = vmatmul.bf16.gmra.mxu0 %v1927
    %v1943 = vpop.f32.mrf.mxu0
    %v1944 = vadd.f32 %v1895, %v1943
    %v1945 = vpop.f32.mrf.mxu0
    %v1946 = vadd.f32 %v1897, %v1945
    %1947 = vdwg.mxu0
    %v1948 = vld [vmem:[#allocation3 + $0x9] sm:$0xff]
    %v1949 = vld [vmem:[#allocation3 + $0x11] sm:$0xff]
    %v1950 = vld [vmem:[#allocation3 + $0x19] sm:$0xff]
    %v1951 = vld [vmem:[#allocation3 + $0x21] sm:$0xff]
    %v1952 = vsel %vm1729, %v1948, 0.0
    %v1953 = vsel %vm1730, %v1949, 0.0
    %v1954 = vsel %vm1731, %v1950, 0.0
    %v1955 = vsel %vm1732, %v1951, 0.0
    %v1956 = vpack.c.bf16 %v1953, %v1952
    %v1957 = vpack.c.bf16 %v1955, %v1954
    %v1958 = vld [vmem:[%s6 + $0x40] sm:$0xf]
    %v1959 = vld [vmem:[%s6 + $0x44] sm:$0xf]
    %v1960 = vld [vmem:[%s6 + $0x48] sm:$0xf]
    %v1961 = vld [vmem:[%s6 + $0x4c] sm:$0xf]
    %v1962 = vld [vmem:[%s6 + $0x50] sm:$0xf]
    %v1963 = vld [vmem:[%s6 + $0x54] sm:$0xf]
    %v1964 = vld [vmem:[%s6 + $0x58] sm:$0xf]
    %v1965 = vld [vmem:[%s6 + $0x5c] sm:$0xf]
    %v1974 = vunpack.c.l.b16 %v1958
    %v1975 = vunpack.c.l.b16 %v1959
    %v1976 = vunpack.c.l.b16 %v1960
    %v1977 = vunpack.c.l.b16 %v1961
    %v1978 = vunpack.c.l.b16 %v1962
    %v1979 = vunpack.c.l.b16 %v1963
    %v1980 = vunpack.c.l.b16 %v1964
    %v1981 = vunpack.c.l.b16 %v1965
    %v1982 = vpack.c.b16 %v1975, %v1974
    %v1983 = vpack.c.b16 %v1977, %v1976
    %v1984 = vpack.c.b16 %v1979, %v1978
    %v1985 = vpack.c.b16 %v1981, %v1980
    %v1991 = vsel %vm1482, %v1956, 0
    %v1994 = vsel %vm1482, %v1957, 0
    %1996 = vmatpush.bf16.msra.mxu0 0
    %1997 = vmatpush.bf16.msra.mxu0 0
    %1998 = vmatpush.bf16.msra.mxu0 0
    %1999 = vmatpush.bf16.msra.mxu0 0
    %2000 = vmatpush.bf16.msra.mxu0 %v1985
    %2001 = vmatpush.bf16.msra.mxu0 %v1984
    %2002 = vmatpush.bf16.msra.mxu0 %v1983
    %2003 = vmatpush.bf16.msra.mxu0 %v1982
    %2004 = vmatmul.bf16.gmra.mxu0 %v1991
    %v2005 = vpop.f32.mrf.mxu0
    %v2006 = vadd.f32 0.0, %v2005
    %v2007 = vpop.f32.mrf.mxu0
    %v2008 = vadd.f32 0.0, %v2007
    %2009 = vmatmul.bf16.gmra.mxu0 %v1994
    %v2010 = vpop.f32.mrf.mxu0
    %v2011 = vadd.f32 0.0, %v2010
    %v2012 = vpop.f32.mrf.mxu0
    %v2013 = vadd.f32 0.0, %v2012
    %2014 = vdwg.mxu0
    %v2015 = vadd.f32 %v1939, %v2006
    %v2016 = vadd.f32 %v1941, %v2008
    %v2017 = vadd.f32 %v1944, %v2011
    %v2018 = vadd.f32 %v1946, %v2013
    %v2019 = vld [vmem:[%s15 + $0x12] ss:$0 sm:$0xff]
    %v2020 = vmul.f32 %v2015, %v2019
    %v2021 = vmul.f32 %v2016, %v2019
    %v2022 = vmul.f32 %v2017, %v2019
    %v2023 = vmul.f32 %v2018, %v2019
    %v2024 = vld [vmem:[%s15 + $0x13] ss:$0 sm:$0xff]
    %v2025 = vadd.f32 %v2020, %v2024
    %v2026 = vadd.f32 %v2021, %v2024
    %v2027 = vadd.f32 %v2022, %v2024
    %v2028 = vadd.f32 %v2023, %v2024
    %v2029 = vadd.f32 %v2025, %v1507
    %v2030 = vadd.f32 %v2026, %v1508
    %v2031 = vadd.f32 %v2027, %v1509
    %v2032 = vadd.f32 %v2028, %v1510
    %v2033 = vmax.f32 %v2029, 0.0
    %v2034 = vmax.f32 %v2030, 0.0
    %v2035 = vmax.f32 %v2031, 0.0
    %v2036 = vmax.f32 %v2032, 0.0
    %2037 = vst.msk [vmem:[#allocation3 + $0x8] sm:$0xff] %vm1482, %v2033
    %2038 = vst.msk [vmem:[#allocation3 + $0x10] sm:$0xff] %vm1482, %v2034
    %2039 = vst.msk [vmem:[#allocation3 + $0x18] sm:$0xff] %vm1482, %v2035
    %2040 = vst.msk [vmem:[#allocation3 + $0x20] sm:$0xff] %vm1482, %v2036
    %v2041 = vld [vmem:[#allocation3 + $0x6] sm:$0xff]
    %v2042 = vld [vmem:[#allocation3 + $0xe] sm:$0xff]
    %v2043 = vld [vmem:[#allocation3 + $0x16] sm:$0xff]
    %v2044 = vld [vmem:[#allocation3 + $0x1e] sm:$0xff]
    %v2045 = vsel %vm1527, 1, 0
    %v2046 = vsel %vm1528, 1, 0
    %v2047 = vsel %vm1529, 1, 0
    %v2048 = vsel %vm1530, 1, 0
    %vm2049 = vcmp.eq.s32.totalorder %v2045, 1
    %vm2050 = vcmp.eq.s32.totalorder %v2046, 1
    %vm2051 = vcmp.eq.s32.totalorder %v2047, 1
    %vm2052 = vcmp.eq.s32.totalorder %v2048, 1
    %v2053 = vsel %vm2049, %v2041, 0.0
    %v2054 = vsel %vm2050, %v2042, 0.0
    %v2055 = vsel %vm2051, %v2043, 0.0
    %v2056 = vsel %vm2052, %v2044, 0.0
    %v2057 = vpack.c.bf16 %v2054, %v2053
    %v2058 = vpack.c.bf16 %v2056, %v2055
    %v2059 = vld [vmem:[%s7] sm:$0xf]
    %v2060 = vld [vmem:[%s7 + $0x4] sm:$0xf]
    %v2061 = vld [vmem:[%s7 + $0x8] sm:$0xf]
    %v2062 = vld [vmem:[%s7 + $0xc] sm:$0xf]
    %v2063 = vld [vmem:[%s7 + $0x10] sm:$0xf]
    %v2064 = vld [vmem:[%s7 + $0x14] sm:$0xf]
    %v2065 = vld [vmem:[%s7 + $0x18] sm:$0xf]
    %v2066 = vld [vmem:[%s7 + $0x1c] sm:$0xf]
    %v2067 = vld [vmem:[#allocation3 + $0x7] sm:$0xff]
    %v2068 = vld [vmem:[#allocation3 + $0xf] sm:$0xff]
    %v2069 = vld [vmem:[#allocation3 + $0x17] sm:$0xff]
    %v2070 = vld [vmem:[#allocation3 + $0x1f] sm:$0xff]
    %v2071 = vsel %vm1591, %v2067, 0.0
    %v2072 = vsel %vm1592, %v2068, 0.0
    %v2073 = vsel %vm1593, %v2069, 0.0
    %v2074 = vsel %vm1594, %v2070, 0.0
    %v2075 = vpack.c.bf16 %v2072, %v2071
    %v2076 = vpack.c.bf16 %v2074, %v2073
    %v2077 = vld [vmem:[%s7 + $0x20] sm:$0xf]
    %v2078 = vld [vmem:[%s7 + $0x24] sm:$0xf]
    %v2079 = vld [vmem:[%s7 + $0x28] sm:$0xf]
    %v2080 = vld [vmem:[%s7 + $0x2c] sm:$0xf]
    %v2081 = vld [vmem:[%s7 + $0x30] sm:$0xf]
    %v2082 = vld [vmem:[%s7 + $0x34] sm:$0xf]
    %v2083 = vld [vmem:[%s7 + $0x38] sm:$0xf]
    %v2084 = vld [vmem:[%s7 + $0x3c] sm:$0xf]
    %v2093 = vunpack.c.l.b16 %v2077
    %v2094 = vunpack.c.l.b16 %v2078
    %v2095 = vunpack.c.l.b16 %v2079
    %v2096 = vunpack.c.l.b16 %v2080
    %v2097 = vunpack.c.l.b16 %v2081
    %v2098 = vunpack.c.l.b16 %v2082
    %v2099 = vunpack.c.l.b16 %v2083
    %v2100 = vunpack.c.l.b16 %v2084
    %v2101 = vpack.c.b16 %v2094, %v2093
    %v2102 = vpack.c.b16 %v2096, %v2095
    %v2103 = vpack.c.b16 %v2098, %v2097
    %v2104 = vpack.c.b16 %v2100, %v2099
    %v2110 = vsel %vm1482, %v2075, 0
    %v2113 = vsel %vm1482, %v2076, 0
    %2115 = vmatpush.bf16.msra.mxu0 0
    %2116 = vmatpush.bf16.msra.mxu0 0
    %2117 = vmatpush.bf16.msra.mxu0 0
    %2118 = vmatpush.bf16.msra.mxu0 0
    %2119 = vmatpush.bf16.msra.mxu0 %v2104
    %2120 = vmatpush.bf16.msra.mxu0 %v2103
    %2121 = vmatpush.bf16.msra.mxu0 %v2102
    %2122 = vmatpush.bf16.msra.mxu0 %v2101
    %2123 = vmatmul.bf16.gmra.mxu0 %v2110
    %v2124 = vpop.f32.mrf.mxu0
    %v2125 = vadd.f32 0.0, %v2124
    %v2126 = vpop.f32.mrf.mxu0
    %v2127 = vadd.f32 0.0, %v2126
    %2128 = vmatmul.bf16.gmra.mxu0 %v2113
    %v2129 = vpop.f32.mrf.mxu0
    %v2130 = vadd.f32 0.0, %v2129
    %v2131 = vpop.f32.mrf.mxu0
    %v2132 = vadd.f32 0.0, %v2131
    %2133 = vdwg.mxu0
    %v2142 = vunpack.c.l.b16 %v2059
    %v2143 = vunpack.c.l.b16 %v2060
    %v2144 = vunpack.c.l.b16 %v2061
    %v2145 = vunpack.c.l.b16 %v2062
    %v2146 = vunpack.c.l.b16 %v2063
    %v2147 = vunpack.c.l.b16 %v2064
    %v2148 = vunpack.c.l.b16 %v2065
    %v2149 = vunpack.c.l.b16 %v2066
    %v2150 = vpack.c.b16 %v2143, %v2142
    %v2151 = vpack.c.b16 %v2145, %v2144
    %v2152 = vpack.c.b16 %v2147, %v2146
    %v2153 = vpack.c.b16 %v2149, %v2148
    %v2159 = vsel %vm1482, %v2057, 0
    %v2162 = vsel %vm1482, %v2058, 0
    %2164 = vmatpush.bf16.msra.mxu0 0
    %2165 = vmatpush.bf16.msra.mxu0 0
    %2166 = vmatpush.bf16.msra.mxu0 0
    %2167 = vmatpush.bf16.msra.mxu0 0
    %2168 = vmatpush.bf16.msra.mxu0 %v2153
    %2169 = vmatpush.bf16.msra.mxu0 %v2152
    %2170 = vmatpush.bf16.msra.mxu0 %v2151
    %2171 = vmatpush.bf16.msra.mxu0 %v2150
    %2172 = vmatmul.bf16.gmra.mxu0 %v2159
    %v2173 = vpop.f32.mrf.mxu0
    %v2174 = vadd.f32 %v2125, %v2173
    %v2175 = vpop.f32.mrf.mxu0
    %v2176 = vadd.f32 %v2127, %v2175
    %2177 = vmatmul.bf16.gmra.mxu0 %v2162
    %v2178 = vpop.f32.mrf.mxu0
    %v2179 = vadd.f32 %v2130, %v2178
    %v2180 = vpop.f32.mrf.mxu0
    %v2181 = vadd.f32 %v2132, %v2180
    %2182 = vdwg.mxu0
    %v2183 = vld [vmem:[#allocation3 + $0x8] sm:$0xff]
    %v2184 = vld [vmem:[#allocation3 + $0x10] sm:$0xff]
    %v2185 = vld [vmem:[#allocation3 + $0x18] sm:$0xff]
    %v2186 = vld [vmem:[#allocation3 + $0x20] sm:$0xff]
    %v2187 = vpack.c.bf16 %v2184, %v2183
    %v2188 = vpack.c.bf16 %v2186, %v2185
    %v2189 = vld [vmem:[%s7 + $0x40] sm:$0xf]
    %v2190 = vld [vmem:[%s7 + $0x44] sm:$0xf]
    %v2191 = vld [vmem:[%s7 + $0x48] sm:$0xf]
    %v2192 = vld [vmem:[%s7 + $0x4c] sm:$0xf]
    %v2193 = vld [vmem:[%s7 + $0x50] sm:$0xf]
    %v2194 = vld [vmem:[%s7 + $0x54] sm:$0xf]
    %v2195 = vld [vmem:[%s7 + $0x58] sm:$0xf]
    %v2196 = vld [vmem:[%s7 + $0x5c] sm:$0xf]
    %v2205 = vunpack.c.l.b16 %v2189
    %v2206 = vunpack.c.l.b16 %v2190
    %v2207 = vunpack.c.l.b16 %v2191
    %v2208 = vunpack.c.l.b16 %v2192
    %v2209 = vunpack.c.l.b16 %v2193
    %v2210 = vunpack.c.l.b16 %v2194
    %v2211 = vunpack.c.l.b16 %v2195
    %v2212 = vunpack.c.l.b16 %v2196
    %v2213 = vpack.c.b16 %v2206, %v2205
    %v2214 = vpack.c.b16 %v2208, %v2207
    %v2215 = vpack.c.b16 %v2210, %v2209
    %v2216 = vpack.c.b16 %v2212, %v2211
    %v2222 = vsel %vm1482, %v2187, 0
    %v2225 = vsel %vm1482, %v2188, 0
    %2227 = vmatpush.bf16.msra.mxu0 0
    %2228 = vmatpush.bf16.msra.mxu0 0
    %2229 = vmatpush.bf16.msra.mxu0 0
    %2230 = vmatpush.bf16.msra.mxu0 0
    %2231 = vmatpush.bf16.msra.mxu0 %v2216
    %2232 = vmatpush.bf16.msra.mxu0 %v2215
    %2233 = vmatpush.bf16.msra.mxu0 %v2214
    %2234 = vmatpush.bf16.msra.mxu0 %v2213
    %2235 = vmatmul.bf16.gmra.mxu0 %v2222
    %v2236 = vpop.f32.mrf.mxu0
    %v2237 = vadd.f32 0.0, %v2236
    %v2238 = vpop.f32.mrf.mxu0
    %v2239 = vadd.f32 0.0, %v2238
    %2240 = vmatmul.bf16.gmra.mxu0 %v2225
    %v2241 = vpop.f32.mrf.mxu0
    %v2242 = vadd.f32 0.0, %v2241
    %v2243 = vpop.f32.mrf.mxu0
    %v2244 = vadd.f32 0.0, %v2243
    %2245 = vdwg.mxu0
    %v2246 = vadd.f32 %v2174, %v2237
    %v2247 = vadd.f32 %v2176, %v2239
    %v2248 = vadd.f32 %v2179, %v2242
    %v2249 = vadd.f32 %v2181, %v2244
    %v2250 = vld [vmem:[#allocation3 + $0x9] sm:$0xff]
    %v2251 = vld [vmem:[#allocation3 + $0x11] sm:$0xff]
    %v2252 = vld [vmem:[#allocation3 + $0x19] sm:$0xff]
    %v2253 = vld [vmem:[#allocation3 + $0x21] sm:$0xff]
    %v2254 = vsel %vm1729, %v2250, 0.0
    %v2255 = vsel %vm1730, %v2251, 0.0
    %v2256 = vsel %vm1731, %v2252, 0.0
    %v2257 = vsel %vm1732, %v2253, 0.0
    %v2258 = vpack.c.bf16 %v2255, %v2254
    %v2259 = vpack.c.bf16 %v2257, %v2256
    %v2260 = vld [vmem:[%s7 + $0x60] sm:$0xf]
    %v2261 = vld [vmem:[%s7 + $0x64] sm:$0xf]
    %v2262 = vld [vmem:[%s7 + $0x68] sm:$0xf]
    %v2263 = vld [vmem:[%s7 + $0x6c] sm:$0xf]
    %v2264 = vld [vmem:[%s7 + $0x70] sm:$0xf]
    %v2265 = vld [vmem:[%s7 + $0x74] sm:$0xf]
    %v2266 = vld [vmem:[%s7 + $0x78] sm:$0xf]
    %v2267 = vld [vmem:[%s7 + $0x7c] sm:$0xf]
    %v2276 = vunpack.c.l.b16 %v2260
    %v2277 = vunpack.c.l.b16 %v2261
    %v2278 = vunpack.c.l.b16 %v2262
    %v2279 = vunpack.c.l.b16 %v2263
    %v2280 = vunpack.c.l.b16 %v2264
    %v2281 = vunpack.c.l.b16 %v2265
    %v2282 = vunpack.c.l.b16 %v2266
    %v2283 = vunpack.c.l.b16 %v2267
    %v2284 = vpack.c.b16 %v2277, %v2276
    %v2285 = vpack.c.b16 %v2279, %v2278
    %v2286 = vpack.c.b16 %v2281, %v2280
    %v2287 = vpack.c.b16 %v2283, %v2282
    %v2293 = vsel %vm1482, %v2258, 0
    %v2296 = vsel %vm1482, %v2259, 0
    %2298 = vmatpush.bf16.msra.mxu0 0
    %2299 = vmatpush.bf16.msra.mxu0 0
    %2300 = vmatpush.bf16.msra.mxu0 0
    %2301 = vmatpush.bf16.msra.mxu0 0
    %2302 = vmatpush.bf16.msra.mxu0 %v2287
    %2303 = vmatpush.bf16.msra.mxu0 %v2286
    %2304 = vmatpush.bf16.msra.mxu0 %v2285
    %2305 = vmatpush.bf16.msra.mxu0 %v2284
    %2306 = vmatmul.bf16.gmra.mxu0 %v2293
    %v2307 = vpop.f32.mrf.mxu0
    %v2308 = vadd.f32 0.0, %v2307
    %v2309 = vpop.f32.mrf.mxu0
    %v2310 = vadd.f32 0.0, %v2309
    %2311 = vmatmul.bf16.gmra.mxu0 %v2296
    %v2312 = vpop.f32.mrf.mxu0
    %v2313 = vadd.f32 0.0, %v2312
    %v2314 = vpop.f32.mrf.mxu0
    %v2315 = vadd.f32 0.0, %v2314
    %2316 = vdwg.mxu0
    %v2317 = vadd.f32 %v2246, %v2308
    %v2318 = vadd.f32 %v2247, %v2310
    %v2319 = vadd.f32 %v2248, %v2313
    %v2320 = vadd.f32 %v2249, %v2315
    %v2321 = vld [vmem:[#allocation3 + $0xa] sm:$0xff]
    %v2322 = vld [vmem:[#allocation3 + $0x12] sm:$0xff]
    %v2323 = vld [vmem:[#allocation3 + $0x1a] sm:$0xff]
    %v2324 = vld [vmem:[#allocation3 + $0x22] sm:$0xff]
    %v2325 = vsel %vm1575, 1, 0
    %v2326 = vsel %vm1576, 1, 0
    %v2327 = vsel %vm1577, 1, 0
    %v2328 = vsel %vm1578, 1, 0
    %vm2329 = vcmp.eq.s32.totalorder %v2325, 1
    %vm2330 = vcmp.eq.s32.totalorder %v2326, 1
    %vm2331 = vcmp.eq.s32.totalorder %v2327, 1
    %vm2332 = vcmp.eq.s32.totalorder %v2328, 1
    %v2333 = vsel %vm2329, %v2321, 0.0
    %v2334 = vsel %vm2330, %v2322, 0.0
    %v2335 = vsel %vm2331, %v2323, 0.0
    %v2336 = vsel %vm2332, %v2324, 0.0
    %v2337 = vpack.c.bf16 %v2334, %v2333
    %v2338 = vpack.c.bf16 %v2336, %v2335
    %v2339 = vld [vmem:[%s7 + $0x80] sm:$0xf]
    %v2340 = vld [vmem:[%s7 + $0x84] sm:$0xf]
    %v2341 = vld [vmem:[%s7 + $0x88] sm:$0xf]
    %v2342 = vld [vmem:[%s7 + $0x8c] sm:$0xf]
    %v2343 = vld [vmem:[%s7 + $0x90] sm:$0xf]
    %v2344 = vld [vmem:[%s7 + $0x94] sm:$0xf]
    %v2345 = vld [vmem:[%s7 + $0x98] sm:$0xf]
    %v2346 = vld [vmem:[%s7 + $0x9c] sm:$0xf]
    %v2355 = vunpack.c.l.b16 %v2339
    %v2356 = vunpack.c.l.b16 %v2340
    %v2357 = vunpack.c.l.b16 %v2341
    %v2358 = vunpack.c.l.b16 %v2342
    %v2359 = vunpack.c.l.b16 %v2343
    %v2360 = vunpack.c.l.b16 %v2344
    %v2361 = vunpack.c.l.b16 %v2345
    %v2362 = vunpack.c.l.b16 %v2346
    %v2363 = vpack.c.b16 %v2356, %v2355
    %v2364 = vpack.c.b16 %v2358, %v2357
    %v2365 = vpack.c.b16 %v2360, %v2359
    %v2366 = vpack.c.b16 %v2362, %v2361
    %v2372 = vsel %vm1482, %v2337, 0
    %v2375 = vsel %vm1482, %v2338, 0
    %2377 = vmatpush.bf16.msra.mxu0 0
    %2378 = vmatpush.bf16.msra.mxu0 0
    %2379 = vmatpush.bf16.msra.mxu0 0
    %2380 = vmatpush.bf16.msra.mxu0 0
    %2381 = vmatpush.bf16.msra.mxu0 %v2366
    %2382 = vmatpush.bf16.msra.mxu0 %v2365
    %2383 = vmatpush.bf16.msra.mxu0 %v2364
    %2384 = vmatpush.bf16.msra.mxu0 %v2363
    %2385 = vmatmul.bf16.gmra.mxu0 %v2372
    %v2386 = vpop.f32.mrf.mxu0
    %v2387 = vadd.f32 0.0, %v2386
    %v2388 = vpop.f32.mrf.mxu0
    %v2389 = vadd.f32 0.0, %v2388
    %2390 = vmatmul.bf16.gmra.mxu0 %v2375
    %v2391 = vpop.f32.mrf.mxu0
    %v2392 = vadd.f32 0.0, %v2391
    %v2393 = vpop.f32.mrf.mxu0
    %v2394 = vadd.f32 0.0, %v2393
    %2395 = vdwg.mxu0
    %v2396 = vadd.f32 %v2317, %v2387
    %v2397 = vadd.f32 %v2318, %v2389
    %v2398 = vadd.f32 %v2319, %v2392
    %v2399 = vadd.f32 %v2320, %v2394
    %v2400 = vld [vmem:[%s15 + $0x14] ss:$0 sm:$0xff]
    %v2401 = vmul.f32 %v2396, %v2400
    %v2402 = vmul.f32 %v2397, %v2400
    %v2403 = vmul.f32 %v2398, %v2400
    %v2404 = vmul.f32 %v2399, %v2400
    %v2405 = vld [vmem:[%s15 + $0x15] ss:$0 sm:$0xff]
    %v2406 = vadd.f32 %v2401, %v2405
    %v2407 = vadd.f32 %v2402, %v2405
    %v2408 = vadd.f32 %v2403, %v2405
    %v2409 = vadd.f32 %v2404, %v2405
    %v2410 = vmax.f32 %v2406, 0.0
    %v2411 = vmax.f32 %v2407, 0.0
    %v2412 = vmax.f32 %v2408, 0.0
    %v2413 = vmax.f32 %v2409, 0.0
    %2414 = vst [vmem:[#allocation4 + $0x8] sm:$0xff] %v2410
    %2415 = vst [vmem:[#allocation4 + $0x10] sm:$0xff] %v2411
    %2416 = vst [vmem:[#allocation4 + $0x18] sm:$0xff] %v2412
    %2417 = vst [vmem:[#allocation4 + $0x20] sm:$0xff] %v2413
    %s2418 = scalar_lea.vmem [#allocation4], 8
    %v2419 = vld [vmem:[%s2418] ss:$2 sm:$0xff]
    %s2420 = scalar_lea.vmem [#allocation4], 24
    %v2421 = vld [vmem:[%s2420] ss:$2 sm:$0xff]
    %s2422 = scalar_lea.vmem [#allocation4], 9
    %v2423 = vld [vmem:[%s2422] ss:$2 sm:$0xff]
    %s2424 = scalar_lea.vmem [#allocation4], 25
    %v2425 = vld [vmem:[%s2424] ss:$2 sm:$0xff]
    %v2426 = vmax.f32 %v2419, %v2423
    %v2427 = vmax.f32 %v2421, %v2425
    %v2428 = vand.u32 %v301, 7
    %v2429 = vand.u32 %v302, 7
    %v2430 = vadd.s32 %v2428, 4294967295
    %v2431 = vadd.s32 %v2429, 4294967295
    %vm2432 = vcmp.ge.s32.totalorder %v2430, 0
    %vm2433 = vcmp.ge.s32.totalorder %v2431, 0
    %vm2434 = vcmp.lt.s32.totalorder %v2430, 8
    %vm2435 = vcmp.lt.s32.totalorder %v2431, 8
    %vm2436 = vmand %vm2432, %vm2434
    %vm2437 = vmand %vm2433, %vm2435
    %v2438 = vadd.s32 %v2428, 1
    %v2439 = vadd.s32 %v2429, 1
    %vm2440 = vcmp.ge.s32.totalorder %v2438, 0
    %vm2441 = vcmp.ge.s32.totalorder %v2439, 0
    %vm2442 = vcmp.lt.s32.totalorder %v2438, 8
    %vm2443 = vcmp.lt.s32.totalorder %v2439, 8
    %vm2444 = vmand %vm2440, %vm2442
    %vm2445 = vmand %vm2441, %vm2443
    %2446 = vst [vmem:[#allocation4 + $0x8] sm:$0xff] %v2426
    %2447 = vst [vmem:[#allocation4 + $0x10] sm:$0xff] %v2427
    %v2448 = vld [vmem:[#allocation4 + $0x7] sm:$0xff]
    %v2449 = vld [vmem:[#allocation4 + $0xf] sm:$0xff]
    %v2450 = vsel %vm2436, 1, 0
    %v2451 = vsel %vm2437, 1, 0
    %vm2452 = vcmp.eq.s32.totalorder %v2450, 1
    %vm2453 = vcmp.eq.s32.totalorder %v2451, 1
    %v2454 = vsel %vm2452, %v2448, 0.0
    %v2455 = vsel %vm2453, %v2449, 0.0
    %v2456 = vpack.c.bf16 %v2455, %v2454
    %v2457 = vld [vmem:[%s8] sm:$0xf]
    %v2458 = vld [vmem:[%s8 + $0x4] sm:$0xf]
    %v2459 = vld [vmem:[%s8 + $0x8] sm:$0xf]
    %v2460 = vld [vmem:[%s8 + $0xc] sm:$0xf]
    %v2461 = vld [vmem:[%s8 + $0x10] sm:$0xf]
    %v2462 = vld [vmem:[%s8 + $0x14] sm:$0xf]
    %v2463 = vld [vmem:[%s8 + $0x18] sm:$0xf]
    %v2464 = vld [vmem:[%s8 + $0x1c] sm:$0xf]
    %v2465 = vld [vmem:[%s8 + $0x20] sm:$0xf]
    %v2466 = vld [vmem:[%s8 + $0x24] sm:$0xf]
    %v2467 = vld [vmem:[%s8 + $0x28] sm:$0xf]
    %v2468 = vld [vmem:[%s8 + $0x2c] sm:$0xf]
    %v2469 = vld [vmem:[%s8 + $0x30] sm:$0xf]
    %v2470 = vld [vmem:[%s8 + $0x34] sm:$0xf]
    %v2471 = vld [vmem:[%s8 + $0x38] sm:$0xf]
    %v2472 = vld [vmem:[%s8 + $0x3c] sm:$0xf]
    %v2473 = vld [vmem:[#allocation4 + $0x8] sm:$0xff]
    %v2474 = vld [vmem:[#allocation4 + $0x10] sm:$0xff]
    %v2475 = vpack.c.bf16 %v2474, %v2473
    %v2476 = vld [vmem:[%s8 + $0x40] sm:$0xf]
    %v2477 = vld [vmem:[%s8 + $0x44] sm:$0xf]
    %v2478 = vld [vmem:[%s8 + $0x48] sm:$0xf]
    %v2479 = vld [vmem:[%s8 + $0x4c] sm:$0xf]
    %v2480 = vld [vmem:[%s8 + $0x50] sm:$0xf]
    %v2481 = vld [vmem:[%s8 + $0x54] sm:$0xf]
    %v2482 = vld [vmem:[%s8 + $0x58] sm:$0xf]
    %v2483 = vld [vmem:[%s8 + $0x5c] sm:$0xf]
    %v2484 = vld [vmem:[%s8 + $0x60] sm:$0xf]
    %v2485 = vld [vmem:[%s8 + $0x64] sm:$0xf]
    %v2486 = vld [vmem:[%s8 + $0x68] sm:$0xf]
    %v2487 = vld [vmem:[%s8 + $0x6c] sm:$0xf]
    %v2488 = vld [vmem:[%s8 + $0x70] sm:$0xf]
    %v2489 = vld [vmem:[%s8 + $0x74] sm:$0xf]
    %v2490 = vld [vmem:[%s8 + $0x78] sm:$0xf]
    %v2491 = vld [vmem:[%s8 + $0x7c] sm:$0xf]
    %v2508 = vunpack.c.l.b16 %v2476
    %v2509 = vunpack.c.l.b16 %v2477
    %v2510 = vunpack.c.l.b16 %v2478
    %v2511 = vunpack.c.l.b16 %v2479
    %v2512 = vunpack.c.l.b16 %v2480
    %v2513 = vunpack.c.l.b16 %v2481
    %v2514 = vunpack.c.l.b16 %v2482
    %v2515 = vunpack.c.l.b16 %v2483
    %v2516 = vunpack.c.l.b16 %v2484
    %v2517 = vunpack.c.l.b16 %v2485
    %v2518 = vunpack.c.l.b16 %v2486
    %v2519 = vunpack.c.l.b16 %v2487
    %v2520 = vunpack.c.l.b16 %v2488
    %v2521 = vunpack.c.l.b16 %v2489
    %v2522 = vunpack.c.l.b16 %v2490
    %v2523 = vunpack.c.l.b16 %v2491
    %v2524 = vpack.c.b16 %v2509, %v2508
    %v2525 = vpack.c.b16 %v2511, %v2510
    %v2526 = vpack.c.b16 %v2513, %v2512
    %v2527 = vpack.c.b16 %v2515, %v2514
    %v2528 = vpack.c.b16 %v2517, %v2516
    %v2529 = vpack.c.b16 %v2519, %v2518
    %v2530 = vpack.c.b16 %v2521, %v2520
    %v2531 = vpack.c.b16 %v2523, %v2522
    %2540 = vmatpush.bf16.msra.mxu0 %v2531
    %2541 = vmatpush.bf16.msra.mxu0 %v2530
    %2542 = vmatpush.bf16.msra.mxu0 %v2529
    %2543 = vmatpush.bf16.msra.mxu0 %v2528
    %2544 = vmatpush.bf16.msra.mxu0 %v2527
    %2545 = vmatpush.bf16.msra.mxu0 %v2526
    %2546 = vmatpush.bf16.msra.mxu0 %v2525
    %2547 = vmatpush.bf16.msra.mxu0 %v2524
    %2548 = vmatmul.bf16.gmra.mxu0 %v2475
    %v2549 = vpop.f32.mrf.mxu0
    %v2550 = vadd.f32 0.0, %v2549
    %v2551 = vpop.f32.mrf.mxu0
    %v2552 = vadd.f32 0.0, %v2551
    %2553 = vdwg.mxu0
    %v2570 = vunpack.c.l.b16 %v2457
    %v2571 = vunpack.c.l.b16 %v2458
    %v2572 = vunpack.c.l.b16 %v2459
    %v2573 = vunpack.c.l.b16 %v2460
    %v2574 = vunpack.c.l.b16 %v2461
    %v2575 = vunpack.c.l.b16 %v2462
    %v2576 = vunpack.c.l.b16 %v2463
    %v2577 = vunpack.c.l.b16 %v2464
    %v2578 = vunpack.c.l.b16 %v2465
    %v2579 = vunpack.c.l.b16 %v2466
    %v2580 = vunpack.c.l.b16 %v2467
    %v2581 = vunpack.c.l.b16 %v2468
    %v2582 = vunpack.c.l.b16 %v2469
    %v2583 = vunpack.c.l.b16 %v2470
    %v2584 = vunpack.c.l.b16 %v2471
    %v2585 = vunpack.c.l.b16 %v2472
    %v2586 = vpack.c.b16 %v2571, %v2570
    %v2587 = vpack.c.b16 %v2573, %v2572
    %v2588 = vpack.c.b16 %v2575, %v2574
    %v2589 = vpack.c.b16 %v2577, %v2576
    %v2590 = vpack.c.b16 %v2579, %v2578
    %v2591 = vpack.c.b16 %v2581, %v2580
    %v2592 = vpack.c.b16 %v2583, %v2582
    %v2593 = vpack.c.b16 %v2585, %v2584
    %2602 = vmatpush.bf16.msra.mxu0 %v2593
    %2603 = vmatpush.bf16.msra.mxu0 %v2592
    %2604 = vmatpush.bf16.msra.mxu0 %v2591
    %2605 = vmatpush.bf16.msra.mxu0 %v2590
    %2606 = vmatpush.bf16.msra.mxu0 %v2589
    %2607 = vmatpush.bf16.msra.mxu0 %v2588
    %2608 = vmatpush.bf16.msra.mxu0 %v2587
    %2609 = vmatpush.bf16.msra.mxu0 %v2586
    %2610 = vmatmul.bf16.gmra.mxu0 %v2456
    %v2611 = vpop.f32.mrf.mxu0
    %v2612 = vadd.f32 %v2550, %v2611
    %v2613 = vpop.f32.mrf.mxu0
    %v2614 = vadd.f32 %v2552, %v2613
    %2615 = vdwg.mxu0
    %v2616 = vld [vmem:[#allocation4 + $0x9] sm:$0xff]
    %v2617 = vld [vmem:[#allocation4 + $0x11] sm:$0xff]
    %v2618 = vsel %vm2444, 1, 0
    %v2619 = vsel %vm2445, 1, 0
    %vm2620 = vcmp.eq.s32.totalorder %v2618, 1
    %vm2621 = vcmp.eq.s32.totalorder %v2619, 1
    %v2622 = vsel %vm2620, %v2616, 0.0
    %v2623 = vsel %vm2621, %v2617, 0.0
    %v2624 = vpack.c.bf16 %v2623, %v2622
    %v2625 = vld [vmem:[%s8 + $0x80] sm:$0xf]
    %v2626 = vld [vmem:[%s8 + $0x84] sm:$0xf]
    %v2627 = vld [vmem:[%s8 + $0x88] sm:$0xf]
    %v2628 = vld [vmem:[%s8 + $0x8c] sm:$0xf]
    %v2629 = vld [vmem:[%s8 + $0x90] sm:$0xf]
    %v2630 = vld [vmem:[%s8 + $0x94] sm:$0xf]
    %v2631 = vld [vmem:[%s8 + $0x98] sm:$0xf]
    %v2632 = vld [vmem:[%s8 + $0x9c] sm:$0xf]
    %v2633 = vld [vmem:[%s8 + $0xa0] sm:$0xf]
    %v2634 = vld [vmem:[%s8 + $0xa4] sm:$0xf]
    %v2635 = vld [vmem:[%s8 + $0xa8] sm:$0xf]
    %v2636 = vld [vmem:[%s8 + $0xac] sm:$0xf]
    %v2637 = vld [vmem:[%s8 + $0xb0] sm:$0xf]
    %v2638 = vld [vmem:[%s8 + $0xb4] sm:$0xf]
    %v2639 = vld [vmem:[%s8 + $0xb8] sm:$0xf]
    %v2640 = vld [vmem:[%s8 + $0xbc] sm:$0xf]
    %v2657 = vunpack.c.l.b16 %v2625
    %v2658 = vunpack.c.l.b16 %v2626
    %v2659 = vunpack.c.l.b16 %v2627
    %v2660 = vunpack.c.l.b16 %v2628
    %v2661 = vunpack.c.l.b16 %v2629
    %v2662 = vunpack.c.l.b16 %v2630
    %v2663 = vunpack.c.l.b16 %v2631
    %v2664 = vunpack.c.l.b16 %v2632
    %v2665 = vunpack.c.l.b16 %v2633
    %v2666 = vunpack.c.l.b16 %v2634
    %v2667 = vunpack.c.l.b16 %v2635
    %v2668 = vunpack.c.l.b16 %v2636
    %v2669 = vunpack.c.l.b16 %v2637
    %v2670 = vunpack.c.l.b16 %v2638
    %v2671 = vunpack.c.l.b16 %v2639
    %v2672 = vunpack.c.l.b16 %v2640
    %v2673 = vpack.c.b16 %v2658, %v2657
    %v2674 = vpack.c.b16 %v2660, %v2659
    %v2675 = vpack.c.b16 %v2662, %v2661
    %v2676 = vpack.c.b16 %v2664, %v2663
    %v2677 = vpack.c.b16 %v2666, %v2665
    %v2678 = vpack.c.b16 %v2668, %v2667
    %v2679 = vpack.c.b16 %v2670, %v2669
    %v2680 = vpack.c.b16 %v2672, %v2671
    %2689 = vmatpush.bf16.msra.mxu0 %v2680
    %2690 = vmatpush.bf16.msra.mxu0 %v2679
    %2691 = vmatpush.bf16.msra.mxu0 %v2678
    %2692 = vmatpush.bf16.msra.mxu0 %v2677
    %2693 = vmatpush.bf16.msra.mxu0 %v2676
    %2694 = vmatpush.bf16.msra.mxu0 %v2675
    %2695 = vmatpush.bf16.msra.mxu0 %v2674
    %2696 = vmatpush.bf16.msra.mxu0 %v2673
    %2697 = vmatmul.bf16.gmra.mxu0 %v2624
    %v2698 = vpop.f32.mrf.mxu0
    %v2699 = vadd.f32 0.0, %v2698
    %v2700 = vpop.f32.mrf.mxu0
    %v2701 = vadd.f32 0.0, %v2700
    %2702 = vdwg.mxu0
    %v2703 = vadd.f32 %v2612, %v2699
    %v2704 = vadd.f32 %v2614, %v2701
    %v2705 = vld [vmem:[%s15 + $0x16] ss:$0 sm:$0xff]
    %v2706 = vmul.f32 %v2703, %v2705
    %v2707 = vmul.f32 %v2704, %v2705
    %v2708 = vld [vmem:[%s15 + $0x17] ss:$0 sm:$0xff]
    %v2709 = vadd.f32 %v2706, %v2708
    %v2710 = vadd.f32 %v2707, %v2708
    %v2711 = vmax.f32 %v2709, 0.0
    %v2712 = vmax.f32 %v2710, 0.0
    %2713 = vst [vmem:[#allocation4 + $0x8] sm:$0xff] %v2711
    %2714 = vst [vmem:[#allocation4 + $0x10] sm:$0xff] %v2712
    %v2715 = vld [vmem:[#allocation4 + $0x7] sm:$0xff]
    %v2716 = vld [vmem:[#allocation4 + $0xf] sm:$0xff]
    %v2717 = vsel %vm2452, %v2715, 0.0
    %v2718 = vsel %vm2453, %v2716, 0.0
    %v2719 = vpack.c.bf16 %v2718, %v2717
    %v2720 = vld [vmem:[%s9] sm:$0xf]
    %v2721 = vld [vmem:[%s9 + $0x4] sm:$0xf]
    %v2722 = vld [vmem:[%s9 + $0x8] sm:$0xf]
    %v2723 = vld [vmem:[%s9 + $0xc] sm:$0xf]
    %v2724 = vld [vmem:[%s9 + $0x10] sm:$0xf]
    %v2725 = vld [vmem:[%s9 + $0x14] sm:$0xf]
    %v2726 = vld [vmem:[%s9 + $0x18] sm:$0xf]
    %v2727 = vld [vmem:[%s9 + $0x1c] sm:$0xf]
    %v2728 = vld [vmem:[%s9 + $0x20] sm:$0xf]
    %v2729 = vld [vmem:[%s9 + $0x24] sm:$0xf]
    %v2730 = vld [vmem:[%s9 + $0x28] sm:$0xf]
    %v2731 = vld [vmem:[%s9 + $0x2c] sm:$0xf]
    %v2732 = vld [vmem:[%s9 + $0x30] sm:$0xf]
    %v2733 = vld [vmem:[%s9 + $0x34] sm:$0xf]
    %v2734 = vld [vmem:[%s9 + $0x38] sm:$0xf]
    %v2735 = vld [vmem:[%s9 + $0x3c] sm:$0xf]
    %v2736 = vld [vmem:[#allocation4 + $0x8] sm:$0xff]
    %v2737 = vld [vmem:[#allocation4 + $0x10] sm:$0xff]
    %v2738 = vpack.c.bf16 %v2737, %v2736
    %v2739 = vld [vmem:[%s9 + $0x40] sm:$0xf]
    %v2740 = vld [vmem:[%s9 + $0x44] sm:$0xf]
    %v2741 = vld [vmem:[%s9 + $0x48] sm:$0xf]
    %v2742 = vld [vmem:[%s9 + $0x4c] sm:$0xf]
    %v2743 = vld [vmem:[%s9 + $0x50] sm:$0xf]
    %v2744 = vld [vmem:[%s9 + $0x54] sm:$0xf]
    %v2745 = vld [vmem:[%s9 + $0x58] sm:$0xf]
    %v2746 = vld [vmem:[%s9 + $0x5c] sm:$0xf]
    %v2747 = vld [vmem:[%s9 + $0x60] sm:$0xf]
    %v2748 = vld [vmem:[%s9 + $0x64] sm:$0xf]
    %v2749 = vld [vmem:[%s9 + $0x68] sm:$0xf]
    %v2750 = vld [vmem:[%s9 + $0x6c] sm:$0xf]
    %v2751 = vld [vmem:[%s9 + $0x70] sm:$0xf]
    %v2752 = vld [vmem:[%s9 + $0x74] sm:$0xf]
    %v2753 = vld [vmem:[%s9 + $0x78] sm:$0xf]
    %v2754 = vld [vmem:[%s9 + $0x7c] sm:$0xf]
    %v2771 = vunpack.c.l.b16 %v2739
    %v2772 = vunpack.c.l.b16 %v2740
    %v2773 = vunpack.c.l.b16 %v2741
    %v2774 = vunpack.c.l.b16 %v2742
    %v2775 = vunpack.c.l.b16 %v2743
    %v2776 = vunpack.c.l.b16 %v2744
    %v2777 = vunpack.c.l.b16 %v2745
    %v2778 = vunpack.c.l.b16 %v2746
    %v2779 = vunpack.c.l.b16 %v2747
    %v2780 = vunpack.c.l.b16 %v2748
    %v2781 = vunpack.c.l.b16 %v2749
    %v2782 = vunpack.c.l.b16 %v2750
    %v2783 = vunpack.c.l.b16 %v2751
    %v2784 = vunpack.c.l.b16 %v2752
    %v2785 = vunpack.c.l.b16 %v2753
    %v2786 = vunpack.c.l.b16 %v2754
    %v2787 = vpack.c.b16 %v2772, %v2771
    %v2788 = vpack.c.b16 %v2774, %v2773
    %v2789 = vpack.c.b16 %v2776, %v2775
    %v2790 = vpack.c.b16 %v2778, %v2777
    %v2791 = vpack.c.b16 %v2780, %v2779
    %v2792 = vpack.c.b16 %v2782, %v2781
    %v2793 = vpack.c.b16 %v2784, %v2783
    %v2794 = vpack.c.b16 %v2786, %v2785
    %2803 = vmatpush.bf16.msra.mxu0 %v2794
    %2804 = vmatpush.bf16.msra.mxu0 %v2793
    %2805 = vmatpush.bf16.msra.mxu0 %v2792
    %2806 = vmatpush.bf16.msra.mxu0 %v2791
    %2807 = vmatpush.bf16.msra.mxu0 %v2790
    %2808 = vmatpush.bf16.msra.mxu0 %v2789
    %2809 = vmatpush.bf16.msra.mxu0 %v2788
    %2810 = vmatpush.bf16.msra.mxu0 %v2787
    %2811 = vmatmul.bf16.gmra.mxu0 %v2738
    %v2812 = vpop.f32.mrf.mxu0
    %v2813 = vadd.f32 0.0, %v2812
    %v2814 = vpop.f32.mrf.mxu0
    %v2815 = vadd.f32 0.0, %v2814
    %2816 = vdwg.mxu0
    %v2833 = vunpack.c.l.b16 %v2720
    %v2834 = vunpack.c.l.b16 %v2721
    %v2835 = vunpack.c.l.b16 %v2722
    %v2836 = vunpack.c.l.b16 %v2723
    %v2837 = vunpack.c.l.b16 %v2724
    %v2838 = vunpack.c.l.b16 %v2725
    %v2839 = vunpack.c.l.b16 %v2726
    %v2840 = vunpack.c.l.b16 %v2727
    %v2841 = vunpack.c.l.b16 %v2728
    %v2842 = vunpack.c.l.b16 %v2729
    %v2843 = vunpack.c.l.b16 %v2730
    %v2844 = vunpack.c.l.b16 %v2731
    %v2845 = vunpack.c.l.b16 %v2732
    %v2846 = vunpack.c.l.b16 %v2733
    %v2847 = vunpack.c.l.b16 %v2734
    %v2848 = vunpack.c.l.b16 %v2735
    %v2849 = vpack.c.b16 %v2834, %v2833
    %v2850 = vpack.c.b16 %v2836, %v2835
    %v2851 = vpack.c.b16 %v2838, %v2837
    %v2852 = vpack.c.b16 %v2840, %v2839
    %v2853 = vpack.c.b16 %v2842, %v2841
    %v2854 = vpack.c.b16 %v2844, %v2843
    %v2855 = vpack.c.b16 %v2846, %v2845
    %v2856 = vpack.c.b16 %v2848, %v2847
    %2865 = vmatpush.bf16.msra.mxu0 %v2856
    %2866 = vmatpush.bf16.msra.mxu0 %v2855
    %2867 = vmatpush.bf16.msra.mxu0 %v2854
    %2868 = vmatpush.bf16.msra.mxu0 %v2853
    %2869 = vmatpush.bf16.msra.mxu0 %v2852
    %2870 = vmatpush.bf16.msra.mxu0 %v2851
    %2871 = vmatpush.bf16.msra.mxu0 %v2850
    %2872 = vmatpush.bf16.msra.mxu0 %v2849
    %2873 = vmatmul.bf16.gmra.mxu0 %v2719
    %v2874 = vpop.f32.mrf.mxu0
    %v2875 = vadd.f32 %v2813, %v2874
    %v2876 = vpop.f32.mrf.mxu0
    %v2877 = vadd.f32 %v2815, %v2876
    %2878 = vdwg.mxu0
    %v2879 = vld [vmem:[#allocation4 + $0x9] sm:$0xff]
    %v2880 = vld [vmem:[#allocation4 + $0x11] sm:$0xff]
    %v2881 = vsel %vm2620, %v2879, 0.0
    %v2882 = vsel %vm2621, %v2880, 0.0
    %v2883 = vpack.c.bf16 %v2882, %v2881
    %v2884 = vld [vmem:[%s9 + $0x80] sm:$0xf]
    %v2885 = vld [vmem:[%s9 + $0x84] sm:$0xf]
    %v2886 = vld [vmem:[%s9 + $0x88] sm:$0xf]
    %v2887 = vld [vmem:[%s9 + $0x8c] sm:$0xf]
    %v2888 = vld [vmem:[%s9 + $0x90] sm:$0xf]
    %v2889 = vld [vmem:[%s9 + $0x94] sm:$0xf]
    %v2890 = vld [vmem:[%s9 + $0x98] sm:$0xf]
    %v2891 = vld [vmem:[%s9 + $0x9c] sm:$0xf]
    %v2892 = vld [vmem:[%s9 + $0xa0] sm:$0xf]
    %v2893 = vld [vmem:[%s9 + $0xa4] sm:$0xf]
    %v2894 = vld [vmem:[%s9 + $0xa8] sm:$0xf]
    %v2895 = vld [vmem:[%s9 + $0xac] sm:$0xf]
    %v2896 = vld [vmem:[%s9 + $0xb0] sm:$0xf]
    %v2897 = vld [vmem:[%s9 + $0xb4] sm:$0xf]
    %v2898 = vld [vmem:[%s9 + $0xb8] sm:$0xf]
    %v2899 = vld [vmem:[%s9 + $0xbc] sm:$0xf]
    %v2916 = vunpack.c.l.b16 %v2884
    %v2917 = vunpack.c.l.b16 %v2885
    %v2918 = vunpack.c.l.b16 %v2886
    %v2919 = vunpack.c.l.b16 %v2887
    %v2920 = vunpack.c.l.b16 %v2888
    %v2921 = vunpack.c.l.b16 %v2889
    %v2922 = vunpack.c.l.b16 %v2890
    %v2923 = vunpack.c.l.b16 %v2891
    %v2924 = vunpack.c.l.b16 %v2892
    %v2925 = vunpack.c.l.b16 %v2893
    %v2926 = vunpack.c.l.b16 %v2894
    %v2927 = vunpack.c.l.b16 %v2895
    %v2928 = vunpack.c.l.b16 %v2896
    %v2929 = vunpack.c.l.b16 %v2897
    %v2930 = vunpack.c.l.b16 %v2898
    %v2931 = vunpack.c.l.b16 %v2899
    %v2932 = vpack.c.b16 %v2917, %v2916
    %v2933 = vpack.c.b16 %v2919, %v2918
    %v2934 = vpack.c.b16 %v2921, %v2920
    %v2935 = vpack.c.b16 %v2923, %v2922
    %v2936 = vpack.c.b16 %v2925, %v2924
    %v2937 = vpack.c.b16 %v2927, %v2926
    %v2938 = vpack.c.b16 %v2929, %v2928
    %v2939 = vpack.c.b16 %v2931, %v2930
    %2948 = vmatpush.bf16.msra.mxu0 %v2939
    %2949 = vmatpush.bf16.msra.mxu0 %v2938
    %2950 = vmatpush.bf16.msra.mxu0 %v2937
    %2951 = vmatpush.bf16.msra.mxu0 %v2936
    %2952 = vmatpush.bf16.msra.mxu0 %v2935
    %2953 = vmatpush.bf16.msra.mxu0 %v2934
    %2954 = vmatpush.bf16.msra.mxu0 %v2933
    %2955 = vmatpush.bf16.msra.mxu0 %v2932
    %2956 = vmatmul.bf16.gmra.mxu0 %v2883
    %v2957 = vpop.f32.mrf.mxu0
    %v2958 = vadd.f32 0.0, %v2957
    %v2959 = vpop.f32.mrf.mxu0
    %v2960 = vadd.f32 0.0, %v2959
    %2961 = vdwg.mxu0
    %v2962 = vadd.f32 %v2875, %v2958
    %v2963 = vadd.f32 %v2877, %v2960
    %v2964 = vld [vmem:[%s15 + $0x20] ss:$0 sm:$0xff]
    %v2965 = vmul.f32 %v2962, %v2964
    %v2966 = vmul.f32 %v2963, %v2964
    %v2967 = vld [vmem:[%s15 + $0x21] ss:$0 sm:$0xff]
    %v2968 = vadd.f32 %v2965, %v2967
    %v2969 = vadd.f32 %v2966, %v2967
    %v2970 = vadd.f32 %v2968, %v2426
    %v2971 = vadd.f32 %v2969, %v2427
    %v2972 = vmax.f32 %v2970, 0.0
    %v2973 = vmax.f32 %v2971, 0.0
    %v2974 = vpack.c.bf16 %v2973, %v2972
    %v2975 = vld [vmem:[%s10] sm:$0xff]
    %v2976 = vld [vmem:[%s10 + $0x8] sm:$0xff]
    %v2977 = vld [vmem:[%s10 + $0x10] sm:$0xff]
    %v2978 = vld [vmem:[%s10 + $0x18] sm:$0xff]
    %v2979 = vld [vmem:[%s10 + $0x20] sm:$0xff]
    %v2980 = vld [vmem:[%s10 + $0x28] sm:$0xff]
    %v2981 = vld [vmem:[%s10 + $0x30] sm:$0xff]
    %v2982 = vld [vmem:[%s10 + $0x38] sm:$0xff]
    %v2983 = vld [vmem:[%s10 + $0x40] sm:$0xff]
    %v2984 = vld [vmem:[%s10 + $0x48] sm:$0xff]
    %v2985 = vld [vmem:[%s10 + $0x50] sm:$0xff]
    %v2986 = vld [vmem:[%s10 + $0x58] sm:$0xff]
    %v2987 = vld [vmem:[%s10 + $0x60] sm:$0xff]
    %v2988 = vld [vmem:[%s10 + $0x68] sm:$0xff]
    %v2989 = vld [vmem:[%s10 + $0x70] sm:$0xff]
    %v2990 = vld [vmem:[%s10 + $0x78] sm:$0xff]
    %v3007 = vunpack.c.l.b16 %v2975
    %v3008 = vunpack.c.h.b16 %v2975
    %v3009 = vunpack.c.l.b16 %v2976
    %v3010 = vunpack.c.h.b16 %v2976
    %v3011 = vunpack.c.l.b16 %v2977
    %v3012 = vunpack.c.h.b16 %v2977
    %v3013 = vunpack.c.l.b16 %v2978
    %v3014 = vunpack.c.h.b16 %v2978
    %v3015 = vunpack.c.l.b16 %v2979
    %v3016 = vunpack.c.h.b16 %v2979
    %v3017 = vunpack.c.l.b16 %v2980
    %v3018 = vunpack.c.h.b16 %v2980
    %v3019 = vunpack.c.l.b16 %v2981
    %v3020 = vunpack.c.h.b16 %v2981
    %v3021 = vunpack.c.l.b16 %v2982
    %v3022 = vunpack.c.h.b16 %v2982
    %v3023 = vunpack.c.l.b16 %v2983
    %v3024 = vunpack.c.h.b16 %v2983
    %v3025 = vunpack.c.l.b16 %v2984
    %v3026 = vunpack.c.h.b16 %v2984
    %v3027 = vunpack.c.l.b16 %v2985
    %v3028 = vunpack.c.h.b16 %v2985
    %v3029 = vunpack.c.l.b16 %v2986
    %v3030 = vunpack.c.h.b16 %v2986
    %v3031 = vunpack.c.l.b16 %v2987
    %v3032 = vunpack.c.h.b16 %v2987
    %v3033 = vunpack.c.l.b16 %v2988
    %v3034 = vunpack.c.h.b16 %v2988
    %v3035 = vunpack.c.l.b16 %v2989
    %v3036 = vunpack.c.h.b16 %v2989
    %v3037 = vunpack.c.l.b16 %v2990
    %v3038 = vunpack.c.h.b16 %v2990
    %v3039 = vpack.c.b16 %v3009, %v3007
    %v3040 = vpack.c.b16 %v3010, %v3008
    %v3041 = vpack.c.b16 %v3013, %v3011
    %v3042 = vpack.c.b16 %v3014, %v3012
    %v3043 = vpack.c.b16 %v3017, %v3015
    %v3044 = vpack.c.b16 %v3018, %v3016
    %v3045 = vpack.c.b16 %v3021, %v3019
    %v3046 = vpack.c.b16 %v3022, %v3020
    %v3047 = vpack.c.b16 %v3025, %v3023
    %v3048 = vpack.c.b16 %v3026, %v3024
    %v3049 = vpack.c.b16 %v3029, %v3027
    %v3050 = vpack.c.b16 %v3030, %v3028
    %v3051 = vpack.c.b16 %v3033, %v3031
    %v3052 = vpack.c.b16 %v3034, %v3032
    %v3053 = vpack.c.b16 %v3037, %v3035
    %v3054 = vpack.c.b16 %v3038, %v3036
    %3071 = vmatpush.bf16.msra.mxu0 %v3053
    %3072 = vmatpush.bf16.msra.mxu0 %v3051
    %3073 = vmatpush.bf16.msra.mxu0 %v3049
    %3074 = vmatpush.bf16.msra.mxu0 %v3047
    %3075 = vmatpush.bf16.msra.mxu0 %v3045
    %3076 = vmatpush.bf16.msra.mxu0 %v3043
    %3077 = vmatpush.bf16.msra.mxu0 %v3041
    %3078 = vmatpush.bf16.msra.mxu0 %v3039
    %3079 = vmatmul.bf16.gmra.mxu0 %v2974
    %v3080 = vpop.f32.mrf.mxu0
    %v3081 = vadd.f32 0.0, %v3080
    %v3082 = vpop.f32.mrf.mxu0
    %v3083 = vadd.f32 0.0, %v3082
    %3084 = vdwg.mxu0
    %3085 = vmatpush.bf16.msra.mxu0 %v3054
    %3086 = vmatpush.bf16.msra.mxu0 %v3052
    %3087 = vmatpush.bf16.msra.mxu0 %v3050
    %3088 = vmatpush.bf16.msra.mxu0 %v3048
    %3089 = vmatpush.bf16.msra.mxu0 %v3046
    %3090 = vmatpush.bf16.msra.mxu0 %v3044
    %3091 = vmatpush.bf16.msra.mxu0 %v3042
    %3092 = vmatpush.bf16.msra.mxu0 %v3040
    %3093 = vmatmul.bf16.gmra.mxu0 %v2974
    %v3094 = vpop.f32.mrf.mxu0
    %v3095 = vadd.f32 0.0, %v3094
    %v3096 = vpop.f32.mrf.mxu0
    %v3097 = vadd.f32 0.0, %v3096
    %3098 = vdwg.mxu0
    %s3099 = scalar_lea.vmem %s15, 34
    %v3100 = vld [vmem:[%s3099] ss:$8 sm:$0x3]
    %v3102 = vperm.slane %v3100, 0
    %v3103 = vperm.slane %v3100, 1
    %v3106 = vmul.f32 %v3081, %v3102
    %v3107 = vmul.f32 %v3095, %v3103
    %v3108 = vmul.f32 %v3083, %v3102
    %v3109 = vmul.f32 %v3097, %v3103
    %s3110 = scalar_lea.vmem %s15, 35
    %v3111 = vld [vmem:[%s3110] ss:$8 sm:$0x3]
    %v3113 = vperm.slane %v3111, 0
    %v3114 = vperm.slane %v3111, 1
    %v3117 = vadd.f32 %v3106, %v3113
    %v3118 = vadd.f32 %v3107, %v3114
    %v3119 = vadd.f32 %v3108, %v3113
    %v3120 = vadd.f32 %v3109, %v3114
    %v3121 = vmax.f32 %v3117, 0.0
    %v3122 = vmax.f32 %v3118, 0.0
    %v3123 = vmax.f32 %v3119, 0.0
    %v3124 = vmax.f32 %v3120, 0.0
    %v3125 = vlaneseq
    %v3126 = vand.u32 %v3125, 127
    %v3127 = vmul.u32 %v301, 8
    %vm3128 = vcmp.ge.s32.totalorder %v3126, %v3127
    %v3129 = vadd.s32 %v301, 1
    %v3130 = vmul.u32 %v3129, 8
    %vm3131 = vcmp.lt.s32.totalorder %v3126, %v3130
    %vm3132 = vmand %vm3128, %vm3131
    %v3133 = vsel %vm3132, 1, 0
    %v3134 = vcvt.s32.f32 %v3133
    %v3135 = vmul.f32 %v3134, 0.125
    %vm3136 = vcmask 130048
    %v3138 = vsel %vm3136, %v3135, 0
    %3140 = vmatpush.msra.mxu0 0.0
    %3141 = vmatpush.msra.mxu0 0.0
    %3142 = vmatpush.msra.mxu0 0.0
    %3143 = vmatpush.msra.mxu0 0.0
    %3144 = vmatpush.msra.mxu0 0.0
    %3145 = vmatpush.msra.mxu0 0.0
    %3146 = vmatpush.msra.mxu0 0.0
    %3147 = vmatpush.msra.mxu0 0.0
    %3148 = vmatpush.msra.mxu0 0.0
    %3149 = vmatpush.msra.mxu0 0.0
    %3150 = vmatpush.msra.mxu0 0.0
    %3151 = vmatpush.msra.mxu0 0.0
    %3152 = vmatpush.msra.mxu0 0.0
    %3153 = vmatpush.msra.mxu0 0.0
    %3154 = vmatpush.msra.mxu0 %v3123
    %3155 = vmatpush.msra.mxu0 %v3121
    %3156 = vmatmul.f32.gmra.mxu0 %v3138
    %v3157 = vpop.f32.mrf.mxu0
    %v3158 = vadd.f32 0.0, %v3157
    %3159 = vdwg.mxu0
    %3160 = vmatpush.msra.mxu0 0.0
    %3161 = vmatpush.msra.mxu0 0.0
    %3162 = vmatpush.msra.mxu0 0.0
    %3163 = vmatpush.msra.mxu0 0.0
    %3164 = vmatpush.msra.mxu0 0.0
    %3165 = vmatpush.msra.mxu0 0.0
    %3166 = vmatpush.msra.mxu0 0.0
    %3167 = vmatpush.msra.mxu0 0.0
    %3168 = vmatpush.msra.mxu0 0.0
    %3169 = vmatpush.msra.mxu0 0.0
    %3170 = vmatpush.msra.mxu0 0.0
    %3171 = vmatpush.msra.mxu0 0.0
    %3172 = vmatpush.msra.mxu0 0.0
    %3173 = vmatpush.msra.mxu0 0.0
    %3174 = vmatpush.msra.mxu0 %v3124
    %3175 = vmatpush.msra.mxu0 %v3122
    %3176 = vmatmul.f32.gmra.mxu0 %v3138
    %v3177 = vpop.f32.mrf.mxu0
    %v3178 = vadd.f32 0.0, %v3177
    %3179 = vdwg.mxu0
    %v3180 = vld [vmem:[%s15 + $0x24] ss:$0 sm:$0xff]
    %v3181 = vld [vmem:[%s15 + $0x25] ss:$0 sm:$0xff]
    %v3182 = vld [vmem:[%s15 + $0x26] ss:$0 sm:$0xff]
    %v3183 = vld [vmem:[%s15 + $0x27] ss:$0 sm:$0xff]
    %s3184 = scalar_lea.vmem %s15, 48
    %v3185 = vld [vmem:[%s3184] ss:$8 sm:$0x3]
    %v3186 = vld [vmem:[%s15 + $0x31] ss:$0 sm:$0xff]
    %v3187 = vld [vmem:[%s11] sm:$0xff]
    %v3188 = vld [vmem:[%s11 + $0x8] sm:$0xff]
    %v3189 = vld [vmem:[%s11 + $0x10] sm:$0xff]
    %v3190 = vld [vmem:[%s11 + $0x18] sm:$0xff]
    %v3191 = vld [vmem:[%s11 + $0x20] sm:$0xff]
    %v3192 = vld [vmem:[%s11 + $0x28] sm:$0xff]
    %v3193 = vld [vmem:[%s11 + $0x30] sm:$0xff]
    %v3194 = vld [vmem:[%s11 + $0x38] sm:$0xff]
    %v3195 = vld [vmem:[%s11 + $0x40] sm:$0xff]
    %v3196 = vld [vmem:[%s11 + $0x48] sm:$0xff]
    %v3197 = vld [vmem:[%s11 + $0x50] sm:$0xff]
    %v3198 = vld [vmem:[%s11 + $0x58] sm:$0xff]
    %v3199 = vld [vmem:[%s11 + $0x60] sm:$0xff]
    %v3200 = vld [vmem:[%s11 + $0x68] sm:$0xff]
    %v3201 = vld [vmem:[%s11 + $0x70] sm:$0xff]
    %v3202 = vld [vmem:[%s11 + $0x78] sm:$0xff]
    %v3203 = vld [vmem:[%s11 + $0x80] sm:$0xff]
    %v3204 = vld [vmem:[%s11 + $0x88] sm:$0xff]
    %v3205 = vld [vmem:[%s11 + $0x90] sm:$0xff]
    %v3206 = vld [vmem:[%s11 + $0x98] sm:$0xff]
    %v3207 = vld [vmem:[%s11 + $0xa0] sm:$0xff]
    %v3208 = vld [vmem:[%s11 + $0xa8] sm:$0xff]
    %v3209 = vld [vmem:[%s11 + $0xb0] sm:$0xff]
    %v3210 = vld [vmem:[%s11 + $0xb8] sm:$0xff]
    %v3211 = vld [vmem:[%s11 + $0xc0] sm:$0xff]
    %v3212 = vld [vmem:[%s11 + $0xc8] sm:$0xff]
    %v3213 = vld [vmem:[%s11 + $0xd0] sm:$0xff]
    %v3214 = vld [vmem:[%s11 + $0xd8] sm:$0xff]
    %v3215 = vld [vmem:[%s11 + $0xe0] sm:$0xff]
    %v3216 = vld [vmem:[%s11 + $0xe8] sm:$0xff]
    %v3217 = vld [vmem:[%s11 + $0xf0] sm:$0xff]
    %v3218 = vld [vmem:[%s11 + $0xf8] sm:$0xff]
    %3219 = vmatpush.msra.mxu0 %v3202
    %3220 = vmatpush.msra.mxu0 %v3201
    %3221 = vmatpush.msra.mxu0 %v3200
    %3222 = vmatpush.msra.mxu0 %v3199
    %3223 = vmatpush.msra.mxu0 %v3198
    %3224 = vmatpush.msra.mxu0 %v3197
    %3225 = vmatpush.msra.mxu0 %v3196
    %3226 = vmatpush.msra.mxu0 %v3195
    %3227 = vmatpush.msra.mxu0 %v3194
    %3228 = vmatpush.msra.mxu0 %v3193
    %3229 = vmatpush.msra.mxu0 %v3192
    %3230 = vmatpush.msra.mxu0 %v3191
    %3231 = vmatpush.msra.mxu0 %v3190
    %3232 = vmatpush.msra.mxu0 %v3189
    %3233 = vmatpush.msra.mxu0 %v3188
    %3234 = vmatpush.msra.mxu0 %v3187
    %3235 = vmatmul.f32.gmra.mxu0 %v3158
    %v3236 = vpop.f32.mrf.mxu0
    %v3237 = vadd.f32 %v3180, %v3236
    %3238 = vdwg.mxu0
    %3239 = vmatpush.msra.mxu0 %v3218
    %3240 = vmatpush.msra.mxu0 %v3217
    %3241 = vmatpush.msra.mxu0 %v3216
    %3242 = vmatpush.msra.mxu0 %v3215
    %3243 = vmatpush.msra.mxu0 %v3214
    %3244 = vmatpush.msra.mxu0 %v3213
    %3245 = vmatpush.msra.mxu0 %v3212
    %3246 = vmatpush.msra.mxu0 %v3211
    %3247 = vmatpush.msra.mxu0 %v3210
    %3248 = vmatpush.msra.mxu0 %v3209
    %3249 = vmatpush.msra.mxu0 %v3208
    %3250 = vmatpush.msra.mxu0 %v3207
    %3251 = vmatpush.msra.mxu0 %v3206
    %3252 = vmatpush.msra.mxu0 %v3205
    %3253 = vmatpush.msra.mxu0 %v3204
    %3254 = vmatpush.msra.mxu0 %v3203
    %3255 = vmatmul.f32.gmra.mxu0 %v3178
    %v3256 = vpop.f32.mrf.mxu0
    %v3257 = vadd.f32 %v3237, %v3256
    %3258 = vdwg.mxu0
    %v3259 = vmul.f32 %v3257, %v3181
    %v3260 = vadd.f32 %v3259, %v3182
    %v3261 = vmax.f32 %v3260, 0.0
    %v3262 = vld [vmem:[%s12] sm:$0xff]
    %v3263 = vld [vmem:[%s12 + $0x8] sm:$0xff]
    %v3264 = vld [vmem:[%s12 + $0x10] sm:$0xff]
    %v3265 = vld [vmem:[%s12 + $0x18] sm:$0xff]
    %v3266 = vld [vmem:[%s12 + $0x20] sm:$0xff]
    %v3267 = vld [vmem:[%s12 + $0x28] sm:$0xff]
    %v3268 = vld [vmem:[%s12 + $0x30] sm:$0xff]
    %v3269 = vld [vmem:[%s12 + $0x38] sm:$0xff]
    %v3270 = vld [vmem:[%s12 + $0x40] sm:$0xff]
    %v3271 = vld [vmem:[%s12 + $0x48] sm:$0xff]
    %v3272 = vld [vmem:[%s12 + $0x50] sm:$0xff]
    %v3273 = vld [vmem:[%s12 + $0x58] sm:$0xff]
    %v3274 = vld [vmem:[%s12 + $0x60] sm:$0xff]
    %v3275 = vld [vmem:[%s12 + $0x68] sm:$0xff]
    %v3276 = vld [vmem:[%s12 + $0x70] sm:$0xff]
    %v3277 = vld [vmem:[%s12 + $0x78] sm:$0xff]
    %3278 = vmatpush.msra.mxu0 %v3277
    %3279 = vmatpush.msra.mxu0 %v3276
    %3280 = vmatpush.msra.mxu0 %v3275
    %3281 = vmatpush.msra.mxu0 %v3274
    %3282 = vmatpush.msra.mxu0 %v3273
    %3283 = vmatpush.msra.mxu0 %v3272
    %3284 = vmatpush.msra.mxu0 %v3271
    %3285 = vmatpush.msra.mxu0 %v3270
    %3286 = vmatpush.msra.mxu0 %v3269
    %3287 = vmatpush.msra.mxu0 %v3268
    %3288 = vmatpush.msra.mxu0 %v3267
    %3289 = vmatpush.msra.mxu0 %v3266
    %3290 = vmatpush.msra.mxu0 %v3265
    %3291 = vmatpush.msra.mxu0 %v3264
    %3292 = vmatpush.msra.mxu0 %v3263
    %3293 = vmatpush.msra.mxu0 %v3262
    %3294 = vmatmul.f32.gmra.mxu0 %v3261
    %v3295 = vpop.f32.mrf.mxu0
    %v3296 = vadd.f32 %v3183, %v3295
    %3297 = vdwg.mxu0
    %vm3298 = vcmask 58368
    %3299 = vst.msk [vmem:[#allocation5] sm:$0x3] %vm3298, %v3296
    %v3300 = vld [vmem:[%s13] sm:$0xff]
    %v3301 = vld [vmem:[%s13 + $0x8] sm:$0xff]
    %v3303 = vperm.slane %v3185, 0
    %v3304 = vperm.slane %v3185, 1
    %v3308 = vsel %vm115, %v3296, 0
    %3310 = vmatpush.msra.mxu0 0.0
    %3311 = vmatpush.msra.mxu0 0.0
    %3312 = vmatpush.msra.mxu0 0.0
    %3313 = vmatpush.msra.mxu0 0.0
    %3314 = vmatpush.msra.mxu0 0.0
    %3315 = vmatpush.msra.mxu0 0.0
    %3316 = vmatpush.msra.mxu0 0.0
    %3317 = vmatpush.msra.mxu0 0.0
    %3318 = vmatpush.msra.mxu0 0.0
    %3319 = vmatpush.msra.mxu0 0.0
    %3320 = vmatpush.msra.mxu0 0.0
    %3321 = vmatpush.msra.mxu0 0.0
    %3322 = vmatpush.msra.mxu0 0.0
    %3323 = vmatpush.msra.mxu0 0.0
    %3324 = vmatpush.msra.mxu0 0.0
    %3325 = vmatpush.msra.mxu0 %v3300
    %3326 = vmatmul.f32.gmra.mxu0 %v3308
    %v3327 = vpop.f32.mrf.mxu0
    %v3328 = vadd.f32 %v3303, %v3327
    %3329 = vdwg.mxu0
    %3330 = vmatpush.msra.mxu0 0.0
    %3331 = vmatpush.msra.mxu0 0.0
    %3332 = vmatpush.msra.mxu0 0.0
    %3333 = vmatpush.msra.mxu0 0.0
    %3334 = vmatpush.msra.mxu0 0.0
    %3335 = vmatpush.msra.mxu0 0.0
    %3336 = vmatpush.msra.mxu0 0.0
    %3337 = vmatpush.msra.mxu0 0.0
    %3338 = vmatpush.msra.mxu0 0.0
    %3339 = vmatpush.msra.mxu0 0.0
    %3340 = vmatpush.msra.mxu0 0.0
    %3341 = vmatpush.msra.mxu0 0.0
    %3342 = vmatpush.msra.mxu0 0.0
    %3343 = vmatpush.msra.mxu0 0.0
    %3344 = vmatpush.msra.mxu0 0.0
    %3345 = vmatpush.msra.mxu0 %v3301
    %3346 = vmatmul.f32.gmra.mxu0 %v3308
    %v3347 = vpop.f32.mrf.mxu0
    %v3348 = vadd.f32 %v3304, %v3347
    %3349 = vdwg.mxu0
    %v3350 = vmax.f32 %v3328, 0.0
    %v3351 = vmax.f32 %v3348, 0.0
    %v3352 = vld [vmem:[%s14] sm:$0xff]
    %v3353 = vld [vmem:[%s14 + $0x8] sm:$0xff]
    %v3354 = vld [vmem:[%s14 + $0x10] sm:$0xff]
    %v3355 = vld [vmem:[%s14 + $0x18] sm:$0xff]
    %v3356 = vld [vmem:[%s14 + $0x20] sm:$0xff]
    %v3357 = vld [vmem:[%s14 + $0x28] sm:$0xff]
    %v3358 = vld [vmem:[%s14 + $0x30] sm:$0xff]
    %v3359 = vld [vmem:[%s14 + $0x38] sm:$0xff]
    %v3360 = vld [vmem:[%s14 + $0x40] sm:$0xff]
    %v3361 = vld [vmem:[%s14 + $0x48] sm:$0xff]
    %v3362 = vld [vmem:[%s14 + $0x50] sm:$0xff]
    %v3363 = vld [vmem:[%s14 + $0x58] sm:$0xff]
    %v3364 = vld [vmem:[%s14 + $0x60] sm:$0xff]
    %v3365 = vld [vmem:[%s14 + $0x68] sm:$0xff]
    %v3366 = vld [vmem:[%s14 + $0x70] sm:$0xff]
    %v3367 = vld [vmem:[%s14 + $0x78] sm:$0xff]
    %v3368 = vld [vmem:[%s14 + $0x80] sm:$0xff]
    %v3369 = vld [vmem:[%s14 + $0x88] sm:$0xff]
    %v3370 = vld [vmem:[%s14 + $0x90] sm:$0xff]
    %v3371 = vld [vmem:[%s14 + $0x98] sm:$0xff]
    %v3372 = vld [vmem:[%s14 + $0xa0] sm:$0xff]
    %v3373 = vld [vmem:[%s14 + $0xa8] sm:$0xff]
    %v3374 = vld [vmem:[%s14 + $0xb0] sm:$0xff]
    %v3375 = vld [vmem:[%s14 + $0xb8] sm:$0xff]
    %v3376 = vld [vmem:[%s14 + $0xc0] sm:$0xff]
    %v3377 = vld [vmem:[%s14 + $0xc8] sm:$0xff]
    %v3378 = vld [vmem:[%s14 + $0xd0] sm:$0xff]
    %v3379 = vld [vmem:[%s14 + $0xd8] sm:$0xff]
    %v3380 = vld [vmem:[%s14 + $0xe0] sm:$0xff]
    %v3381 = vld [vmem:[%s14 + $0xe8] sm:$0xff]
    %v3382 = vld [vmem:[%s14 + $0xf0] sm:$0xff]
    %v3383 = vld [vmem:[%s14 + $0xf8] sm:$0xff]
    %3384 = vmatpush.msra.mxu0 %v3367
    %3385 = vmatpush.msra.mxu0 %v3366
    %3386 = vmatpush.msra.mxu0 %v3365
    %3387 = vmatpush.msra.mxu0 %v3364
    %3388 = vmatpush.msra.mxu0 %v3363
    %3389 = vmatpush.msra.mxu0 %v3362
    %3390 = vmatpush.msra.mxu0 %v3361
    %3391 = vmatpush.msra.mxu0 %v3360
    %3392 = vmatpush.msra.mxu0 %v3359
    %3393 = vmatpush.msra.mxu0 %v3358
    %3394 = vmatpush.msra.mxu0 %v3357
    %3395 = vmatpush.msra.mxu0 %v3356
    %3396 = vmatpush.msra.mxu0 %v3355
    %3397 = vmatpush.msra.mxu0 %v3354
    %3398 = vmatpush.msra.mxu0 %v3353
    %3399 = vmatpush.msra.mxu0 %v3352
    %3400 = vmatmul.f32.gmra.mxu0 %v3350
    %v3401 = vpop.f32.mrf.mxu0
    %v3402 = vadd.f32 %v3186, %v3401
    %3403 = vdwg.mxu0
    %3404 = vmatpush.msra.mxu0 %v3383
    %3405 = vmatpush.msra.mxu0 %v3382
    %3406 = vmatpush.msra.mxu0 %v3381
    %3407 = vmatpush.msra.mxu0 %v3380
    %3408 = vmatpush.msra.mxu0 %v3379
    %3409 = vmatpush.msra.mxu0 %v3378
    %3410 = vmatpush.msra.mxu0 %v3377
    %3411 = vmatpush.msra.mxu0 %v3376
    %3412 = vmatpush.msra.mxu0 %v3375
    %3413 = vmatpush.msra.mxu0 %v3374
    %3414 = vmatpush.msra.mxu0 %v3373
    %3415 = vmatpush.msra.mxu0 %v3372
    %3416 = vmatpush.msra.mxu0 %v3371
    %3417 = vmatpush.msra.mxu0 %v3370
    %3418 = vmatpush.msra.mxu0 %v3369
    %3419 = vmatpush.msra.mxu0 %v3368
    %3420 = vmatmul.f32.gmra.mxu0 %v3351
    %v3421 = vpop.f32.mrf.mxu0
    %v3422 = vadd.f32 %v3402, %v3421
    %3423 = vdwg.mxu0
    %vm3424 = vcmask 25600
    %3425 = vst.msk [vmem:[#allocation7] sm:$0x3] %vm3424, %v3422
    // Predicated region
    $region66: #{ecg_concept_cbm_forward.1} parent=1 // pred_check
      _
    $region67: #{ecg_concept_cbm_forward.1} parent=1 // pred_check_branch
      %3427 = sbr.rel (0) target = $region69
    $region68: #{ecg_concept_cbm_forward.1} parent=1 // pred_region
      %3429 = vsyncadd [#allocation6], 0
      %s3431 = sshll.u32 [#allocation5], 4
      %s3432 = int_to_ptr.vmem [resolvable:$true] %s3431
      %s3433 = sshll.u32 %s16, 4
      %s3434 = int_to_ptr.hbm [resolvable:$true] %s3433
      %3436 = dma.vmem_to_hbm [thread:$0]  %s3432, 32, %s3434, [#allocation6]
    $region69: #{ecg_concept_cbm_forward.1} parent=1 // pred_fallthru
      _
    // Predicated region
    $region70: #{ecg_concept_cbm_forward.1} parent=1 // pred_check
      _
    $region71: #{ecg_concept_cbm_forward.1} parent=1 // pred_check_branch
      %3438 = sbr.rel (0) target = $region73
    $region72: #{ecg_concept_cbm_forward.1} parent=1 // pred_region
      %3440 = vsyncadd [#allocation8], 0
      %s3442 = sshll.u32 [#allocation7], 4
      %s3443 = int_to_ptr.vmem [resolvable:$true] %s3442
      %s3444 = sshll.u32 %s17, 4
      %s3445 = int_to_ptr.hbm [resolvable:$true] %s3444
      %3447 = dma.vmem_to_hbm [thread:$0]  %s3443, 32, %s3445, [#allocation8]
    $region73: #{ecg_concept_cbm_forward.1} parent=1 // pred_fallthru
      _
    // Predicated region
    $region74: #{ecg_concept_cbm_forward.1} parent=1 // pred_check
      _
    $region75: #{ecg_concept_cbm_forward.1} parent=1 // pred_check_branch
      %3449 = sbr.rel (0) target = $region77
    $region76: #{ecg_concept_cbm_forward.1} parent=1 // pred_region
      %3451 = dma.done [#allocation6], 32
    $region77: #{ecg_concept_cbm_forward.1} parent=1 // pred_fallthru
      _
    // Predicated region
    $region78: #{ecg_concept_cbm_forward.1} parent=1 // pred_check
      _
    $region79: #{ecg_concept_cbm_forward.1} parent=1 // pred_check_branch
      %3453 = sbr.rel (0) target = $region81
    $region80: #{ecg_concept_cbm_forward.1} parent=1 // pred_region
      %3455 = dma.done [#allocation8], 32
    $region81: #{ecg_concept_cbm_forward.1} parent=1 // pred_fallthru
      _
    %3456 = vsyncpa [#allocation6], 1
    %3457 = vsyncpa [#allocation8], 1

</llo_original>
